<compile_context>
chip_gen: v7x
topology: tpu7x:2x2x1
jax: 0.10.0
libtpu: 0.0.40
codegen_flags: <defaults>
</compile_context>

<pallas_src>
import functools

import numpy as np
import jax
import jax.numpy as jnp
from jax import lax
from jax.experimental import pallas as pl
from jax.experimental.pallas import tpu as pltpu


# ----------------------------------------------------------------------------- kernel
def _make_kernel(B, L_final):
    f32 = jnp.float32

    def leaky(v):                       # LeakyReLU(0.2)
        return jnp.where(v >= 0, v, 0.2 * v)

    def mm(a, b):
        return jnp.dot(a, b, preferred_element_type=f32)

    def kernel(x_ref, w1_ref, r1_ref, w2_ref, r2_ref, w3_ref, r3_ref,
               w4_ref, r4_ref, w5_ref, r5_ref, o_ref):
        # ---- layer 1: ConvTranspose1d(embed, ngf4, k=2, s=1, p=0) + LeakyReLU ----
        # z = sum_{k,b} (W1_k @ x_b) @ R1_{k,b}   -> (ngf4, B*(L+1))
        # R1_{k,b} places the per-batch result in its own 128-free column block,
        # so no in-kernel concat is needed to fold the batch into lanes.
        K1 = w1_ref.shape[0]
        z = None
        for k in range(K1):
            for b in range(B):
                t = mm(mm(w1_ref[k], x_ref[b].astype(f32)), r1_ref[k, b])
                z = t if z is None else z + t
        y = leaky(z)

        # ---- layers 2..5: nearest-neighbour upsample x2 + Conv1d(k=3, pad=1) ----
        # Upsample + pad + tap shift are all folded into the precomputed R_k.
        def layer(y, w_ref, r_ref, act):
            K = w_ref.shape[0]
            z = mm(mm(w_ref[0], y), r_ref[0])
            for k in range(1, K):
                z = z + mm(mm(w_ref[k], y), r_ref[k])
            return act(z)

        y = layer(y, w2_ref, r2_ref, leaky)          # (ngf3, 2*B*(L+1))
        y = layer(y, w3_ref, r3_ref, leaky)          # (ngf2, 4*B*(L+1))
        y = layer(y, w4_ref, r4_ref, leaky)          # (ngf1, 8*B*(L+1))
        y = layer(y, w5_ref, r5_ref, jnp.tanh)       # (2,   16*B*(L+1)) = (2, B*L_final)

        # lane-aligned (multiples of 128), lane-dense per-batch stores
        for b in range(B):
            o_ref[b] = y[:, b * L_final:(b + 1) * L_final].astype(o_ref.dtype)

    return kernel


# ----------------------------------------------------------------------------- wrapper
def decoder_forward(x, consts):
    """x: (B, embed_dim, L) f32.  consts: output of build_decoder_constants."""
    B, _, L = x.shape
    L_final = (L + 1) * 16

    ins = [x]
    for w, r in consts:
        ins += [w, r]

    return pl.pallas_call(
        _make_kernel(B, L_final),
        out_shape=jax.ShapeDtypeStruct((B, 2, L_final), x.dtype),
        in_specs=[pl.BlockSpec(memory_space=pltpu.MemorySpace.VMEM) for _ in ins],
        out_specs=pl.BlockSpec(memory_space=pltpu.MemorySpace.VMEM),
    )(*ins)


# ----------------------------------------------------------------------- host-side prep
def build_decoder_constants(torch_weights, B, L):
    """Per-layer per-tap conv weights (K, Co, Ci) and precomputed selection matrices.

    torch_weights: PyTorch-layout weights
      wt1: ConvTranspose1d (Ci=embed, Co=ngf4, K=2); w2..w5: Conv1d (Co, Ci, K=3).
    """
    wt1, w2, w3, w4, w5 = [np.asarray(w, np.float32) for w in torch_weights]

    # Layer 1: ConvTranspose1d(k=2, s=1, p=0) == pad-1 conv with swapped (Ci,Co) + flipped taps.
    _, _, K1 = wt1.shape
    w1_taps = np.stack([wt1[:, :, K1 - 1 - k].T for k in range(K1)], 0)     # (K1, Co, Ci)
    L1 = L + 1
    r1 = np.zeros((K1, L, L1), np.float32)                                  # tap-shifted pad-1 selection
    for k in range(K1):
        for t in range(L1):
            i = t + k - 1
            if 0 <= i < L:
                r1[k, i, t] = 1.0
    # distribute the batch fold: R placed in per-batch column blocks -> (K1, B, L, B*L1)
    r1_full = np.zeros((K1, B, L, B * L1), np.float32)
    for b in range(B):
        r1_full[:, b, :, b * L1:(b + 1) * L1] = r1
    consts = [(jnp.asarray(w1_taps), jnp.asarray(r1_full))]

    # Layers 2..5: upsample x2 + zero-pad 1 + tap shift folded into one 0/1 matrix per tap,
    # then block-diagonal over the batch (kron with I_B).
    eye_b = np.eye(B, dtype=np.float32)
    Lin = L1
    for w in (w2, w3, w4, w5):
        _, _, K = w.shape
        w_taps = np.ascontiguousarray(np.transpose(w, (2, 0, 1)))           # (K, Co, Ci)
        Lout = 2 * Lin
        r = np.zeros((K, Lin, Lout), np.float32)
        for k in range(K):
            for t in range(Lout):
                j = t + k                      # column of the padded, upsampled signal
                if 1 <= j <= 2 * Lin:
                    r[k, (j - 1) // 2, t] = 1.0
        rb = np.stack([np.kron(eye_b, r[k]) for k in range(K)], 0)          # (K, B*Lin, B*Lout)
        consts.append((jnp.asarray(w_taps), jnp.asarray(rb)))
        Lin = Lout
    return consts


# -------------------------------------------------------------------- pure-JAX reference
def _ref_forward(x, torch_weights):
    """XLA-conv reference with PyTorch-layout weights, for verification."""
    wt1, w2, w3, w4, w5 = torch_weights
    dn = ("NCH", "OIH", "NCH")
    leaky = lambda v: jnp.where(v >= 0, v, 0.2 * v)
    up = lambda v: jnp.repeat(v, 2, axis=2)
    conv = lambda v, w: lax.conv_general_dilated(v, w, (1,), [(1, 1)],
                                                 dimension_numbers=dn)
    # ConvTranspose1d(k=2,s=1,p=0) == pad-1 conv with flipped + transposed kernel
    w1_conv = jnp.transpose(wt1, (1, 0, 2))[:, :, ::-1]
    y = up(leaky(conv(x, w1_conv)))
    y = up(leaky(conv(y, w2)))
    y = up(leaky(conv(y, w3)))
    y = up(leaky(conv(y, w4)))
    y = jnp.tanh(conv(y, w5))
    return y


if __name__ == "__main__":
    ngfs = (8, 16, 32, 64)          # (ngf1, ngf2, ngf3, ngf4)
    embed_dim = 32
    B, L = 2, 7                     # latent (2, 32, 7) -> output (2, 2, 128)

    key = jax.random.PRNGKey(0)
    kx, kw = jax.random.split(key)
    x = jax.random.normal(kx, (B, embed_dim, L), jnp.float32)

    ngf1, ngf2, ngf3, ngf4 = ngfs
    ks = jax.random.split(kw, 5)
    # Deterministic synthetic weights in PyTorch layouts (all layers bias=False per spec).
    wt1 = jax.random.normal(ks[0], (embed_dim, ngf4, 2), jnp.float32) * 0.1  # ConvTranspose1d (Ci,Co,K)
    w2 = jax.random.normal(ks[1], (ngf3, ngf4, 3), jnp.float32) * 0.1        # Conv1d (Co,Ci,K)
    w3 = jax.random.normal(ks[2], (ngf2, ngf3, 3), jnp.float32) * 0.1
    w4 = jax.random.normal(ks[3], (ngf1, ngf2, 3), jnp.float32) * 0.1
    w5 = jax.random.normal(ks[4], (2, ngf1, 3), jnp.float32) * 0.1
    torch_weights = (wt1, w2, w3, w4, w5)

    consts = build_decoder_constants(torch_weights, B, L)

    out = jax.jit(decoder_forward)(x, consts)
    out = jax.block_until_ready(out)
    assert out.shape == (B, 2, (L + 1) * 16), out.shape

    ref = _ref_forward(x, torch_weights)
    err = float(jnp.max(jnp.abs(out - ref)))
    assert jnp.allclose(out, ref, rtol=1e-3, atol=1e-3), f"max abs err {err}"

    print("KERNEL_OK")
</pallas_src>

<mosaic_0001>
module attributes {stable_mosaic.version = 11 : i64} {
  func.func @kernel(%arg0: memref<2x32x7xf32, #tpu.memory_space<vmem>>, %arg1: memref<2x64x32xf32, #tpu.memory_space<vmem>>, %arg2: memref<2x2x7x16xf32, #tpu.memory_space<vmem>>, %arg3: memref<3x32x64xf32, #tpu.memory_space<vmem>>, %arg4: memref<3x16x32xf32, #tpu.memory_space<vmem>>, %arg5: memref<3x16x32xf32, #tpu.memory_space<vmem>>, %arg6: memref<3x32x64xf32, #tpu.memory_space<vmem>>, %arg7: memref<3x8x16xf32, #tpu.memory_space<vmem>>, %arg8: memref<3x64x128xf32, #tpu.memory_space<vmem>>, %arg9: memref<3x2x8xf32, #tpu.memory_space<vmem>>, %arg10: memref<3x128x256xf32, #tpu.memory_space<vmem>>, %arg11: memref<2x2x128xf32, #tpu.memory_space<vmem>>) attributes {dimension_semantics = [], scalar_prefetch = 0 : i64, scratch_operands = 0 : i64, tpu.core_type = #tpu.core_type<tc>} {
    %c0 = arith.constant 0 : index
    %c0_0 = arith.constant 0 : index
    %c0_1 = arith.constant 0 : index
    %0 = vector.load %arg1[%c0, %c0_0, %c0_1] : memref<2x64x32xf32, #tpu.memory_space<vmem>>, vector<1x64x32xf32>
    %1 = vector.shape_cast %0 : vector<1x64x32xf32> to vector<64x32xf32>
    %c0_2 = arith.constant 0 : index
    %c0_3 = arith.constant 0 : index
    %c0_4 = arith.constant 0 : index
    %2 = vector.load %arg0[%c0_2, %c0_3, %c0_4] : memref<2x32x7xf32, #tpu.memory_space<vmem>>, vector<1x32x7xf32>
    %3 = vector.shape_cast %2 : vector<1x32x7xf32> to vector<32x7xf32>
    %cst = arith.constant dense<0.000000e+00> : vector<64x7xf32>
    %4 = tpu.matmul %1, %3, %cst {dimension_numbers = #tpu.dot_dimension_numbers<[1], [0], [0], [1], [0, 0, 1, 1], [], []>} : vector<64x32xf32>, vector<32x7xf32>, vector<64x7xf32> -> vector<64x7xf32>
    %c0_5 = arith.constant 0 : index
    %c0_6 = arith.constant 0 : index
    %c0_7 = arith.constant 0 : index
    %c0_8 = arith.constant 0 : index
    %5 = vector.load %arg2[%c0_5, %c0_6, %c0_7, %c0_8] : memref<2x2x7x16xf32, #tpu.memory_space<vmem>>, vector<1x1x7x16xf32>
    %6 = vector.shape_cast %5 : vector<1x1x7x16xf32> to vector<7x16xf32>
    %cst_9 = arith.constant dense<0.000000e+00> : vector<64x16xf32>
    %7 = tpu.matmul %4, %6, %cst_9 {dimension_numbers = #tpu.dot_dimension_numbers<[1], [0], [0], [1], [0, 0, 1, 1], [], []>} : vector<64x7xf32>, vector<7x16xf32>, vector<64x16xf32> -> vector<64x16xf32>
    %c0_10 = arith.constant 0 : index
    %c0_11 = arith.constant 0 : index
    %c0_12 = arith.constant 0 : index
    %8 = vector.load %arg1[%c0_10, %c0_11, %c0_12] : memref<2x64x32xf32, #tpu.memory_space<vmem>>, vector<1x64x32xf32>
    %9 = vector.shape_cast %8 : vector<1x64x32xf32> to vector<64x32xf32>
    %c1 = arith.constant 1 : index
    %c0_13 = arith.constant 0 : index
    %c0_14 = arith.constant 0 : index
    %10 = vector.load %arg0[%c1, %c0_13, %c0_14] : memref<2x32x7xf32, #tpu.memory_space<vmem>>, vector<1x32x7xf32>
    %11 = vector.shape_cast %10 : vector<1x32x7xf32> to vector<32x7xf32>
    %cst_15 = arith.constant dense<0.000000e+00> : vector<64x7xf32>
    %12 = tpu.matmul %9, %11, %cst_15 {dimension_numbers = #tpu.dot_dimension_numbers<[1], [0], [0], [1], [0, 0, 1, 1], [], []>} : vector<64x32xf32>, vector<32x7xf32>, vector<64x7xf32> -> vector<64x7xf32>
    %c0_16 = arith.constant 0 : index
    %c1_17 = arith.constant 1 : index
    %c0_18 = arith.constant 0 : index
    %c0_19 = arith.constant 0 : index
    %13 = vector.load %arg2[%c0_16, %c1_17, %c0_18, %c0_19] : memref<2x2x7x16xf32, #tpu.memory_space<vmem>>, vector<1x1x7x16xf32>
    %14 = vector.shape_cast %13 : vector<1x1x7x16xf32> to vector<7x16xf32>
    %cst_20 = arith.constant dense<0.000000e+00> : vector<64x16xf32>
    %15 = tpu.matmul %12, %14, %cst_20 {dimension_numbers = #tpu.dot_dimension_numbers<[1], [0], [0], [1], [0, 0, 1, 1], [], []>} : vector<64x7xf32>, vector<7x16xf32>, vector<64x16xf32> -> vector<64x16xf32>
    %16 = arith.addf %7, %15 : vector<64x16xf32>
    %c1_21 = arith.constant 1 : index
    %c0_22 = arith.constant 0 : index
    %c0_23 = arith.constant 0 : index
    %17 = vector.load %arg1[%c1_21, %c0_22, %c0_23] : memref<2x64x32xf32, #tpu.memory_space<vmem>>, vector<1x64x32xf32>
    %18 = vector.shape_cast %17 : vector<1x64x32xf32> to vector<64x32xf32>
    %c0_24 = arith.constant 0 : index
    %c0_25 = arith.constant 0 : index
    %c0_26 = arith.constant 0 : index
    %19 = vector.load %arg0[%c0_24, %c0_25, %c0_26] : memref<2x32x7xf32, #tpu.memory_space<vmem>>, vector<1x32x7xf32>
    %20 = vector.shape_cast %19 : vector<1x32x7xf32> to vector<32x7xf32>
    %cst_27 = arith.constant dense<0.000000e+00> : vector<64x7xf32>
    %21 = tpu.matmul %18, %20, %cst_27 {dimension_numbers = #tpu.dot_dimension_numbers<[1], [0], [0], [1], [0, 0, 1, 1], [], []>} : vector<64x32xf32>, vector<32x7xf32>, vector<64x7xf32> -> vector<64x7xf32>
    %c1_28 = arith.constant 1 : index
    %c0_29 = arith.constant 0 : index
    %c0_30 = arith.constant 0 : index
    %c0_31 = arith.constant 0 : index
    %22 = vector.load %arg2[%c1_28, %c0_29, %c0_30, %c0_31] : memref<2x2x7x16xf32, #tpu.memory_space<vmem>>, vector<1x1x7x16xf32>
    %23 = vector.shape_cast %22 : vector<1x1x7x16xf32> to vector<7x16xf32>
    %cst_32 = arith.constant dense<0.000000e+00> : vector<64x16xf32>
    %24 = tpu.matmul %21, %23, %cst_32 {dimension_numbers = #tpu.dot_dimension_numbers<[1], [0], [0], [1], [0, 0, 1, 1], [], []>} : vector<64x7xf32>, vector<7x16xf32>, vector<64x16xf32> -> vector<64x16xf32>
    %25 = arith.addf %16, %24 : vector<64x16xf32>
    %c1_33 = arith.constant 1 : index
    %c0_34 = arith.constant 0 : index
    %c0_35 = arith.constant 0 : index
    %26 = vector.load %arg1[%c1_33, %c0_34, %c0_35] : memref<2x64x32xf32, #tpu.memory_space<vmem>>, vector<1x64x32xf32>
    %27 = vector.shape_cast %26 : vector<1x64x32xf32> to vector<64x32xf32>
    %c1_36 = arith.constant 1 : index
    %c0_37 = arith.constant 0 : index
    %c0_38 = arith.constant 0 : index
    %28 = vector.load %arg0[%c1_36, %c0_37, %c0_38] : memref<2x32x7xf32, #tpu.memory_space<vmem>>, vector<1x32x7xf32>
    %29 = vector.shape_cast %28 : vector<1x32x7xf32> to vector<32x7xf32>
    %cst_39 = arith.constant dense<0.000000e+00> : vector<64x7xf32>
    %30 = tpu.matmul %27, %29, %cst_39 {dimension_numbers = #tpu.dot_dimension_numbers<[1], [0], [0], [1], [0, 0, 1, 1], [], []>} : vector<64x32xf32>, vector<32x7xf32>, vector<64x7xf32> -> vector<64x7xf32>
    %c1_40 = arith.constant 1 : index
    %c1_41 = arith.constant 1 : index
    %c0_42 = arith.constant 0 : index
    %c0_43 = arith.constant 0 : index
    %31 = vector.load %arg2[%c1_40, %c1_41, %c0_42, %c0_43] : memref<2x2x7x16xf32, #tpu.memory_space<vmem>>, vector<1x1x7x16xf32>
    %32 = vector.shape_cast %31 : vector<1x1x7x16xf32> to vector<7x16xf32>
    %cst_44 = arith.constant dense<0.000000e+00> : vector<64x16xf32>
    %33 = tpu.matmul %30, %32, %cst_44 {dimension_numbers = #tpu.dot_dimension_numbers<[1], [0], [0], [1], [0, 0, 1, 1], [], []>} : vector<64x7xf32>, vector<7x16xf32>, vector<64x16xf32> -> vector<64x16xf32>
    %34 = arith.addf %25, %33 : vector<64x16xf32>
    %cst_45 = arith.constant 0.000000e+00 : f32
    %35 = vector.broadcast %cst_45 : f32 to vector<64x16xf32>
    %36 = arith.cmpf oge, %34, %35 : vector<64x16xf32>
    %cst_46 = arith.constant 2.000000e-01 : f32
    %37 = vector.broadcast %cst_46 : f32 to vector<64x16xf32>
    %38 = arith.mulf %37, %34 : vector<64x16xf32>
    %39 = arith.select %36, %34, %38 : vector<64x16xi1>, vector<64x16xf32>
    %c0_47 = arith.constant 0 : index
    %c0_48 = arith.constant 0 : index
    %c0_49 = arith.constant 0 : index
    %40 = vector.load %arg3[%c0_47, %c0_48, %c0_49] : memref<3x32x64xf32, #tpu.memory_space<vmem>>, vector<1x32x64xf32>
    %41 = vector.shape_cast %40 : vector<1x32x64xf32> to vector<32x64xf32>
    %cst_50 = arith.constant dense<0.000000e+00> : vector<32x16xf32>
    %42 = tpu.matmul %41, %39, %cst_50 {dimension_numbers = #tpu.dot_dimension_numbers<[1], [0], [0], [1], [0, 0, 1, 1], [], []>} : vector<32x64xf32>, vector<64x16xf32>, vector<32x16xf32> -> vector<32x16xf32>
    %c0_51 = arith.constant 0 : index
    %c0_52 = arith.constant 0 : index
    %c0_53 = arith.constant 0 : index
    %43 = vector.load %arg4[%c0_51, %c0_52, %c0_53] : memref<3x16x32xf32, #tpu.memory_space<vmem>>, vector<1x16x32xf32>
    %44 = vector.shape_cast %43 : vector<1x16x32xf32> to vector<16x32xf32>
    %cst_54 = arith.constant dense<0.000000e+00> : vector<32x32xf32>
    %45 = tpu.matmul %42, %44, %cst_54 {dimension_numbers = #tpu.dot_dimension_numbers<[1], [0], [0], [1], [0, 0, 1, 1], [], []>} : vector<32x16xf32>, vector<16x32xf32>, vector<32x32xf32> -> vector<32x32xf32>
    %c1_55 = arith.constant 1 : index
    %c0_56 = arith.constant 0 : index
    %c0_57 = arith.constant 0 : index
    %46 = vector.load %arg3[%c1_55, %c0_56, %c0_57] : memref<3x32x64xf32, #tpu.memory_space<vmem>>, vector<1x32x64xf32>
    %47 = vector.shape_cast %46 : vector<1x32x64xf32> to vector<32x64xf32>
    %cst_58 = arith.constant dense<0.000000e+00> : vector<32x16xf32>
    %48 = tpu.matmul %47, %39, %cst_58 {dimension_numbers = #tpu.dot_dimension_numbers<[1], [0], [0], [1], [0, 0, 1, 1], [], []>} : vector<32x64xf32>, vector<64x16xf32>, vector<32x16xf32> -> vector<32x16xf32>
    %c1_59 = arith.constant 1 : index
    %c0_60 = arith.constant 0 : index
    %c0_61 = arith.constant 0 : index
    %49 = vector.load %arg4[%c1_59, %c0_60, %c0_61] : memref<3x16x32xf32, #tpu.memory_space<vmem>>, vector<1x16x32xf32>
    %50 = vector.shape_cast %49 : vector<1x16x32xf32> to vector<16x32xf32>
    %cst_62 = arith.constant dense<0.000000e+00> : vector<32x32xf32>
    %51 = tpu.matmul %48, %50, %cst_62 {dimension_numbers = #tpu.dot_dimension_numbers<[1], [0], [0], [1], [0, 0, 1, 1], [], []>} : vector<32x16xf32>, vector<16x32xf32>, vector<32x32xf32> -> vector<32x32xf32>
    %52 = arith.addf %45, %51 : vector<32x32xf32>
    %c2 = arith.constant 2 : index
    %c0_63 = arith.constant 0 : index
    %c0_64 = arith.constant 0 : index
    %53 = vector.load %arg3[%c2, %c0_63, %c0_64] : memref<3x32x64xf32, #tpu.memory_space<vmem>>, vector<1x32x64xf32>
    %54 = vector.shape_cast %53 : vector<1x32x64xf32> to vector<32x64xf32>
    %cst_65 = arith.constant dense<0.000000e+00> : vector<32x16xf32>
    %55 = tpu.matmul %54, %39, %cst_65 {dimension_numbers = #tpu.dot_dimension_numbers<[1], [0], [0], [1], [0, 0, 1, 1], [], []>} : vector<32x64xf32>, vector<64x16xf32>, vector<32x16xf32> -> vector<32x16xf32>
    %c2_66 = arith.constant 2 : index
    %c0_67 = arith.constant 0 : index
    %c0_68 = arith.constant 0 : index
    %56 = vector.load %arg4[%c2_66, %c0_67, %c0_68] : memref<3x16x32xf32, #tpu.memory_space<vmem>>, vector<1x16x32xf32>
    %57 = vector.shape_cast %56 : vector<1x16x32xf32> to vector<16x32xf32>
    %cst_69 = arith.constant dense<0.000000e+00> : vector<32x32xf32>
    %58 = tpu.matmul %55, %57, %cst_69 {dimension_numbers = #tpu.dot_dimension_numbers<[1], [0], [0], [1], [0, 0, 1, 1], [], []>} : vector<32x16xf32>, vector<16x32xf32>, vector<32x32xf32> -> vector<32x32xf32>
    %59 = arith.addf %52, %58 : vector<32x32xf32>
    %cst_70 = arith.constant 0.000000e+00 : f32
    %60 = vector.broadcast %cst_70 : f32 to vector<32x32xf32>
    %61 = arith.cmpf oge, %59, %60 : vector<32x32xf32>
    %cst_71 = arith.constant 2.000000e-01 : f32
    %62 = vector.broadcast %cst_71 : f32 to vector<32x32xf32>
    %63 = arith.mulf %62, %59 : vector<32x32xf32>
    %64 = arith.select %61, %59, %63 : vector<32x32xi1>, vector<32x32xf32>
    %c0_72 = arith.constant 0 : index
    %c0_73 = arith.constant 0 : index
    %c0_74 = arith.constant 0 : index
    %65 = vector.load %arg5[%c0_72, %c0_73, %c0_74] : memref<3x16x32xf32, #tpu.memory_space<vmem>>, vector<1x16x32xf32>
    %66 = vector.shape_cast %65 : vector<1x16x32xf32> to vector<16x32xf32>
    %cst_75 = arith.constant dense<0.000000e+00> : vector<16x32xf32>
    %67 = tpu.matmul %66, %64, %cst_75 {dimension_numbers = #tpu.dot_dimension_numbers<[1], [0], [0], [1], [0, 0, 1, 1], [], []>} : vector<16x32xf32>, vector<32x32xf32>, vector<16x32xf32> -> vector<16x32xf32>
    %c0_76 = arith.constant 0 : index
    %c0_77 = arith.constant 0 : index
    %c0_78 = arith.constant 0 : index
    %68 = vector.load %arg6[%c0_76, %c0_77, %c0_78] : memref<3x32x64xf32, #tpu.memory_space<vmem>>, vector<1x32x64xf32>
    %69 = vector.shape_cast %68 : vector<1x32x64xf32> to vector<32x64xf32>
    %cst_79 = arith.constant dense<0.000000e+00> : vector<16x64xf32>
    %70 = tpu.matmul %67, %69, %cst_79 {dimension_numbers = #tpu.dot_dimension_numbers<[1], [0], [0], [1], [0, 0, 1, 1], [], []>} : vector<16x32xf32>, vector<32x64xf32>, vector<16x64xf32> -> vector<16x64xf32>
    %c1_80 = arith.constant 1 : index
    %c0_81 = arith.constant 0 : index
    %c0_82 = arith.constant 0 : index
    %71 = vector.load %arg5[%c1_80, %c0_81, %c0_82] : memref<3x16x32xf32, #tpu.memory_space<vmem>>, vector<1x16x32xf32>
    %72 = vector.shape_cast %71 : vector<1x16x32xf32> to vector<16x32xf32>
    %cst_83 = arith.constant dense<0.000000e+00> : vector<16x32xf32>
    %73 = tpu.matmul %72, %64, %cst_83 {dimension_numbers = #tpu.dot_dimension_numbers<[1], [0], [0], [1], [0, 0, 1, 1], [], []>} : vector<16x32xf32>, vector<32x32xf32>, vector<16x32xf32> -> vector<16x32xf32>
    %c1_84 = arith.constant 1 : index
    %c0_85 = arith.constant 0 : index
    %c0_86 = arith.constant 0 : index
    %74 = vector.load %arg6[%c1_84, %c0_85, %c0_86] : memref<3x32x64xf32, #tpu.memory_space<vmem>>, vector<1x32x64xf32>
    %75 = vector.shape_cast %74 : vector<1x32x64xf32> to vector<32x64xf32>
    %cst_87 = arith.constant dense<0.000000e+00> : vector<16x64xf32>
    %76 = tpu.matmul %73, %75, %cst_87 {dimension_numbers = #tpu.dot_dimension_numbers<[1], [0], [0], [1], [0, 0, 1, 1], [], []>} : vector<16x32xf32>, vector<32x64xf32>, vector<16x64xf32> -> vector<16x64xf32>
    %77 = arith.addf %70, %76 : vector<16x64xf32>
    %c2_88 = arith.constant 2 : index
    %c0_89 = arith.constant 0 : index
    %c0_90 = arith.constant 0 : index
    %78 = vector.load %arg5[%c2_88, %c0_89, %c0_90] : memref<3x16x32xf32, #tpu.memory_space<vmem>>, vector<1x16x32xf32>
    %79 = vector.shape_cast %78 : vector<1x16x32xf32> to vector<16x32xf32>
    %cst_91 = arith.constant dense<0.000000e+00> : vector<16x32xf32>
    %80 = tpu.matmul %79, %64, %cst_91 {dimension_numbers = #tpu.dot_dimension_numbers<[1], [0], [0], [1], [0, 0, 1, 1], [], []>} : vector<16x32xf32>, vector<32x32xf32>, vector<16x32xf32> -> vector<16x32xf32>
    %c2_92 = arith.constant 2 : index
    %c0_93 = arith.constant 0 : index
    %c0_94 = arith.constant 0 : index
    %81 = vector.load %arg6[%c2_92, %c0_93, %c0_94] : memref<3x32x64xf32, #tpu.memory_space<vmem>>, vector<1x32x64xf32>
    %82 = vector.shape_cast %81 : vector<1x32x64xf32> to vector<32x64xf32>
    %cst_95 = arith.constant dense<0.000000e+00> : vector<16x64xf32>
    %83 = tpu.matmul %80, %82, %cst_95 {dimension_numbers = #tpu.dot_dimension_numbers<[1], [0], [0], [1], [0, 0, 1, 1], [], []>} : vector<16x32xf32>, vector<32x64xf32>, vector<16x64xf32> -> vector<16x64xf32>
    %84 = arith.addf %77, %83 : vector<16x64xf32>
    %cst_96 = arith.constant 0.000000e+00 : f32
    %85 = vector.broadcast %cst_96 : f32 to vector<16x64xf32>
    %86 = arith.cmpf oge, %84, %85 : vector<16x64xf32>
    %cst_97 = arith.constant 2.000000e-01 : f32
    %87 = vector.broadcast %cst_97 : f32 to vector<16x64xf32>
    %88 = arith.mulf %87, %84 : vector<16x64xf32>
    %89 = arith.select %86, %84, %88 : vector<16x64xi1>, vector<16x64xf32>
    %c0_98 = arith.constant 0 : index
    %c0_99 = arith.constant 0 : index
    %c0_100 = arith.constant 0 : index
    %90 = vector.load %arg7[%c0_98, %c0_99, %c0_100] : memref<3x8x16xf32, #tpu.memory_space<vmem>>, vector<1x8x16xf32>
    %91 = vector.shape_cast %90 : vector<1x8x16xf32> to vector<8x16xf32>
    %cst_101 = arith.constant dense<0.000000e+00> : vector<8x64xf32>
    %92 = tpu.matmul %91, %89, %cst_101 {dimension_numbers = #tpu.dot_dimension_numbers<[1], [0], [0], [1], [0, 0, 1, 1], [], []>} : vector<8x16xf32>, vector<16x64xf32>, vector<8x64xf32> -> vector<8x64xf32>
    %c0_102 = arith.constant 0 : index
    %c0_103 = arith.constant 0 : index
    %c0_104 = arith.constant 0 : index
    %93 = vector.load %arg8[%c0_102, %c0_103, %c0_104] : memref<3x64x128xf32, #tpu.memory_space<vmem>>, vector<1x64x128xf32>
    %94 = vector.shape_cast %93 : vector<1x64x128xf32> to vector<64x128xf32>
    %cst_105 = arith.constant dense<0.000000e+00> : vector<8x128xf32>
    %95 = tpu.matmul %92, %94, %cst_105 {dimension_numbers = #tpu.dot_dimension_numbers<[1], [0], [0], [1], [0, 0, 1, 1], [], []>} : vector<8x64xf32>, vector<64x128xf32>, vector<8x128xf32> -> vector<8x128xf32>
    %c1_106 = arith.constant 1 : index
    %c0_107 = arith.constant 0 : index
    %c0_108 = arith.constant 0 : index
    %96 = vector.load %arg7[%c1_106, %c0_107, %c0_108] : memref<3x8x16xf32, #tpu.memory_space<vmem>>, vector<1x8x16xf32>
    %97 = vector.shape_cast %96 : vector<1x8x16xf32> to vector<8x16xf32>
    %cst_109 = arith.constant dense<0.000000e+00> : vector<8x64xf32>
    %98 = tpu.matmul %97, %89, %cst_109 {dimension_numbers = #tpu.dot_dimension_numbers<[1], [0], [0], [1], [0, 0, 1, 1], [], []>} : vector<8x16xf32>, vector<16x64xf32>, vector<8x64xf32> -> vector<8x64xf32>
    %c1_110 = arith.constant 1 : index
    %c0_111 = arith.constant 0 : index
    %c0_112 = arith.constant 0 : index
    %99 = vector.load %arg8[%c1_110, %c0_111, %c0_112] : memref<3x64x128xf32, #tpu.memory_space<vmem>>, vector<1x64x128xf32>
    %100 = vector.shape_cast %99 : vector<1x64x128xf32> to vector<64x128xf32>
    %cst_113 = arith.constant dense<0.000000e+00> : vector<8x128xf32>
    %101 = tpu.matmul %98, %100, %cst_113 {dimension_numbers = #tpu.dot_dimension_numbers<[1], [0], [0], [1], [0, 0, 1, 1], [], []>} : vector<8x64xf32>, vector<64x128xf32>, vector<8x128xf32> -> vector<8x128xf32>
    %102 = arith.addf %95, %101 : vector<8x128xf32>
    %c2_114 = arith.constant 2 : index
    %c0_115 = arith.constant 0 : index
    %c0_116 = arith.constant 0 : index
    %103 = vector.load %arg7[%c2_114, %c0_115, %c0_116] : memref<3x8x16xf32, #tpu.memory_space<vmem>>, vector<1x8x16xf32>
    %104 = vector.shape_cast %103 : vector<1x8x16xf32> to vector<8x16xf32>
    %cst_117 = arith.constant dense<0.000000e+00> : vector<8x64xf32>
    %105 = tpu.matmul %104, %89, %cst_117 {dimension_numbers = #tpu.dot_dimension_numbers<[1], [0], [0], [1], [0, 0, 1, 1], [], []>} : vector<8x16xf32>, vector<16x64xf32>, vector<8x64xf32> -> vector<8x64xf32>
    %c2_118 = arith.constant 2 : index
    %c0_119 = arith.constant 0 : index
    %c0_120 = arith.constant 0 : index
    %106 = vector.load %arg8[%c2_118, %c0_119, %c0_120] : memref<3x64x128xf32, #tpu.memory_space<vmem>>, vector<1x64x128xf32>
    %107 = vector.shape_cast %106 : vector<1x64x128xf32> to vector<64x128xf32>
    %cst_121 = arith.constant dense<0.000000e+00> : vector<8x128xf32>
    %108 = tpu.matmul %105, %107, %cst_121 {dimension_numbers = #tpu.dot_dimension_numbers<[1], [0], [0], [1], [0, 0, 1, 1], [], []>} : vector<8x64xf32>, vector<64x128xf32>, vector<8x128xf32> -> vector<8x128xf32>
    %109 = arith.addf %102, %108 : vector<8x128xf32>
    %cst_122 = arith.constant 0.000000e+00 : f32
    %110 = vector.broadcast %cst_122 : f32 to vector<8x128xf32>
    %111 = arith.cmpf oge, %109, %110 : vector<8x128xf32>
    %cst_123 = arith.constant 2.000000e-01 : f32
    %112 = vector.broadcast %cst_123 : f32 to vector<8x128xf32>
    %113 = arith.mulf %112, %109 : vector<8x128xf32>
    %114 = arith.select %111, %109, %113 : vector<8x128xi1>, vector<8x128xf32>
    %c0_124 = arith.constant 0 : index
    %c0_125 = arith.constant 0 : index
    %c0_126 = arith.constant 0 : index
    %115 = vector.load %arg9[%c0_124, %c0_125, %c0_126] : memref<3x2x8xf32, #tpu.memory_space<vmem>>, vector<1x2x8xf32>
    %116 = vector.shape_cast %115 : vector<1x2x8xf32> to vector<2x8xf32>
    %cst_127 = arith.constant dense<0.000000e+00> : vector<2x128xf32>
    %117 = tpu.matmul %116, %114, %cst_127 {dimension_numbers = #tpu.dot_dimension_numbers<[1], [0], [0], [1], [0, 0, 1, 1], [], []>} : vector<2x8xf32>, vector<8x128xf32>, vector<2x128xf32> -> vector<2x128xf32>
    %c0_128 = arith.constant 0 : index
    %c0_129 = arith.constant 0 : index
    %c0_130 = arith.constant 0 : index
    %118 = vector.load %arg10[%c0_128, %c0_129, %c0_130] : memref<3x128x256xf32, #tpu.memory_space<vmem>>, vector<1x128x256xf32>
    %119 = vector.shape_cast %118 : vector<1x128x256xf32> to vector<128x256xf32>
    %cst_131 = arith.constant dense<0.000000e+00> : vector<2x256xf32>
    %120 = tpu.matmul %117, %119, %cst_131 {dimension_numbers = #tpu.dot_dimension_numbers<[1], [0], [0], [1], [0, 0, 1, 1], [], []>} : vector<2x128xf32>, vector<128x256xf32>, vector<2x256xf32> -> vector<2x256xf32>
    %c1_132 = arith.constant 1 : index
    %c0_133 = arith.constant 0 : index
    %c0_134 = arith.constant 0 : index
    %121 = vector.load %arg9[%c1_132, %c0_133, %c0_134] : memref<3x2x8xf32, #tpu.memory_space<vmem>>, vector<1x2x8xf32>
    %122 = vector.shape_cast %121 : vector<1x2x8xf32> to vector<2x8xf32>
    %cst_135 = arith.constant dense<0.000000e+00> : vector<2x128xf32>
    %123 = tpu.matmul %122, %114, %cst_135 {dimension_numbers = #tpu.dot_dimension_numbers<[1], [0], [0], [1], [0, 0, 1, 1], [], []>} : vector<2x8xf32>, vector<8x128xf32>, vector<2x128xf32> -> vector<2x128xf32>
    %c1_136 = arith.constant 1 : index
    %c0_137 = arith.constant 0 : index
    %c0_138 = arith.constant 0 : index
    %124 = vector.load %arg10[%c1_136, %c0_137, %c0_138] : memref<3x128x256xf32, #tpu.memory_space<vmem>>, vector<1x128x256xf32>
    %125 = vector.shape_cast %124 : vector<1x128x256xf32> to vector<128x256xf32>
    %cst_139 = arith.constant dense<0.000000e+00> : vector<2x256xf32>
    %126 = tpu.matmul %123, %125, %cst_139 {dimension_numbers = #tpu.dot_dimension_numbers<[1], [0], [0], [1], [0, 0, 1, 1], [], []>} : vector<2x128xf32>, vector<128x256xf32>, vector<2x256xf32> -> vector<2x256xf32>
    %127 = arith.addf %120, %126 : vector<2x256xf32>
    %c2_140 = arith.constant 2 : index
    %c0_141 = arith.constant 0 : index
    %c0_142 = arith.constant 0 : index
    %128 = vector.load %arg9[%c2_140, %c0_141, %c0_142] : memref<3x2x8xf32, #tpu.memory_space<vmem>>, vector<1x2x8xf32>
    %129 = vector.shape_cast %128 : vector<1x2x8xf32> to vector<2x8xf32>
    %cst_143 = arith.constant dense<0.000000e+00> : vector<2x128xf32>
    %130 = tpu.matmul %129, %114, %cst_143 {dimension_numbers = #tpu.dot_dimension_numbers<[1], [0], [0], [1], [0, 0, 1, 1], [], []>} : vector<2x8xf32>, vector<8x128xf32>, vector<2x128xf32> -> vector<2x128xf32>
    %c2_144 = arith.constant 2 : index
    %c0_145 = arith.constant 0 : index
    %c0_146 = arith.constant 0 : index
    %131 = vector.load %arg10[%c2_144, %c0_145, %c0_146] : memref<3x128x256xf32, #tpu.memory_space<vmem>>, vector<1x128x256xf32>
    %132 = vector.shape_cast %131 : vector<1x128x256xf32> to vector<128x256xf32>
    %cst_147 = arith.constant dense<0.000000e+00> : vector<2x256xf32>
    %133 = tpu.matmul %130, %132, %cst_147 {dimension_numbers = #tpu.dot_dimension_numbers<[1], [0], [0], [1], [0, 0, 1, 1], [], []>} : vector<2x128xf32>, vector<128x256xf32>, vector<2x256xf32> -> vector<2x256xf32>
    %134 = arith.addf %127, %133 : vector<2x256xf32>
    %135 = math.tanh %134 : vector<2x256xf32>
    %136 = vector.extract_strided_slice %135 {offsets = [0, 0], sizes = [2, 128], strides = [1, 1]} : vector<2x256xf32> to vector<2x128xf32>
    %c0_148 = arith.constant 0 : index
    %c0_149 = arith.constant 0 : index
    %c0_150 = arith.constant 0 : index
    %137 = vector.load %arg11[%c0_148, %c0_149, %c0_150] : memref<2x2x128xf32, #tpu.memory_space<vmem>>, vector<1x2x128xf32>
    %138 = vector.shape_cast %137 : vector<1x2x128xf32> to vector<2x128xf32>
    %139 = vector.shape_cast %136 : vector<2x128xf32> to vector<1x2x128xf32>
    tpu.vector_store %arg11[%c0_148, %c0_149, %c0_150], %139 {strides = array<i32>} : memref<2x2x128xf32, #tpu.memory_space<vmem>>, vector<1x2x128xf32>,
    %140 = vector.extract_strided_slice %135 {offsets = [0, 128], sizes = [2, 128], strides = [1, 1]} : vector<2x256xf32> to vector<2x128xf32>
    %c1_151 = arith.constant 1 : index
    %c0_152 = arith.constant 0 : index
    %c0_153 = arith.constant 0 : index
    %141 = vector.load %arg11[%c1_151, %c0_152, %c0_153] : memref<2x2x128xf32, #tpu.memory_space<vmem>>, vector<1x2x128xf32>
    %142 = vector.shape_cast %141 : vector<1x2x128xf32> to vector<2x128xf32>
    %143 = vector.shape_cast %140 : vector<2x128xf32> to vector<1x2x128xf32>
    tpu.vector_store %arg11[%c1_151, %c0_152, %c0_153], %143 {strides = array<i32>} : memref<2x2x128xf32, #tpu.memory_space<vmem>>, vector<1x2x128xf32>,
    return
  }
}

</mosaic_0001>

<llo_original>
// kernel: decoder_forward.1
$region0: #{decoder_forward.1}
  #allocation0 [shape = 'u32[]', space=smem, size = 0x4, offset = 0x4, fixed_abs, tag = 'smem constant byte address 0x4 - core index']
  #allocation1 [shape = 'u32[144,128]{1,0:T(1,128)}', space=vmem, size = 0x12000, scoped, tag = 'internal scratch']
  %s0 = inlined_call_operand.vmem [shape: f32[2,32,7], index: 0, kind: input, shape index: {}]
  %s1 = inlined_call_operand.vmem [shape: f32[2,64,32], index: 1, kind: input, shape index: {}]
  %s2 = inlined_call_operand.vmem [shape: f32[2,2,7,16], index: 2, kind: input, shape index: {}]
  %s3 = inlined_call_operand.vmem [shape: f32[3,32,64], index: 3, kind: input, shape index: {}]
  %s4 = inlined_call_operand.vmem [shape: f32[3,16,32], index: 4, kind: input, shape index: {}]
  %s5 = inlined_call_operand.hbm [shape: f32[3,16,32], index: 5, kind: input, shape index: {}]
  %s6 = inlined_call_operand.hbm [shape: f32[3,32,64], index: 6, kind: input, shape index: {}]
  %s7 = inlined_call_operand.vmem [shape: f32[3,8,16], index: 7, kind: input, shape index: {}]
  %s8 = inlined_call_operand.vmem [shape: f32[3,64,128], index: 8, kind: input, shape index: {}]
  %s9 = inlined_call_operand.hbm [shape: f32[3,2,8], index: 9, kind: input, shape index: {}]
  %s10 = inlined_call_operand.hbm [shape: f32[3,128,256], index: 10, kind: input, shape index: {}]
  %s11 = inlined_call_operand.hbm [shape: f32[2,2,128], index: 11, kind: output, shape index: {}]
  %s12 = sld [smem:[#allocation0]]
  $region70: #{decoder_forward.1} parent=0
    _
  %s14 = ssub.s32 1, %s12
  %s15 = scalar_select 0, %s14, %s12
  $region1: #{decoder_forward.1} parent=0
    #allocation2 [shape = 'u8[24576]{0}', space=vmem, size = 0x6000, scoped, tag = 'input window, operand 5, single buffered']
    #allocation3 [shape = 's32[1]{0}', space=sflag, size = 0x4, scoped, tag = 'scoped memory for decoder_forward.1']
    #allocation4 [shape = 's32[1]{0}', space=sflag, size = 0x4, scoped, tag = 'scoped memory for decoder_forward.1']
    #allocation5 [shape = 'u8[49152]{0}', space=vmem, size = 0xc000, scoped, tag = 'input window, operand 6, single buffered']
    #allocation6 [shape = 's32[1]{0}', space=sflag, size = 0x4, scoped, tag = 'scoped memory for decoder_forward.1']
    #allocation7 [shape = 'u8[3072]{0}', space=vmem, size = 0xc00, scoped, tag = 'input window, operand 9, single buffered']
    #allocation8 [shape = 'u8[393216]{0}', space=vmem, size = 0x60000, scoped, tag = 'input window, operand 10, single buffered']
    #allocation9 [shape = 's32[1]{0}', space=sflag, size = 0x4, scoped, tag = 'scoped memory for decoder_forward.1']
    #allocation10 [shape = 'u8[2048]{0}', space=vmem, size = 0x800, scoped, tag = 'output window, operand 0, single buffered']
    %16 = vsyncpa [#allocation3], 0
    %17 = vsyncpa [#allocation6], 0
    %18 = vsyncpa [#allocation9], 0
    %19 = vsyncpa [#allocation4], 0
    // Predicated region
    $region2: #{decoder_forward.1} parent=1 // pred_check
      _
    $region3: #{decoder_forward.1} parent=1 // pred_check_branch
      %21 = sbr.rel (0) target = $region5
    $region4: #{decoder_forward.1} parent=1 // pred_region
      _
    $region5: #{decoder_forward.1} parent=1 // pred_fallthru
      _
    // Predicated region
    $region6: #{decoder_forward.1} parent=1 // pred_check
      _
    $region7: #{decoder_forward.1} parent=1 // pred_check_branch
      %23 = sbr.rel (0) target = $region9
    $region8: #{decoder_forward.1} parent=1 // pred_region
      _
    $region9: #{decoder_forward.1} parent=1 // pred_fallthru
      _
    // Predicated region
    $region10: #{decoder_forward.1} parent=1 // pred_check
      _
    $region11: #{decoder_forward.1} parent=1 // pred_check_branch
      %25 = sbr.rel (0) target = $region13
    $region12: #{decoder_forward.1} parent=1 // pred_region
      _
    $region13: #{decoder_forward.1} parent=1 // pred_fallthru
      _
    // Predicated region
    $region14: #{decoder_forward.1} parent=1 // pred_check
      _
    $region15: #{decoder_forward.1} parent=1 // pred_check_branch
      %27 = sbr.rel (0) target = $region17
    $region16: #{decoder_forward.1} parent=1 // pred_region
      _
    $region17: #{decoder_forward.1} parent=1 // pred_fallthru
      _
    // Predicated region
    $region18: #{decoder_forward.1} parent=1 // pred_check
      _
    $region19: #{decoder_forward.1} parent=1 // pred_check_branch
      %29 = sbr.rel (0) target = $region21
    $region20: #{decoder_forward.1} parent=1 // pred_region
      _
    $region21: #{decoder_forward.1} parent=1 // pred_fallthru
      _
    // Predicated region
    $region22: #{decoder_forward.1} parent=1 // pred_check
      _
    $region23: #{decoder_forward.1} parent=1 // pred_check_branch
      %31 = sbr.rel (0) target = $region25
    $region24: #{decoder_forward.1} parent=1 // pred_region
      %s33 = ssub.s32 768, 768
      %34 = vsyncadd [#allocation3], %s33
      %s35 = sshll.u32 [#allocation2], 4
      %s36 = int_to_ptr.vmem [resolvable:$true] %s35
      %41 = dma.hbm_to_vmem [thread:$0]  %s5, 768, %s36, [#allocation3], 128, 128, 8
    $region25: #{decoder_forward.1} parent=1 // pred_fallthru
      _
    // Predicated region
    $region26: #{decoder_forward.1} parent=1 // pred_check
      _
    $region27: #{decoder_forward.1} parent=1 // pred_check_branch
      %43 = sbr.rel (0) target = $region29
    $region28: #{decoder_forward.1} parent=1 // pred_region
      %s45 = ssub.s32 1536, 1536
      %46 = vsyncadd [#allocation6], %s45
      %s47 = sshll.u32 [#allocation5], 4
      %s48 = int_to_ptr.vmem [resolvable:$true] %s47
      %53 = dma.hbm_to_vmem [thread:$0]  %s6, 1536, %s48, [#allocation6], 128, 128, 8
    $region29: #{decoder_forward.1} parent=1 // pred_fallthru
      _
    // Predicated region
    $region30: #{decoder_forward.1} parent=1 // pred_check
      _
    $region31: #{decoder_forward.1} parent=1 // pred_check_branch
      %55 = sbr.rel (0) target = $region33
    $region32: #{decoder_forward.1} parent=1 // pred_region
      _
    $region33: #{decoder_forward.1} parent=1 // pred_fallthru
      _
    // Predicated region
    $region34: #{decoder_forward.1} parent=1 // pred_check
      _
    $region35: #{decoder_forward.1} parent=1 // pred_check_branch
      %57 = sbr.rel (0) target = $region37
    $region36: #{decoder_forward.1} parent=1 // pred_region
      _
    $region37: #{decoder_forward.1} parent=1 // pred_fallthru
      _
    // Predicated region
    $region38: #{decoder_forward.1} parent=1 // pred_check
      _
    $region39: #{decoder_forward.1} parent=1 // pred_check_branch
      %59 = sbr.rel (0) target = $region41
    $region40: #{decoder_forward.1} parent=1 // pred_region
      %s61 = ssub.s32 96, 96
      %62 = vsyncadd [#allocation6], %s61
      %s63 = sshll.u32 [#allocation7], 4
      %s64 = int_to_ptr.vmem [resolvable:$true] %s63
      %69 = dma.hbm_to_vmem [thread:$0]  %s9, 96, %s64, [#allocation6], 32, 32, 2
    $region41: #{decoder_forward.1} parent=1 // pred_fallthru
      _
    // Predicated region
    $region42: #{decoder_forward.1} parent=1 // pred_check
      _
    $region43: #{decoder_forward.1} parent=1 // pred_check_branch
      %71 = sbr.rel (0) target = $region45
    $region44: #{decoder_forward.1} parent=1 // pred_region
      %s73 = ssub.s32 12288, 12288
      %74 = vsyncadd [#allocation9], %s73
      %s75 = sshll.u32 [#allocation8], 4
      %s76 = int_to_ptr.vmem [resolvable:$true] %s75
      %81 = dma.hbm_to_vmem [thread:$0]  %s10, 12288, %s76, [#allocation9], 256, 256, 16
    $region45: #{decoder_forward.1} parent=1 // pred_fallthru
      _
    // Predicated region
    $region46: #{decoder_forward.1} parent=1 // pred_check
      _
    $region47: #{decoder_forward.1} parent=1 // pred_check_branch
      %83 = sbr.rel (0) target = $region49
    $region48: #{decoder_forward.1} parent=1 // pred_region
      %84 = dma.done [#allocation3], 768
    $region49: #{decoder_forward.1} parent=1 // pred_fallthru
      _
    // Predicated region
    $region50: #{decoder_forward.1} parent=1 // pred_check
      _
    $region51: #{decoder_forward.1} parent=1 // pred_check_branch
      %86 = sbr.rel (0) target = $region53
    $region52: #{decoder_forward.1} parent=1 // pred_region
      %87 = dma.done [#allocation6], 1536
    $region53: #{decoder_forward.1} parent=1 // pred_fallthru
      _
    // Predicated region
    $region54: #{decoder_forward.1} parent=1 // pred_check
      _
    $region55: #{decoder_forward.1} parent=1 // pred_check_branch
      %89 = sbr.rel (0) target = $region57
    $region56: #{decoder_forward.1} parent=1 // pred_region
      %90 = dma.done [#allocation6], 96
    $region57: #{decoder_forward.1} parent=1 // pred_fallthru
      _
    // Predicated region
    $region58: #{decoder_forward.1} parent=1 // pred_check
      _
    $region59: #{decoder_forward.1} parent=1 // pred_check_branch
      %92 = sbr.rel (0) target = $region61
    $region60: #{decoder_forward.1} parent=1 // pred_region
      %93 = dma.done [#allocation9], 12288
    $region61: #{decoder_forward.1} parent=1 // pred_fallthru
      _
    %v94 = vld [vmem:[%s1] sm:$0xff]
    %v95 = vld [vmem:[%s1 + $0x8] sm:$0xff]
    %v96 = vld [vmem:[%s1 + $0x10] sm:$0xff]
    %v97 = vld [vmem:[%s1 + $0x18] sm:$0xff]
    %v98 = vld [vmem:[%s1 + $0x20] sm:$0xff]
    %v99 = vld [vmem:[%s1 + $0x28] sm:$0xff]
    %v100 = vld [vmem:[%s1 + $0x30] sm:$0xff]
    %v101 = vld [vmem:[%s1 + $0x38] sm:$0xff]
    %v102 = vld [vmem:[%s0] sm:$0xff]
    %v103 = vld [vmem:[%s0 + $0x8] sm:$0xff]
    %v104 = vld [vmem:[%s0 + $0x10] sm:$0xff]
    %v105 = vld [vmem:[%s0 + $0x18] sm:$0xff]
    %vm106 = vcmask 261120
    %v108 = vsel %vm106, %v94, 0
    %v111 = vsel %vm106, %v95, 0
    %v114 = vsel %vm106, %v96, 0
    %v117 = vsel %vm106, %v97, 0
    %v120 = vsel %vm106, %v98, 0
    %v123 = vsel %vm106, %v99, 0
    %v126 = vsel %vm106, %v100, 0
    %v129 = vsel %vm106, %v101, 0
    %131 = vmatprep.subr.mxu0 0.0
    %132 = vmatpush1.msra.mxu0 %v102
    %133 = vmatprep.subr.mxu0 0.0
    %134 = vmatpush1.msra.mxu0 %v103
    %135 = vmatprep.subr.mxu0 0.0
    %136 = vmatpush1.msra.mxu0 %v104
    %137 = vmatprep.subr.mxu0 0.0
    %138 = vmatpush1.msra.mxu0 %v105
    %139 = vmatprep.subr.mxu0 0.0
    %140 = vmatpush1.msra.mxu0 0.0
    %141 = vmatprep.subr.mxu0 0.0
    %142 = vmatpush1.msra.mxu0 0.0
    %143 = vmatprep.subr.mxu0 0.0
    %144 = vmatpush1.msra.mxu0 0.0
    %145 = vmatprep.subr.mxu0 0.0
    %146 = vmatpush1.msra.mxu0 0.0
    %147 = vmatprep.subr.mxu0 0.0
    %148 = vmatpush1.msra.mxu0 0.0
    %149 = vmatprep.subr.mxu0 0.0
    %150 = vmatpush1.msra.mxu0 0.0
    %151 = vmatprep.subr.mxu0 0.0
    %152 = vmatpush1.msra.mxu0 0.0
    %153 = vmatprep.subr.mxu0 0.0
    %154 = vmatpush1.msra.mxu0 0.0
    %155 = vmatprep.subr.mxu0 0.0
    %156 = vmatpush1.msra.mxu0 0.0
    %157 = vmatprep.subr.mxu0 0.0
    %158 = vmatpush1.msra.mxu0 0.0
    %159 = vmatprep.subr.mxu0 0.0
    %160 = vmatpush1.msra.mxu0 0.0
    %161 = vmatprep.subr.mxu0 0.0
    %162 = vmatpush1.msra.mxu0 0.0
    %163 = vmatprep.subr.mxu0 0.0
    %164 = vmatpush1.msra.mxu0 0.0
    %165 = vmatprep.subr.mxu0 0.0
    %166 = vmatpush1.msra.mxu0 0.0
    %167 = vmatprep.subr.mxu0 0.0
    %168 = vmatpush1.msra.mxu0 0.0
    %169 = vmatprep.subr.mxu0 0.0
    %170 = vmatpush1.msra.mxu0 0.0
    %171 = vmatprep.subr.mxu0 0.0
    %172 = vmatpush1.msra.mxu0 0.0
    %173 = vmatprep.subr.mxu0 0.0
    %174 = vmatpush1.msra.mxu0 0.0
    %175 = vmatprep.subr.mxu0 0.0
    %176 = vmatpush1.msra.mxu0 0.0
    %177 = vmatprep.subr.mxu0 0.0
    %178 = vmatpush1.msra.mxu0 0.0
    %179 = vmatprep.subr.mxu0 0.0
    %180 = vmatpush1.msra.mxu0 0.0
    %181 = vmatprep.subr.mxu0 0.0
    %182 = vmatpush1.msra.mxu0 0.0
    %183 = vmatprep.subr.mxu0 0.0
    %184 = vmatpush1.msra.mxu0 0.0
    %185 = vmatprep.subr.mxu0 0.0
    %186 = vmatpush1.msra.mxu0 0.0
    %187 = vmatprep.subr.mxu0 0.0
    %188 = vmatpush1.msra.mxu0 0.0
    %189 = vmatprep.subr.mxu0 0.0
    %190 = vmatpush1.msra.mxu0 0.0
    %191 = vmatprep.subr.mxu0 0.0
    %192 = vmatpush1.msra.mxu0 0.0
    %193 = vmatprep.subr.mxu0 0.0
    %194 = vmatpush1.msra.mxu0 0.0
    %195 = vmatprep.mubr.f32.mxu0 0.0
    %196 = vmatmul.mubr.f32.gmra.mrb[0].mxu0 %v108
    %v197 = vpop.f32.mrb[0].mxu0
    %v198 = vadd.f32 0.0, %v197
    %v199 = vpop.f32.mrb[0].mxu0
    %200 = vmatprep.mubr.f32.mxu0 0.0
    %201 = vmatmul.mubr.f32.gmra.mrb[0].mxu0 %v111
    %v202 = vpop.f32.mrb[0].mxu0
    %v203 = vadd.f32 0.0, %v202
    %v204 = vpop.f32.mrb[0].mxu0
    %205 = vmatprep.mubr.f32.mxu0 0.0
    %206 = vmatmul.mubr.f32.gmra.mrb[0].mxu0 %v114
    %v207 = vpop.f32.mrb[0].mxu0
    %v208 = vadd.f32 0.0, %v207
    %v209 = vpop.f32.mrb[0].mxu0
    %210 = vmatprep.mubr.f32.mxu0 0.0
    %211 = vmatmul.mubr.f32.gmra.mrb[0].mxu0 %v117
    %v212 = vpop.f32.mrb[0].mxu0
    %v213 = vadd.f32 0.0, %v212
    %v214 = vpop.f32.mrb[0].mxu0
    %215 = vmatprep.mubr.f32.mxu0 0.0
    %216 = vmatmul.mubr.f32.gmra.mrb[0].mxu0 %v120
    %v217 = vpop.f32.mrb[0].mxu0
    %v218 = vadd.f32 0.0, %v217
    %v219 = vpop.f32.mrb[0].mxu0
    %220 = vmatprep.mubr.f32.mxu0 0.0
    %221 = vmatmul.mubr.f32.gmra.mrb[0].mxu0 %v123
    %v222 = vpop.f32.mrb[0].mxu0
    %v223 = vadd.f32 0.0, %v222
    %v224 = vpop.f32.mrb[0].mxu0
    %225 = vmatprep.mubr.f32.mxu0 0.0
    %226 = vmatmul.mubr.f32.gmra.mrb[0].mxu0 %v126
    %v227 = vpop.f32.mrb[0].mxu0
    %v228 = vadd.f32 0.0, %v227
    %v229 = vpop.f32.mrb[0].mxu0
    %230 = vmatprep.mubr.f32.mxu0 0.0
    %231 = vmatmul.mubr.f32.gmra.mrb[0].mxu0 %v129
    %v232 = vpop.f32.mrb[0].mxu0
    %v233 = vadd.f32 0.0, %v232
    %v234 = vpop.f32.mrb[0].mxu0
    %235 = vdwg.mxu0
    %v236 = vld [vmem:[%s2] sm:$0x7f]
    %s237 = scalar_lea.vmem %s0, 32
    %v238 = vld [vmem:[%s237] sm:$0xff]
    %v239 = vld [vmem:[%s237 + $0x8] sm:$0xff]
    %v240 = vld [vmem:[%s237 + $0x10] sm:$0xff]
    %v241 = vld [vmem:[%s237 + $0x18] sm:$0xff]
    %242 = vmatprep.subr.mxu0 0.0
    %243 = vmatpush1.msra.mxu0 %v238
    %244 = vmatprep.subr.mxu0 0.0
    %245 = vmatpush1.msra.mxu0 %v239
    %246 = vmatprep.subr.mxu0 0.0
    %247 = vmatpush1.msra.mxu0 %v240
    %248 = vmatprep.subr.mxu0 0.0
    %249 = vmatpush1.msra.mxu0 %v241
    %250 = vmatprep.subr.mxu0 0.0
    %251 = vmatpush1.msra.mxu0 0.0
    %252 = vmatprep.subr.mxu0 0.0
    %253 = vmatpush1.msra.mxu0 0.0
    %254 = vmatprep.subr.mxu0 0.0
    %255 = vmatpush1.msra.mxu0 0.0
    %256 = vmatprep.subr.mxu0 0.0
    %257 = vmatpush1.msra.mxu0 0.0
    %258 = vmatprep.subr.mxu0 0.0
    %259 = vmatpush1.msra.mxu0 0.0
    %260 = vmatprep.subr.mxu0 0.0
    %261 = vmatpush1.msra.mxu0 0.0
    %262 = vmatprep.subr.mxu0 0.0
    %263 = vmatpush1.msra.mxu0 0.0
    %264 = vmatprep.subr.mxu0 0.0
    %265 = vmatpush1.msra.mxu0 0.0
    %266 = vmatprep.subr.mxu0 0.0
    %267 = vmatpush1.msra.mxu0 0.0
    %268 = vmatprep.subr.mxu0 0.0
    %269 = vmatpush1.msra.mxu0 0.0
    %270 = vmatprep.subr.mxu0 0.0
    %271 = vmatpush1.msra.mxu0 0.0
    %272 = vmatprep.subr.mxu0 0.0
    %273 = vmatpush1.msra.mxu0 0.0
    %274 = vmatprep.subr.mxu0 0.0
    %275 = vmatpush1.msra.mxu0 0.0
    %276 = vmatprep.subr.mxu0 0.0
    %277 = vmatpush1.msra.mxu0 0.0
    %278 = vmatprep.subr.mxu0 0.0
    %279 = vmatpush1.msra.mxu0 0.0
    %280 = vmatprep.subr.mxu0 0.0
    %281 = vmatpush1.msra.mxu0 0.0
    %282 = vmatprep.subr.mxu0 0.0
    %283 = vmatpush1.msra.mxu0 0.0
    %284 = vmatprep.subr.mxu0 0.0
    %285 = vmatpush1.msra.mxu0 0.0
    %286 = vmatprep.subr.mxu0 0.0
    %287 = vmatpush1.msra.mxu0 0.0
    %288 = vmatprep.subr.mxu0 0.0
    %289 = vmatpush1.msra.mxu0 0.0
    %290 = vmatprep.subr.mxu0 0.0
    %291 = vmatpush1.msra.mxu0 0.0
    %292 = vmatprep.subr.mxu0 0.0
    %293 = vmatpush1.msra.mxu0 0.0
    %294 = vmatprep.subr.mxu0 0.0
    %295 = vmatpush1.msra.mxu0 0.0
    %296 = vmatprep.subr.mxu0 0.0
    %297 = vmatpush1.msra.mxu0 0.0
    %298 = vmatprep.subr.mxu0 0.0
    %299 = vmatpush1.msra.mxu0 0.0
    %300 = vmatprep.subr.mxu0 0.0
    %301 = vmatpush1.msra.mxu0 0.0
    %302 = vmatprep.subr.mxu0 0.0
    %303 = vmatpush1.msra.mxu0 0.0
    %304 = vmatprep.subr.mxu0 0.0
    %305 = vmatpush1.msra.mxu0 0.0
    %306 = vmatprep.mubr.f32.mxu0 0.0
    %307 = vmatmul.mubr.f32.gmra.mrb[0].mxu0 %v108
    %v308 = vpop.f32.mrb[0].mxu0
    %v309 = vadd.f32 0.0, %v308
    %v310 = vpop.f32.mrb[0].mxu0
    %311 = vmatprep.mubr.f32.mxu0 0.0
    %312 = vmatmul.mubr.f32.gmra.mrb[0].mxu0 %v111
    %v313 = vpop.f32.mrb[0].mxu0
    %v314 = vadd.f32 0.0, %v313
    %v315 = vpop.f32.mrb[0].mxu0
    %316 = vmatprep.mubr.f32.mxu0 0.0
    %317 = vmatmul.mubr.f32.gmra.mrb[0].mxu0 %v114
    %v318 = vpop.f32.mrb[0].mxu0
    %v319 = vadd.f32 0.0, %v318
    %v320 = vpop.f32.mrb[0].mxu0
    %321 = vmatprep.mubr.f32.mxu0 0.0
    %322 = vmatmul.mubr.f32.gmra.mrb[0].mxu0 %v117
    %v323 = vpop.f32.mrb[0].mxu0
    %v324 = vadd.f32 0.0, %v323
    %v325 = vpop.f32.mrb[0].mxu0
    %326 = vmatprep.mubr.f32.mxu0 0.0
    %327 = vmatmul.mubr.f32.gmra.mrb[0].mxu0 %v120
    %v328 = vpop.f32.mrb[0].mxu0
    %v329 = vadd.f32 0.0, %v328
    %v330 = vpop.f32.mrb[0].mxu0
    %331 = vmatprep.mubr.f32.mxu0 0.0
    %332 = vmatmul.mubr.f32.gmra.mrb[0].mxu0 %v123
    %v333 = vpop.f32.mrb[0].mxu0
    %v334 = vadd.f32 0.0, %v333
    %v335 = vpop.f32.mrb[0].mxu0
    %336 = vmatprep.mubr.f32.mxu0 0.0
    %337 = vmatmul.mubr.f32.gmra.mrb[0].mxu0 %v126
    %v338 = vpop.f32.mrb[0].mxu0
    %v339 = vadd.f32 0.0, %v338
    %v340 = vpop.f32.mrb[0].mxu0
    %341 = vmatprep.mubr.f32.mxu0 0.0
    %342 = vmatmul.mubr.f32.gmra.mrb[0].mxu0 %v129
    %v343 = vpop.f32.mrb[0].mxu0
    %v344 = vadd.f32 0.0, %v343
    %v345 = vpop.f32.mrb[0].mxu0
    %346 = vdwg.mxu0
    %s347 = scalar_lea.vmem %s2, 8
    %v348 = vld [vmem:[%s347] sm:$0x7f]
    %vm349 = vcmask 56320
    %v351 = vsel %vm349, %v309, 0
    %v354 = vsel %vm349, %v314, 0
    %v357 = vsel %vm349, %v319, 0
    %v360 = vsel %vm349, %v324, 0
    %v363 = vsel %vm349, %v329, 0
    %v366 = vsel %vm349, %v334, 0
    %v369 = vsel %vm349, %v339, 0
    %v372 = vsel %vm349, %v344, 0
    %vm374 = vcmask 1046528
    %v376 = vsel %vm374, %v348, 0
    %378 = vmatprep.subr.mxu0 0.0
    %379 = vmatpush1.msra.mxu0 %v376
    %380 = vmatprep.subr.mxu0 0.0
    %381 = vmatpush1.msra.mxu0 0.0
    %382 = vmatprep.subr.mxu0 0.0
    %383 = vmatpush1.msra.mxu0 0.0
    %384 = vmatprep.subr.mxu0 0.0
    %385 = vmatpush1.msra.mxu0 0.0
    %386 = vmatprep.subr.mxu0 0.0
    %387 = vmatpush1.msra.mxu0 0.0
    %388 = vmatprep.subr.mxu0 0.0
    %389 = vmatpush1.msra.mxu0 0.0
    %390 = vmatprep.subr.mxu0 0.0
    %391 = vmatpush1.msra.mxu0 0.0
    %392 = vmatprep.subr.mxu0 0.0
    %393 = vmatpush1.msra.mxu0 0.0
    %394 = vmatprep.subr.mxu0 0.0
    %395 = vmatpush1.msra.mxu0 0.0
    %396 = vmatprep.subr.mxu0 0.0
    %397 = vmatpush1.msra.mxu0 0.0
    %398 = vmatprep.subr.mxu0 0.0
    %399 = vmatpush1.msra.mxu0 0.0
    %400 = vmatprep.subr.mxu0 0.0
    %401 = vmatpush1.msra.mxu0 0.0
    %402 = vmatprep.subr.mxu0 0.0
    %403 = vmatpush1.msra.mxu0 0.0
    %404 = vmatprep.subr.mxu0 0.0
    %405 = vmatpush1.msra.mxu0 0.0
    %406 = vmatprep.subr.mxu0 0.0
    %407 = vmatpush1.msra.mxu0 0.0
    %408 = vmatprep.subr.mxu0 0.0
    %409 = vmatpush1.msra.mxu0 0.0
    %410 = vmatprep.subr.mxu0 0.0
    %411 = vmatpush1.msra.mxu0 0.0
    %412 = vmatprep.subr.mxu0 0.0
    %413 = vmatpush1.msra.mxu0 0.0
    %414 = vmatprep.subr.mxu0 0.0
    %415 = vmatpush1.msra.mxu0 0.0
    %416 = vmatprep.subr.mxu0 0.0
    %417 = vmatpush1.msra.mxu0 0.0
    %418 = vmatprep.subr.mxu0 0.0
    %419 = vmatpush1.msra.mxu0 0.0
    %420 = vmatprep.subr.mxu0 0.0
    %421 = vmatpush1.msra.mxu0 0.0
    %422 = vmatprep.subr.mxu0 0.0
    %423 = vmatpush1.msra.mxu0 0.0
    %424 = vmatprep.subr.mxu0 0.0
    %425 = vmatpush1.msra.mxu0 0.0
    %426 = vmatprep.subr.mxu0 0.0
    %427 = vmatpush1.msra.mxu0 0.0
    %428 = vmatprep.subr.mxu0 0.0
    %429 = vmatpush1.msra.mxu0 0.0
    %430 = vmatprep.subr.mxu0 0.0
    %431 = vmatpush1.msra.mxu0 0.0
    %432 = vmatprep.subr.mxu0 0.0
    %433 = vmatpush1.msra.mxu0 0.0
    %434 = vmatprep.subr.mxu0 0.0
    %435 = vmatpush1.msra.mxu0 0.0
    %436 = vmatprep.subr.mxu0 0.0
    %437 = vmatpush1.msra.mxu0 0.0
    %438 = vmatprep.subr.mxu0 0.0
    %439 = vmatpush1.msra.mxu0 0.0
    %440 = vmatprep.subr.mxu0 0.0
    %441 = vmatpush1.msra.mxu0 0.0
    %442 = vmatprep.mubr.f32.mxu0 0.0
    %443 = vmatmul.mubr.f32.gmra.mrb[0].mxu0 %v351
    %v444 = vpop.f32.mrb[0].mxu0
    %v445 = vadd.f32 0.0, %v444
    %v446 = vpop.f32.mrb[0].mxu0
    %447 = vmatprep.mubr.f32.mxu0 0.0
    %448 = vmatmul.mubr.f32.gmra.mrb[0].mxu0 %v354
    %v449 = vpop.f32.mrb[0].mxu0
    %v450 = vadd.f32 0.0, %v449
    %v451 = vpop.f32.mrb[0].mxu0
    %452 = vmatprep.mubr.f32.mxu0 0.0
    %453 = vmatmul.mubr.f32.gmra.mrb[0].mxu0 %v357
    %v454 = vpop.f32.mrb[0].mxu0
    %v455 = vadd.f32 0.0, %v454
    %v456 = vpop.f32.mrb[0].mxu0
    %457 = vmatprep.mubr.f32.mxu0 0.0
    %458 = vmatmul.mubr.f32.gmra.mrb[0].mxu0 %v360
    %v459 = vpop.f32.mrb[0].mxu0
    %v460 = vadd.f32 0.0, %v459
    %v461 = vpop.f32.mrb[0].mxu0
    %462 = vmatprep.mubr.f32.mxu0 0.0
    %463 = vmatmul.mubr.f32.gmra.mrb[0].mxu0 %v363
    %v464 = vpop.f32.mrb[0].mxu0
    %v465 = vadd.f32 0.0, %v464
    %v466 = vpop.f32.mrb[0].mxu0
    %467 = vmatprep.mubr.f32.mxu0 0.0
    %468 = vmatmul.mubr.f32.gmra.mrb[0].mxu0 %v366
    %v469 = vpop.f32.mrb[0].mxu0
    %v470 = vadd.f32 0.0, %v469
    %v471 = vpop.f32.mrb[0].mxu0
    %472 = vmatprep.mubr.f32.mxu0 0.0
    %473 = vmatmul.mubr.f32.gmra.mrb[0].mxu0 %v369
    %v474 = vpop.f32.mrb[0].mxu0
    %v475 = vadd.f32 0.0, %v474
    %v476 = vpop.f32.mrb[0].mxu0
    %477 = vmatprep.mubr.f32.mxu0 0.0
    %478 = vmatmul.mubr.f32.gmra.mrb[0].mxu0 %v372
    %v479 = vpop.f32.mrb[0].mxu0
    %v480 = vadd.f32 0.0, %v479
    %v481 = vpop.f32.mrb[0].mxu0
    %482 = vdwg.mxu0
    %v484 = vsel %vm349, %v198, 0
    %v487 = vsel %vm349, %v203, 0
    %v490 = vsel %vm349, %v208, 0
    %v493 = vsel %vm349, %v213, 0
    %v496 = vsel %vm349, %v218, 0
    %v499 = vsel %vm349, %v223, 0
    %v502 = vsel %vm349, %v228, 0
    %v505 = vsel %vm349, %v233, 0
    %v508 = vsel %vm374, %v236, 0
    %510 = vmatprep.subr.mxu0 0.0
    %511 = vmatpush1.msra.mxu0 %v508
    %512 = vmatprep.subr.mxu0 0.0
    %513 = vmatpush1.msra.mxu0 0.0
    %514 = vmatprep.subr.mxu0 0.0
    %515 = vmatpush1.msra.mxu0 0.0
    %516 = vmatprep.subr.mxu0 0.0
    %517 = vmatpush1.msra.mxu0 0.0
    %518 = vmatprep.subr.mxu0 0.0
    %519 = vmatpush1.msra.mxu0 0.0
    %520 = vmatprep.subr.mxu0 0.0
    %521 = vmatpush1.msra.mxu0 0.0
    %522 = vmatprep.subr.mxu0 0.0
    %523 = vmatpush1.msra.mxu0 0.0
    %524 = vmatprep.subr.mxu0 0.0
    %525 = vmatpush1.msra.mxu0 0.0
    %526 = vmatprep.subr.mxu0 0.0
    %527 = vmatpush1.msra.mxu0 0.0
    %528 = vmatprep.subr.mxu0 0.0
    %529 = vmatpush1.msra.mxu0 0.0
    %530 = vmatprep.subr.mxu0 0.0
    %531 = vmatpush1.msra.mxu0 0.0
    %532 = vmatprep.subr.mxu0 0.0
    %533 = vmatpush1.msra.mxu0 0.0
    %534 = vmatprep.subr.mxu0 0.0
    %535 = vmatpush1.msra.mxu0 0.0
    %536 = vmatprep.subr.mxu0 0.0
    %537 = vmatpush1.msra.mxu0 0.0
    %538 = vmatprep.subr.mxu0 0.0
    %539 = vmatpush1.msra.mxu0 0.0
    %540 = vmatprep.subr.mxu0 0.0
    %541 = vmatpush1.msra.mxu0 0.0
    %542 = vmatprep.subr.mxu0 0.0
    %543 = vmatpush1.msra.mxu0 0.0
    %544 = vmatprep.subr.mxu0 0.0
    %545 = vmatpush1.msra.mxu0 0.0
    %546 = vmatprep.subr.mxu0 0.0
    %547 = vmatpush1.msra.mxu0 0.0
    %548 = vmatprep.subr.mxu0 0.0
    %549 = vmatpush1.msra.mxu0 0.0
    %550 = vmatprep.subr.mxu0 0.0
    %551 = vmatpush1.msra.mxu0 0.0
    %552 = vmatprep.subr.mxu0 0.0
    %553 = vmatpush1.msra.mxu0 0.0
    %554 = vmatprep.subr.mxu0 0.0
    %555 = vmatpush1.msra.mxu0 0.0
    %556 = vmatprep.subr.mxu0 0.0
    %557 = vmatpush1.msra.mxu0 0.0
    %558 = vmatprep.subr.mxu0 0.0
    %559 = vmatpush1.msra.mxu0 0.0
    %560 = vmatprep.subr.mxu0 0.0
    %561 = vmatpush1.msra.mxu0 0.0
    %562 = vmatprep.subr.mxu0 0.0
    %563 = vmatpush1.msra.mxu0 0.0
    %564 = vmatprep.subr.mxu0 0.0
    %565 = vmatpush1.msra.mxu0 0.0
    %566 = vmatprep.subr.mxu0 0.0
    %567 = vmatpush1.msra.mxu0 0.0
    %568 = vmatprep.subr.mxu0 0.0
    %569 = vmatpush1.msra.mxu0 0.0
    %570 = vmatprep.subr.mxu0 0.0
    %571 = vmatpush1.msra.mxu0 0.0
    %572 = vmatprep.subr.mxu0 0.0
    %573 = vmatpush1.msra.mxu0 0.0
    %574 = vmatprep.mubr.f32.mxu0 0.0
    %575 = vmatmul.mubr.f32.gmra.mrb[0].mxu0 %v484
    %v576 = vpop.f32.mrb[0].mxu0
    %v577 = vadd.f32 %v445, %v576
    %v578 = vpop.f32.mrb[0].mxu0
    %579 = vmatprep.mubr.f32.mxu0 0.0
    %580 = vmatmul.mubr.f32.gmra.mrb[0].mxu0 %v487
    %v581 = vpop.f32.mrb[0].mxu0
    %v582 = vadd.f32 %v450, %v581
    %v583 = vpop.f32.mrb[0].mxu0
    %584 = vmatprep.mubr.f32.mxu0 0.0
    %585 = vmatmul.mubr.f32.gmra.mrb[0].mxu0 %v490
    %v586 = vpop.f32.mrb[0].mxu0
    %v587 = vadd.f32 %v455, %v586
    %v588 = vpop.f32.mrb[0].mxu0
    %589 = vmatprep.mubr.f32.mxu0 0.0
    %590 = vmatmul.mubr.f32.gmra.mrb[0].mxu0 %v493
    %v591 = vpop.f32.mrb[0].mxu0
    %v592 = vadd.f32 %v460, %v591
    %v593 = vpop.f32.mrb[0].mxu0
    %594 = vmatprep.mubr.f32.mxu0 0.0
    %595 = vmatmul.mubr.f32.gmra.mrb[0].mxu0 %v496
    %v596 = vpop.f32.mrb[0].mxu0
    %v597 = vadd.f32 %v465, %v596
    %v598 = vpop.f32.mrb[0].mxu0
    %599 = vmatprep.mubr.f32.mxu0 0.0
    %600 = vmatmul.mubr.f32.gmra.mrb[0].mxu0 %v499
    %v601 = vpop.f32.mrb[0].mxu0
    %v602 = vadd.f32 %v470, %v601
    %v603 = vpop.f32.mrb[0].mxu0
    %604 = vmatprep.mubr.f32.mxu0 0.0
    %605 = vmatmul.mubr.f32.gmra.mrb[0].mxu0 %v502
    %v606 = vpop.f32.mrb[0].mxu0
    %v607 = vadd.f32 %v475, %v606
    %v608 = vpop.f32.mrb[0].mxu0
    %609 = vmatprep.mubr.f32.mxu0 0.0
    %610 = vmatmul.mubr.f32.gmra.mrb[0].mxu0 %v505
    %v611 = vpop.f32.mrb[0].mxu0
    %v612 = vadd.f32 %v480, %v611
    %v613 = vpop.f32.mrb[0].mxu0
    %614 = vdwg.mxu0
    %s615 = scalar_lea.vmem %s1, 64
    %v616 = vld [vmem:[%s615] sm:$0xff]
    %v617 = vld [vmem:[%s615 + $0x8] sm:$0xff]
    %v618 = vld [vmem:[%s615 + $0x10] sm:$0xff]
    %v619 = vld [vmem:[%s615 + $0x18] sm:$0xff]
    %v620 = vld [vmem:[%s615 + $0x20] sm:$0xff]
    %v621 = vld [vmem:[%s615 + $0x28] sm:$0xff]
    %v622 = vld [vmem:[%s615 + $0x30] sm:$0xff]
    %v623 = vld [vmem:[%s615 + $0x38] sm:$0xff]
    %v625 = vsel %vm106, %v616, 0
    %v628 = vsel %vm106, %v617, 0
    %v631 = vsel %vm106, %v618, 0
    %v634 = vsel %vm106, %v619, 0
    %v637 = vsel %vm106, %v620, 0
    %v640 = vsel %vm106, %v621, 0
    %v643 = vsel %vm106, %v622, 0
    %v646 = vsel %vm106, %v623, 0
    %648 = vmatprep.subr.mxu0 0.0
    %649 = vmatpush1.msra.mxu0 %v102
    %650 = vmatprep.subr.mxu0 0.0
    %651 = vmatpush1.msra.mxu0 %v103
    %652 = vmatprep.subr.mxu0 0.0
    %653 = vmatpush1.msra.mxu0 %v104
    %654 = vmatprep.subr.mxu0 0.0
    %655 = vmatpush1.msra.mxu0 %v105
    %656 = vmatprep.subr.mxu0 0.0
    %657 = vmatpush1.msra.mxu0 0.0
    %658 = vmatprep.subr.mxu0 0.0
    %659 = vmatpush1.msra.mxu0 0.0
    %660 = vmatprep.subr.mxu0 0.0
    %661 = vmatpush1.msra.mxu0 0.0
    %662 = vmatprep.subr.mxu0 0.0
    %663 = vmatpush1.msra.mxu0 0.0
    %664 = vmatprep.subr.mxu0 0.0
    %665 = vmatpush1.msra.mxu0 0.0
    %666 = vmatprep.subr.mxu0 0.0
    %667 = vmatpush1.msra.mxu0 0.0
    %668 = vmatprep.subr.mxu0 0.0
    %669 = vmatpush1.msra.mxu0 0.0
    %670 = vmatprep.subr.mxu0 0.0
    %671 = vmatpush1.msra.mxu0 0.0
    %672 = vmatprep.subr.mxu0 0.0
    %673 = vmatpush1.msra.mxu0 0.0
    %674 = vmatprep.subr.mxu0 0.0
    %675 = vmatpush1.msra.mxu0 0.0
    %676 = vmatprep.subr.mxu0 0.0
    %677 = vmatpush1.msra.mxu0 0.0
    %678 = vmatprep.subr.mxu0 0.0
    %679 = vmatpush1.msra.mxu0 0.0
    %680 = vmatprep.subr.mxu0 0.0
    %681 = vmatpush1.msra.mxu0 0.0
    %682 = vmatprep.subr.mxu0 0.0
    %683 = vmatpush1.msra.mxu0 0.0
    %684 = vmatprep.subr.mxu0 0.0
    %685 = vmatpush1.msra.mxu0 0.0
    %686 = vmatprep.subr.mxu0 0.0
    %687 = vmatpush1.msra.mxu0 0.0
    %688 = vmatprep.subr.mxu0 0.0
    %689 = vmatpush1.msra.mxu0 0.0
    %690 = vmatprep.subr.mxu0 0.0
    %691 = vmatpush1.msra.mxu0 0.0
    %692 = vmatprep.subr.mxu0 0.0
    %693 = vmatpush1.msra.mxu0 0.0
    %694 = vmatprep.subr.mxu0 0.0
    %695 = vmatpush1.msra.mxu0 0.0
    %696 = vmatprep.subr.mxu0 0.0
    %697 = vmatpush1.msra.mxu0 0.0
    %698 = vmatprep.subr.mxu0 0.0
    %699 = vmatpush1.msra.mxu0 0.0
    %700 = vmatprep.subr.mxu0 0.0
    %701 = vmatpush1.msra.mxu0 0.0
    %702 = vmatprep.subr.mxu0 0.0
    %703 = vmatpush1.msra.mxu0 0.0
    %704 = vmatprep.subr.mxu0 0.0
    %705 = vmatpush1.msra.mxu0 0.0
    %706 = vmatprep.subr.mxu0 0.0
    %707 = vmatpush1.msra.mxu0 0.0
    %708 = vmatprep.subr.mxu0 0.0
    %709 = vmatpush1.msra.mxu0 0.0
    %710 = vmatprep.subr.mxu0 0.0
    %711 = vmatpush1.msra.mxu0 0.0
    %712 = vmatprep.mubr.f32.mxu0 0.0
    %713 = vmatmul.mubr.f32.gmra.mrb[0].mxu0 %v625
    %v714 = vpop.f32.mrb[0].mxu0
    %v715 = vadd.f32 0.0, %v714
    %v716 = vpop.f32.mrb[0].mxu0
    %717 = vmatprep.mubr.f32.mxu0 0.0
    %718 = vmatmul.mubr.f32.gmra.mrb[0].mxu0 %v628
    %v719 = vpop.f32.mrb[0].mxu0
    %v720 = vadd.f32 0.0, %v719
    %v721 = vpop.f32.mrb[0].mxu0
    %722 = vmatprep.mubr.f32.mxu0 0.0
    %723 = vmatmul.mubr.f32.gmra.mrb[0].mxu0 %v631
    %v724 = vpop.f32.mrb[0].mxu0
    %v725 = vadd.f32 0.0, %v724
    %v726 = vpop.f32.mrb[0].mxu0
    %727 = vmatprep.mubr.f32.mxu0 0.0
    %728 = vmatmul.mubr.f32.gmra.mrb[0].mxu0 %v634
    %v729 = vpop.f32.mrb[0].mxu0
    %v730 = vadd.f32 0.0, %v729
    %v731 = vpop.f32.mrb[0].mxu0
    %732 = vmatprep.mubr.f32.mxu0 0.0
    %733 = vmatmul.mubr.f32.gmra.mrb[0].mxu0 %v637
    %v734 = vpop.f32.mrb[0].mxu0
    %v735 = vadd.f32 0.0, %v734
    %v736 = vpop.f32.mrb[0].mxu0
    %737 = vmatprep.mubr.f32.mxu0 0.0
    %738 = vmatmul.mubr.f32.gmra.mrb[0].mxu0 %v640
    %v739 = vpop.f32.mrb[0].mxu0
    %v740 = vadd.f32 0.0, %v739
    %v741 = vpop.f32.mrb[0].mxu0
    %742 = vmatprep.mubr.f32.mxu0 0.0
    %743 = vmatmul.mubr.f32.gmra.mrb[0].mxu0 %v643
    %v744 = vpop.f32.mrb[0].mxu0
    %v745 = vadd.f32 0.0, %v744
    %v746 = vpop.f32.mrb[0].mxu0
    %747 = vmatprep.mubr.f32.mxu0 0.0
    %748 = vmatmul.mubr.f32.gmra.mrb[0].mxu0 %v646
    %v749 = vpop.f32.mrb[0].mxu0
    %v750 = vadd.f32 0.0, %v749
    %v751 = vpop.f32.mrb[0].mxu0
    %752 = vdwg.mxu0
    %s753 = scalar_lea.vmem %s2, 16
    %v754 = vld [vmem:[%s753] sm:$0x7f]
    %v756 = vsel %vm349, %v715, 0
    %v759 = vsel %vm349, %v720, 0
    %v762 = vsel %vm349, %v725, 0
    %v765 = vsel %vm349, %v730, 0
    %v768 = vsel %vm349, %v735, 0
    %v771 = vsel %vm349, %v740, 0
    %v774 = vsel %vm349, %v745, 0
    %v777 = vsel %vm349, %v750, 0
    %v780 = vsel %vm374, %v754, 0
    %782 = vmatprep.subr.mxu0 0.0
    %783 = vmatpush1.msra.mxu0 %v780
    %784 = vmatprep.subr.mxu0 0.0
    %785 = vmatpush1.msra.mxu0 0.0
    %786 = vmatprep.subr.mxu0 0.0
    %787 = vmatpush1.msra.mxu0 0.0
    %788 = vmatprep.subr.mxu0 0.0
    %789 = vmatpush1.msra.mxu0 0.0
    %790 = vmatprep.subr.mxu0 0.0
    %791 = vmatpush1.msra.mxu0 0.0
    %792 = vmatprep.subr.mxu0 0.0
    %793 = vmatpush1.msra.mxu0 0.0
    %794 = vmatprep.subr.mxu0 0.0
    %795 = vmatpush1.msra.mxu0 0.0
    %796 = vmatprep.subr.mxu0 0.0
    %797 = vmatpush1.msra.mxu0 0.0
    %798 = vmatprep.subr.mxu0 0.0
    %799 = vmatpush1.msra.mxu0 0.0
    %800 = vmatprep.subr.mxu0 0.0
    %801 = vmatpush1.msra.mxu0 0.0
    %802 = vmatprep.subr.mxu0 0.0
    %803 = vmatpush1.msra.mxu0 0.0
    %804 = vmatprep.subr.mxu0 0.0
    %805 = vmatpush1.msra.mxu0 0.0
    %806 = vmatprep.subr.mxu0 0.0
    %807 = vmatpush1.msra.mxu0 0.0
    %808 = vmatprep.subr.mxu0 0.0
    %809 = vmatpush1.msra.mxu0 0.0
    %810 = vmatprep.subr.mxu0 0.0
    %811 = vmatpush1.msra.mxu0 0.0
    %812 = vmatprep.subr.mxu0 0.0
    %813 = vmatpush1.msra.mxu0 0.0
    %814 = vmatprep.subr.mxu0 0.0
    %815 = vmatpush1.msra.mxu0 0.0
    %816 = vmatprep.subr.mxu0 0.0
    %817 = vmatpush1.msra.mxu0 0.0
    %818 = vmatprep.subr.mxu0 0.0
    %819 = vmatpush1.msra.mxu0 0.0
    %820 = vmatprep.subr.mxu0 0.0
    %821 = vmatpush1.msra.mxu0 0.0
    %822 = vmatprep.subr.mxu0 0.0
    %823 = vmatpush1.msra.mxu0 0.0
    %824 = vmatprep.subr.mxu0 0.0
    %825 = vmatpush1.msra.mxu0 0.0
    %826 = vmatprep.subr.mxu0 0.0
    %827 = vmatpush1.msra.mxu0 0.0
    %828 = vmatprep.subr.mxu0 0.0
    %829 = vmatpush1.msra.mxu0 0.0
    %830 = vmatprep.subr.mxu0 0.0
    %831 = vmatpush1.msra.mxu0 0.0
    %832 = vmatprep.subr.mxu0 0.0
    %833 = vmatpush1.msra.mxu0 0.0
    %834 = vmatprep.subr.mxu0 0.0
    %835 = vmatpush1.msra.mxu0 0.0
    %836 = vmatprep.subr.mxu0 0.0
    %837 = vmatpush1.msra.mxu0 0.0
    %838 = vmatprep.subr.mxu0 0.0
    %839 = vmatpush1.msra.mxu0 0.0
    %840 = vmatprep.subr.mxu0 0.0
    %841 = vmatpush1.msra.mxu0 0.0
    %842 = vmatprep.subr.mxu0 0.0
    %843 = vmatpush1.msra.mxu0 0.0
    %844 = vmatprep.subr.mxu0 0.0
    %845 = vmatpush1.msra.mxu0 0.0
    %846 = vmatprep.mubr.f32.mxu0 0.0
    %847 = vmatmul.mubr.f32.gmra.mrb[0].mxu0 %v756
    %v848 = vpop.f32.mrb[0].mxu0
    %v849 = vadd.f32 0.0, %v848
    %v850 = vpop.f32.mrb[0].mxu0
    %851 = vmatprep.mubr.f32.mxu0 0.0
    %852 = vmatmul.mubr.f32.gmra.mrb[0].mxu0 %v759
    %v853 = vpop.f32.mrb[0].mxu0
    %v854 = vadd.f32 0.0, %v853
    %v855 = vpop.f32.mrb[0].mxu0
    %856 = vmatprep.mubr.f32.mxu0 0.0
    %857 = vmatmul.mubr.f32.gmra.mrb[0].mxu0 %v762
    %v858 = vpop.f32.mrb[0].mxu0
    %v859 = vadd.f32 0.0, %v858
    %v860 = vpop.f32.mrb[0].mxu0
    %861 = vmatprep.mubr.f32.mxu0 0.0
    %862 = vmatmul.mubr.f32.gmra.mrb[0].mxu0 %v765
    %v863 = vpop.f32.mrb[0].mxu0
    %v864 = vadd.f32 0.0, %v863
    %v865 = vpop.f32.mrb[0].mxu0
    %866 = vmatprep.mubr.f32.mxu0 0.0
    %867 = vmatmul.mubr.f32.gmra.mrb[0].mxu0 %v768
    %v868 = vpop.f32.mrb[0].mxu0
    %v869 = vadd.f32 0.0, %v868
    %v870 = vpop.f32.mrb[0].mxu0
    %871 = vmatprep.mubr.f32.mxu0 0.0
    %872 = vmatmul.mubr.f32.gmra.mrb[0].mxu0 %v771
    %v873 = vpop.f32.mrb[0].mxu0
    %v874 = vadd.f32 0.0, %v873
    %v875 = vpop.f32.mrb[0].mxu0
    %876 = vmatprep.mubr.f32.mxu0 0.0
    %877 = vmatmul.mubr.f32.gmra.mrb[0].mxu0 %v774
    %v878 = vpop.f32.mrb[0].mxu0
    %v879 = vadd.f32 0.0, %v878
    %v880 = vpop.f32.mrb[0].mxu0
    %881 = vmatprep.mubr.f32.mxu0 0.0
    %882 = vmatmul.mubr.f32.gmra.mrb[0].mxu0 %v777
    %v883 = vpop.f32.mrb[0].mxu0
    %v884 = vadd.f32 0.0, %v883
    %v885 = vpop.f32.mrb[0].mxu0
    %886 = vdwg.mxu0
    %v887 = vadd.f32 %v577, %v849
    %v888 = vadd.f32 %v582, %v854
    %v889 = vadd.f32 %v587, %v859
    %v890 = vadd.f32 %v592, %v864
    %v891 = vadd.f32 %v597, %v869
    %v892 = vadd.f32 %v602, %v874
    %v893 = vadd.f32 %v607, %v879
    %v894 = vadd.f32 %v612, %v884
    %895 = vmatprep.subr.mxu0 0.0
    %896 = vmatpush1.msra.mxu0 %v238
    %897 = vmatprep.subr.mxu0 0.0
    %898 = vmatpush1.msra.mxu0 %v239
    %899 = vmatprep.subr.mxu0 0.0
    %900 = vmatpush1.msra.mxu0 %v240
    %901 = vmatprep.subr.mxu0 0.0
    %902 = vmatpush1.msra.mxu0 %v241
    %903 = vmatprep.subr.mxu0 0.0
    %904 = vmatpush1.msra.mxu0 0.0
    %905 = vmatprep.subr.mxu0 0.0
    %906 = vmatpush1.msra.mxu0 0.0
    %907 = vmatprep.subr.mxu0 0.0
    %908 = vmatpush1.msra.mxu0 0.0
    %909 = vmatprep.subr.mxu0 0.0
    %910 = vmatpush1.msra.mxu0 0.0
    %911 = vmatprep.subr.mxu0 0.0
    %912 = vmatpush1.msra.mxu0 0.0
    %913 = vmatprep.subr.mxu0 0.0
    %914 = vmatpush1.msra.mxu0 0.0
    %915 = vmatprep.subr.mxu0 0.0
    %916 = vmatpush1.msra.mxu0 0.0
    %917 = vmatprep.subr.mxu0 0.0
    %918 = vmatpush1.msra.mxu0 0.0
    %919 = vmatprep.subr.mxu0 0.0
    %920 = vmatpush1.msra.mxu0 0.0
    %921 = vmatprep.subr.mxu0 0.0
    %922 = vmatpush1.msra.mxu0 0.0
    %923 = vmatprep.subr.mxu0 0.0
    %924 = vmatpush1.msra.mxu0 0.0
    %925 = vmatprep.subr.mxu0 0.0
    %926 = vmatpush1.msra.mxu0 0.0
    %927 = vmatprep.subr.mxu0 0.0
    %928 = vmatpush1.msra.mxu0 0.0
    %929 = vmatprep.subr.mxu0 0.0
    %930 = vmatpush1.msra.mxu0 0.0
    %931 = vmatprep.subr.mxu0 0.0
    %932 = vmatpush1.msra.mxu0 0.0
    %933 = vmatprep.subr.mxu0 0.0
    %934 = vmatpush1.msra.mxu0 0.0
    %935 = vmatprep.subr.mxu0 0.0
    %936 = vmatpush1.msra.mxu0 0.0
    %937 = vmatprep.subr.mxu0 0.0
    %938 = vmatpush1.msra.mxu0 0.0
    %939 = vmatprep.subr.mxu0 0.0
    %940 = vmatpush1.msra.mxu0 0.0
    %941 = vmatprep.subr.mxu0 0.0
    %942 = vmatpush1.msra.mxu0 0.0
    %943 = vmatprep.subr.mxu0 0.0
    %944 = vmatpush1.msra.mxu0 0.0
    %945 = vmatprep.subr.mxu0 0.0
    %946 = vmatpush1.msra.mxu0 0.0
    %947 = vmatprep.subr.mxu0 0.0
    %948 = vmatpush1.msra.mxu0 0.0
    %949 = vmatprep.subr.mxu0 0.0
    %950 = vmatpush1.msra.mxu0 0.0
    %951 = vmatprep.subr.mxu0 0.0
    %952 = vmatpush1.msra.mxu0 0.0
    %953 = vmatprep.subr.mxu0 0.0
    %954 = vmatpush1.msra.mxu0 0.0
    %955 = vmatprep.subr.mxu0 0.0
    %956 = vmatpush1.msra.mxu0 0.0
    %957 = vmatprep.subr.mxu0 0.0
    %958 = vmatpush1.msra.mxu0 0.0
    %959 = vmatprep.mubr.f32.mxu0 0.0
    %960 = vmatmul.mubr.f32.gmra.mrb[0].mxu0 %v625
    %v961 = vpop.f32.mrb[0].mxu0
    %v962 = vadd.f32 0.0, %v961
    %v963 = vpop.f32.mrb[0].mxu0
    %964 = vmatprep.mubr.f32.mxu0 0.0
    %965 = vmatmul.mubr.f32.gmra.mrb[0].mxu0 %v628
    %v966 = vpop.f32.mrb[0].mxu0
    %v967 = vadd.f32 0.0, %v966
    %v968 = vpop.f32.mrb[0].mxu0
    %969 = vmatprep.mubr.f32.mxu0 0.0
    %970 = vmatmul.mubr.f32.gmra.mrb[0].mxu0 %v631
    %v971 = vpop.f32.mrb[0].mxu0
    %v972 = vadd.f32 0.0, %v971
    %v973 = vpop.f32.mrb[0].mxu0
    %974 = vmatprep.mubr.f32.mxu0 0.0
    %975 = vmatmul.mubr.f32.gmra.mrb[0].mxu0 %v634
    %v976 = vpop.f32.mrb[0].mxu0
    %v977 = vadd.f32 0.0, %v976
    %v978 = vpop.f32.mrb[0].mxu0
    %979 = vmatprep.mubr.f32.mxu0 0.0
    %980 = vmatmul.mubr.f32.gmra.mrb[0].mxu0 %v637
    %v981 = vpop.f32.mrb[0].mxu0
    %v982 = vadd.f32 0.0, %v981
    %v983 = vpop.f32.mrb[0].mxu0
    %984 = vmatprep.mubr.f32.mxu0 0.0
    %985 = vmatmul.mubr.f32.gmra.mrb[0].mxu0 %v640
    %v986 = vpop.f32.mrb[0].mxu0
    %v987 = vadd.f32 0.0, %v986
    %v988 = vpop.f32.mrb[0].mxu0
    %989 = vmatprep.mubr.f32.mxu0 0.0
    %990 = vmatmul.mubr.f32.gmra.mrb[0].mxu0 %v643
    %v991 = vpop.f32.mrb[0].mxu0
    %v992 = vadd.f32 0.0, %v991
    %v993 = vpop.f32.mrb[0].mxu0
    %994 = vmatprep.mubr.f32.mxu0 0.0
    %995 = vmatmul.mubr.f32.gmra.mrb[0].mxu0 %v646
    %v996 = vpop.f32.mrb[0].mxu0
    %v997 = vadd.f32 0.0, %v996
    %v998 = vpop.f32.mrb[0].mxu0
    %999 = vdwg.mxu0
    %s1000 = scalar_lea.vmem %s2, 24
    %v1001 = vld [vmem:[%s1000] sm:$0x7f]
    %v1003 = vsel %vm349, %v962, 0
    %v1006 = vsel %vm349, %v967, 0
    %v1009 = vsel %vm349, %v972, 0
    %v1012 = vsel %vm349, %v977, 0
    %v1015 = vsel %vm349, %v982, 0
    %v1018 = vsel %vm349, %v987, 0
    %v1021 = vsel %vm349, %v992, 0
    %v1024 = vsel %vm349, %v997, 0
    %v1027 = vsel %vm374, %v1001, 0
    %1029 = vmatprep.subr.mxu0 0.0
    %1030 = vmatpush1.msra.mxu0 %v1027
    %1031 = vmatprep.subr.mxu0 0.0
    %1032 = vmatpush1.msra.mxu0 0.0
    %1033 = vmatprep.subr.mxu0 0.0
    %1034 = vmatpush1.msra.mxu0 0.0
    %1035 = vmatprep.subr.mxu0 0.0
    %1036 = vmatpush1.msra.mxu0 0.0
    %1037 = vmatprep.subr.mxu0 0.0
    %1038 = vmatpush1.msra.mxu0 0.0
    %1039 = vmatprep.subr.mxu0 0.0
    %1040 = vmatpush1.msra.mxu0 0.0
    %1041 = vmatprep.subr.mxu0 0.0
    %1042 = vmatpush1.msra.mxu0 0.0
    %1043 = vmatprep.subr.mxu0 0.0
    %1044 = vmatpush1.msra.mxu0 0.0
    %1045 = vmatprep.subr.mxu0 0.0
    %1046 = vmatpush1.msra.mxu0 0.0
    %1047 = vmatprep.subr.mxu0 0.0
    %1048 = vmatpush1.msra.mxu0 0.0
    %1049 = vmatprep.subr.mxu0 0.0
    %1050 = vmatpush1.msra.mxu0 0.0
    %1051 = vmatprep.subr.mxu0 0.0
    %1052 = vmatpush1.msra.mxu0 0.0
    %1053 = vmatprep.subr.mxu0 0.0
    %1054 = vmatpush1.msra.mxu0 0.0
    %1055 = vmatprep.subr.mxu0 0.0
    %1056 = vmatpush1.msra.mxu0 0.0
    %1057 = vmatprep.subr.mxu0 0.0
    %1058 = vmatpush1.msra.mxu0 0.0
    %1059 = vmatprep.subr.mxu0 0.0
    %1060 = vmatpush1.msra.mxu0 0.0
    %1061 = vmatprep.subr.mxu0 0.0
    %1062 = vmatpush1.msra.mxu0 0.0
    %1063 = vmatprep.subr.mxu0 0.0
    %1064 = vmatpush1.msra.mxu0 0.0
    %1065 = vmatprep.subr.mxu0 0.0
    %1066 = vmatpush1.msra.mxu0 0.0
    %1067 = vmatprep.subr.mxu0 0.0
    %1068 = vmatpush1.msra.mxu0 0.0
    %1069 = vmatprep.subr.mxu0 0.0
    %1070 = vmatpush1.msra.mxu0 0.0
    %1071 = vmatprep.subr.mxu0 0.0
    %1072 = vmatpush1.msra.mxu0 0.0
    %1073 = vmatprep.subr.mxu0 0.0
    %1074 = vmatpush1.msra.mxu0 0.0
    %1075 = vmatprep.subr.mxu0 0.0
    %1076 = vmatpush1.msra.mxu0 0.0
    %1077 = vmatprep.subr.mxu0 0.0
    %1078 = vmatpush1.msra.mxu0 0.0
    %1079 = vmatprep.subr.mxu0 0.0
    %1080 = vmatpush1.msra.mxu0 0.0
    %1081 = vmatprep.subr.mxu0 0.0
    %1082 = vmatpush1.msra.mxu0 0.0
    %1083 = vmatprep.subr.mxu0 0.0
    %1084 = vmatpush1.msra.mxu0 0.0
    %1085 = vmatprep.subr.mxu0 0.0
    %1086 = vmatpush1.msra.mxu0 0.0
    %1087 = vmatprep.subr.mxu0 0.0
    %1088 = vmatpush1.msra.mxu0 0.0
    %1089 = vmatprep.subr.mxu0 0.0
    %1090 = vmatpush1.msra.mxu0 0.0
    %1091 = vmatprep.subr.mxu0 0.0
    %1092 = vmatpush1.msra.mxu0 0.0
    %1093 = vmatprep.mubr.f32.mxu0 0.0
    %1094 = vmatmul.mubr.f32.gmra.mrb[0].mxu0 %v1003
    %v1095 = vpop.f32.mrb[0].mxu0
    %v1096 = vadd.f32 0.0, %v1095
    %v1097 = vpop.f32.mrb[0].mxu0
    %1098 = vmatprep.mubr.f32.mxu0 0.0
    %1099 = vmatmul.mubr.f32.gmra.mrb[0].mxu0 %v1006
    %v1100 = vpop.f32.mrb[0].mxu0
    %v1101 = vadd.f32 0.0, %v1100
    %v1102 = vpop.f32.mrb[0].mxu0
    %1103 = vmatprep.mubr.f32.mxu0 0.0
    %1104 = vmatmul.mubr.f32.gmra.mrb[0].mxu0 %v1009
    %v1105 = vpop.f32.mrb[0].mxu0
    %v1106 = vadd.f32 0.0, %v1105
    %v1107 = vpop.f32.mrb[0].mxu0
    %1108 = vmatprep.mubr.f32.mxu0 0.0
    %1109 = vmatmul.mubr.f32.gmra.mrb[0].mxu0 %v1012
    %v1110 = vpop.f32.mrb[0].mxu0
    %v1111 = vadd.f32 0.0, %v1110
    %v1112 = vpop.f32.mrb[0].mxu0
    %1113 = vmatprep.mubr.f32.mxu0 0.0
    %1114 = vmatmul.mubr.f32.gmra.mrb[0].mxu0 %v1015
    %v1115 = vpop.f32.mrb[0].mxu0
    %v1116 = vadd.f32 0.0, %v1115
    %v1117 = vpop.f32.mrb[0].mxu0
    %1118 = vmatprep.mubr.f32.mxu0 0.0
    %1119 = vmatmul.mubr.f32.gmra.mrb[0].mxu0 %v1018
    %v1120 = vpop.f32.mrb[0].mxu0
    %v1121 = vadd.f32 0.0, %v1120
    %v1122 = vpop.f32.mrb[0].mxu0
    %1123 = vmatprep.mubr.f32.mxu0 0.0
    %1124 = vmatmul.mubr.f32.gmra.mrb[0].mxu0 %v1021
    %v1125 = vpop.f32.mrb[0].mxu0
    %v1126 = vadd.f32 0.0, %v1125
    %v1127 = vpop.f32.mrb[0].mxu0
    %1128 = vmatprep.mubr.f32.mxu0 0.0
    %1129 = vmatmul.mubr.f32.gmra.mrb[0].mxu0 %v1024
    %v1130 = vpop.f32.mrb[0].mxu0
    %v1131 = vadd.f32 0.0, %v1130
    %v1132 = vpop.f32.mrb[0].mxu0
    %1133 = vdwg.mxu0
    %v1134 = vadd.f32 %v887, %v1096
    %v1135 = vadd.f32 %v888, %v1101
    %v1136 = vadd.f32 %v889, %v1106
    %v1137 = vadd.f32 %v890, %v1111
    %v1138 = vadd.f32 %v891, %v1116
    %v1139 = vadd.f32 %v892, %v1121
    %v1140 = vadd.f32 %v893, %v1126
    %v1141 = vadd.f32 %v894, %v1131
    %vm1142 = vcmp.ge.f32.partialorder %v1134, 0.0
    %vm1143 = vcmp.ge.f32.partialorder %v1135, 0.0
    %vm1144 = vcmp.ge.f32.partialorder %v1136, 0.0
    %vm1145 = vcmp.ge.f32.partialorder %v1137, 0.0
    %vm1146 = vcmp.ge.f32.partialorder %v1138, 0.0
    %vm1147 = vcmp.ge.f32.partialorder %v1139, 0.0
    %vm1148 = vcmp.ge.f32.partialorder %v1140, 0.0
    %vm1149 = vcmp.ge.f32.partialorder %v1141, 0.0
    %v1150 = vmul.f32 %v1134, 0.2
    %v1151 = vmul.f32 %v1135, 0.2
    %v1152 = vmul.f32 %v1136, 0.2
    %v1153 = vmul.f32 %v1137, 0.2
    %v1154 = vmul.f32 %v1138, 0.2
    %v1155 = vmul.f32 %v1139, 0.2
    %v1156 = vmul.f32 %v1140, 0.2
    %v1157 = vmul.f32 %v1141, 0.2
    %v1158 = vsel %vm1142, %v1134, %v1150
    %v1159 = vsel %vm1143, %v1135, %v1151
    %v1160 = vsel %vm1144, %v1136, %v1152
    %v1161 = vsel %vm1145, %v1137, %v1153
    %v1162 = vsel %vm1146, %v1138, %v1154
    %v1163 = vsel %vm1147, %v1139, %v1155
    %v1164 = vsel %vm1148, %v1140, %v1156
    %v1165 = vsel %vm1149, %v1141, %v1157
    %v1166 = vld [vmem:[%s3] sm:$0xff]
    %v1167 = vld [vmem:[%s3 + $0x8] sm:$0xff]
    %v1168 = vld [vmem:[%s3 + $0x10] sm:$0xff]
    %v1169 = vld [vmem:[%s3 + $0x18] sm:$0xff]
    %vm1170 = vcmask 523264
    %v1172 = vsel %vm1170, %v1166, 0
    %v1175 = vsel %vm1170, %v1167, 0
    %v1178 = vsel %vm1170, %v1168, 0
    %v1181 = vsel %vm1170, %v1169, 0
    %1183 = vmatprep.subr.mxu0 0.0
    %1184 = vmatpush1.msra.mxu0 %v1158
    %1185 = vmatprep.subr.mxu0 0.0
    %1186 = vmatpush1.msra.mxu0 %v1159
    %1187 = vmatprep.subr.mxu0 0.0
    %1188 = vmatpush1.msra.mxu0 %v1160
    %1189 = vmatprep.subr.mxu0 0.0
    %1190 = vmatpush1.msra.mxu0 %v1161
    %1191 = vmatprep.subr.mxu0 0.0
    %1192 = vmatpush1.msra.mxu0 %v1162
    %1193 = vmatprep.subr.mxu0 0.0
    %1194 = vmatpush1.msra.mxu0 %v1163
    %1195 = vmatprep.subr.mxu0 0.0
    %1196 = vmatpush1.msra.mxu0 %v1164
    %1197 = vmatprep.subr.mxu0 0.0
    %1198 = vmatpush1.msra.mxu0 %v1165
    %1199 = vmatprep.subr.mxu0 0.0
    %1200 = vmatpush1.msra.mxu0 0.0
    %1201 = vmatprep.subr.mxu0 0.0
    %1202 = vmatpush1.msra.mxu0 0.0
    %1203 = vmatprep.subr.mxu0 0.0
    %1204 = vmatpush1.msra.mxu0 0.0
    %1205 = vmatprep.subr.mxu0 0.0
    %1206 = vmatpush1.msra.mxu0 0.0
    %1207 = vmatprep.subr.mxu0 0.0
    %1208 = vmatpush1.msra.mxu0 0.0
    %1209 = vmatprep.subr.mxu0 0.0
    %1210 = vmatpush1.msra.mxu0 0.0
    %1211 = vmatprep.subr.mxu0 0.0
    %1212 = vmatpush1.msra.mxu0 0.0
    %1213 = vmatprep.subr.mxu0 0.0
    %1214 = vmatpush1.msra.mxu0 0.0
    %1215 = vmatprep.subr.mxu0 0.0
    %1216 = vmatpush1.msra.mxu0 0.0
    %1217 = vmatprep.subr.mxu0 0.0
    %1218 = vmatpush1.msra.mxu0 0.0
    %1219 = vmatprep.subr.mxu0 0.0
    %1220 = vmatpush1.msra.mxu0 0.0
    %1221 = vmatprep.subr.mxu0 0.0
    %1222 = vmatpush1.msra.mxu0 0.0
    %1223 = vmatprep.subr.mxu0 0.0
    %1224 = vmatpush1.msra.mxu0 0.0
    %1225 = vmatprep.subr.mxu0 0.0
    %1226 = vmatpush1.msra.mxu0 0.0
    %1227 = vmatprep.subr.mxu0 0.0
    %1228 = vmatpush1.msra.mxu0 0.0
    %1229 = vmatprep.subr.mxu0 0.0
    %1230 = vmatpush1.msra.mxu0 0.0
    %1231 = vmatprep.subr.mxu0 0.0
    %1232 = vmatpush1.msra.mxu0 0.0
    %1233 = vmatprep.subr.mxu0 0.0
    %1234 = vmatpush1.msra.mxu0 0.0
    %1235 = vmatprep.subr.mxu0 0.0
    %1236 = vmatpush1.msra.mxu0 0.0
    %1237 = vmatprep.subr.mxu0 0.0
    %1238 = vmatpush1.msra.mxu0 0.0
    %1239 = vmatprep.subr.mxu0 0.0
    %1240 = vmatpush1.msra.mxu0 0.0
    %1241 = vmatprep.subr.mxu0 0.0
    %1242 = vmatpush1.msra.mxu0 0.0
    %1243 = vmatprep.subr.mxu0 0.0
    %1244 = vmatpush1.msra.mxu0 0.0
    %1245 = vmatprep.subr.mxu0 0.0
    %1246 = vmatpush1.msra.mxu0 0.0
    %1247 = vmatprep.mubr.f32.mxu0 0.0
    %1248 = vmatmul.mubr.f32.gmra.mrb[0].mxu0 %v1172
    %v1249 = vpop.f32.mrb[0].mxu0
    %v1250 = vadd.f32 0.0, %v1249
    %v1251 = vpop.f32.mrb[0].mxu0
    %1252 = vmatprep.mubr.f32.mxu0 0.0
    %1253 = vmatmul.mubr.f32.gmra.mrb[0].mxu0 %v1175
    %v1254 = vpop.f32.mrb[0].mxu0
    %v1255 = vadd.f32 0.0, %v1254
    %v1256 = vpop.f32.mrb[0].mxu0
    %1257 = vmatprep.mubr.f32.mxu0 0.0
    %1258 = vmatmul.mubr.f32.gmra.mrb[0].mxu0 %v1178
    %v1259 = vpop.f32.mrb[0].mxu0
    %v1260 = vadd.f32 0.0, %v1259
    %v1261 = vpop.f32.mrb[0].mxu0
    %1262 = vmatprep.mubr.f32.mxu0 0.0
    %1263 = vmatmul.mubr.f32.gmra.mrb[0].mxu0 %v1181
    %v1264 = vpop.f32.mrb[0].mxu0
    %v1265 = vadd.f32 0.0, %v1264
    %v1266 = vpop.f32.mrb[0].mxu0
    %1267 = vdwg.mxu0
    %v1268 = vld [vmem:[%s4] sm:$0xff]
    %v1269 = vld [vmem:[%s4 + $0x8] sm:$0xff]
    %s1270 = scalar_lea.vmem %s3, 32
    %v1271 = vld [vmem:[%s1270] sm:$0xff]
    %v1272 = vld [vmem:[%s1270 + $0x8] sm:$0xff]
    %v1273 = vld [vmem:[%s1270 + $0x10] sm:$0xff]
    %v1274 = vld [vmem:[%s1270 + $0x18] sm:$0xff]
    %v1276 = vsel %vm1170, %v1271, 0
    %v1279 = vsel %vm1170, %v1272, 0
    %v1282 = vsel %vm1170, %v1273, 0
    %v1285 = vsel %vm1170, %v1274, 0
    %1287 = vmatprep.subr.mxu0 0.0
    %1288 = vmatpush1.msra.mxu0 %v1158
    %1289 = vmatprep.subr.mxu0 0.0
    %1290 = vmatpush1.msra.mxu0 %v1159
    %1291 = vmatprep.subr.mxu0 0.0
    %1292 = vmatpush1.msra.mxu0 %v1160
    %1293 = vmatprep.subr.mxu0 0.0
    %1294 = vmatpush1.msra.mxu0 %v1161
    %1295 = vmatprep.subr.mxu0 0.0
    %1296 = vmatpush1.msra.mxu0 %v1162
    %1297 = vmatprep.subr.mxu0 0.0
    %1298 = vmatpush1.msra.mxu0 %v1163
    %1299 = vmatprep.subr.mxu0 0.0
    %1300 = vmatpush1.msra.mxu0 %v1164
    %1301 = vmatprep.subr.mxu0 0.0
    %1302 = vmatpush1.msra.mxu0 %v1165
    %1303 = vmatprep.subr.mxu0 0.0
    %1304 = vmatpush1.msra.mxu0 0.0
    %1305 = vmatprep.subr.mxu0 0.0
    %1306 = vmatpush1.msra.mxu0 0.0
    %1307 = vmatprep.subr.mxu0 0.0
    %1308 = vmatpush1.msra.mxu0 0.0
    %1309 = vmatprep.subr.mxu0 0.0
    %1310 = vmatpush1.msra.mxu0 0.0
    %1311 = vmatprep.subr.mxu0 0.0
    %1312 = vmatpush1.msra.mxu0 0.0
    %1313 = vmatprep.subr.mxu0 0.0
    %1314 = vmatpush1.msra.mxu0 0.0
    %1315 = vmatprep.subr.mxu0 0.0
    %1316 = vmatpush1.msra.mxu0 0.0
    %1317 = vmatprep.subr.mxu0 0.0
    %1318 = vmatpush1.msra.mxu0 0.0
    %1319 = vmatprep.subr.mxu0 0.0
    %1320 = vmatpush1.msra.mxu0 0.0
    %1321 = vmatprep.subr.mxu0 0.0
    %1322 = vmatpush1.msra.mxu0 0.0
    %1323 = vmatprep.subr.mxu0 0.0
    %1324 = vmatpush1.msra.mxu0 0.0
    %1325 = vmatprep.subr.mxu0 0.0
    %1326 = vmatpush1.msra.mxu0 0.0
    %1327 = vmatprep.subr.mxu0 0.0
    %1328 = vmatpush1.msra.mxu0 0.0
    %1329 = vmatprep.subr.mxu0 0.0
    %1330 = vmatpush1.msra.mxu0 0.0
    %1331 = vmatprep.subr.mxu0 0.0
    %1332 = vmatpush1.msra.mxu0 0.0
    %1333 = vmatprep.subr.mxu0 0.0
    %1334 = vmatpush1.msra.mxu0 0.0
    %1335 = vmatprep.subr.mxu0 0.0
    %1336 = vmatpush1.msra.mxu0 0.0
    %1337 = vmatprep.subr.mxu0 0.0
    %1338 = vmatpush1.msra.mxu0 0.0
    %1339 = vmatprep.subr.mxu0 0.0
    %1340 = vmatpush1.msra.mxu0 0.0
    %1341 = vmatprep.subr.mxu0 0.0
    %1342 = vmatpush1.msra.mxu0 0.0
    %1343 = vmatprep.subr.mxu0 0.0
    %1344 = vmatpush1.msra.mxu0 0.0
    %1345 = vmatprep.subr.mxu0 0.0
    %1346 = vmatpush1.msra.mxu0 0.0
    %1347 = vmatprep.subr.mxu0 0.0
    %1348 = vmatpush1.msra.mxu0 0.0
    %1349 = vmatprep.subr.mxu0 0.0
    %1350 = vmatpush1.msra.mxu0 0.0
    %1351 = vmatprep.mubr.f32.mxu0 0.0
    %1352 = vmatmul.mubr.f32.gmra.mrb[0].mxu0 %v1276
    %v1353 = vpop.f32.mrb[0].mxu0
    %v1354 = vadd.f32 0.0, %v1353
    %v1355 = vpop.f32.mrb[0].mxu0
    %1356 = vmatprep.mubr.f32.mxu0 0.0
    %1357 = vmatmul.mubr.f32.gmra.mrb[0].mxu0 %v1279
    %v1358 = vpop.f32.mrb[0].mxu0
    %v1359 = vadd.f32 0.0, %v1358
    %v1360 = vpop.f32.mrb[0].mxu0
    %1361 = vmatprep.mubr.f32.mxu0 0.0
    %1362 = vmatmul.mubr.f32.gmra.mrb[0].mxu0 %v1282
    %v1363 = vpop.f32.mrb[0].mxu0
    %v1364 = vadd.f32 0.0, %v1363
    %v1365 = vpop.f32.mrb[0].mxu0
    %1366 = vmatprep.mubr.f32.mxu0 0.0
    %1367 = vmatmul.mubr.f32.gmra.mrb[0].mxu0 %v1285
    %v1368 = vpop.f32.mrb[0].mxu0
    %v1369 = vadd.f32 0.0, %v1368
    %v1370 = vpop.f32.mrb[0].mxu0
    %1371 = vdwg.mxu0
    %s1372 = scalar_lea.vmem %s4, 16
    %v1373 = vld [vmem:[%s1372] sm:$0xff]
    %v1374 = vld [vmem:[%s1372 + $0x8] sm:$0xff]
    %vm1375 = vcmask 130048
    %v1377 = vsel %vm1375, %v1354, 0
    %v1380 = vsel %vm1375, %v1359, 0
    %v1383 = vsel %vm1375, %v1364, 0
    %v1386 = vsel %vm1375, %v1369, 0
    %1388 = vmatprep.subr.mxu0 0.0
    %1389 = vmatpush1.msra.mxu0 %v1373
    %1390 = vmatprep.subr.mxu0 0.0
    %1391 = vmatpush1.msra.mxu0 %v1374
    %1392 = vmatprep.subr.mxu0 0.0
    %1393 = vmatpush1.msra.mxu0 0.0
    %1394 = vmatprep.subr.mxu0 0.0
    %1395 = vmatpush1.msra.mxu0 0.0
    %1396 = vmatprep.subr.mxu0 0.0
    %1397 = vmatpush1.msra.mxu0 0.0
    %1398 = vmatprep.subr.mxu0 0.0
    %1399 = vmatpush1.msra.mxu0 0.0
    %1400 = vmatprep.subr.mxu0 0.0
    %1401 = vmatpush1.msra.mxu0 0.0
    %1402 = vmatprep.subr.mxu0 0.0
    %1403 = vmatpush1.msra.mxu0 0.0
    %1404 = vmatprep.subr.mxu0 0.0
    %1405 = vmatpush1.msra.mxu0 0.0
    %1406 = vmatprep.subr.mxu0 0.0
    %1407 = vmatpush1.msra.mxu0 0.0
    %1408 = vmatprep.subr.mxu0 0.0
    %1409 = vmatpush1.msra.mxu0 0.0
    %1410 = vmatprep.subr.mxu0 0.0
    %1411 = vmatpush1.msra.mxu0 0.0
    %1412 = vmatprep.subr.mxu0 0.0
    %1413 = vmatpush1.msra.mxu0 0.0
    %1414 = vmatprep.subr.mxu0 0.0
    %1415 = vmatpush1.msra.mxu0 0.0
    %1416 = vmatprep.subr.mxu0 0.0
    %1417 = vmatpush1.msra.mxu0 0.0
    %1418 = vmatprep.subr.mxu0 0.0
    %1419 = vmatpush1.msra.mxu0 0.0
    %1420 = vmatprep.subr.mxu0 0.0
    %1421 = vmatpush1.msra.mxu0 0.0
    %1422 = vmatprep.subr.mxu0 0.0
    %1423 = vmatpush1.msra.mxu0 0.0
    %1424 = vmatprep.subr.mxu0 0.0
    %1425 = vmatpush1.msra.mxu0 0.0
    %1426 = vmatprep.subr.mxu0 0.0
    %1427 = vmatpush1.msra.mxu0 0.0
    %1428 = vmatprep.subr.mxu0 0.0
    %1429 = vmatpush1.msra.mxu0 0.0
    %1430 = vmatprep.subr.mxu0 0.0
    %1431 = vmatpush1.msra.mxu0 0.0
    %1432 = vmatprep.subr.mxu0 0.0
    %1433 = vmatpush1.msra.mxu0 0.0
    %1434 = vmatprep.subr.mxu0 0.0
    %1435 = vmatpush1.msra.mxu0 0.0
    %1436 = vmatprep.subr.mxu0 0.0
    %1437 = vmatpush1.msra.mxu0 0.0
    %1438 = vmatprep.subr.mxu0 0.0
    %1439 = vmatpush1.msra.mxu0 0.0
    %1440 = vmatprep.subr.mxu0 0.0
    %1441 = vmatpush1.msra.mxu0 0.0
    %1442 = vmatprep.subr.mxu0 0.0
    %1443 = vmatpush1.msra.mxu0 0.0
    %1444 = vmatprep.subr.mxu0 0.0
    %1445 = vmatpush1.msra.mxu0 0.0
    %1446 = vmatprep.subr.mxu0 0.0
    %1447 = vmatpush1.msra.mxu0 0.0
    %1448 = vmatprep.subr.mxu0 0.0
    %1449 = vmatpush1.msra.mxu0 0.0
    %1450 = vmatprep.subr.mxu0 0.0
    %1451 = vmatpush1.msra.mxu0 0.0
    %1452 = vmatprep.mubr.f32.mxu0 0.0
    %1453 = vmatmul.mubr.f32.gmra.mrb[0].mxu0 %v1377
    %v1454 = vpop.f32.mrb[0].mxu0
    %v1455 = vadd.f32 0.0, %v1454
    %v1456 = vpop.f32.mrb[0].mxu0
    %1457 = vmatprep.mubr.f32.mxu0 0.0
    %1458 = vmatmul.mubr.f32.gmra.mrb[0].mxu0 %v1380
    %v1459 = vpop.f32.mrb[0].mxu0
    %v1460 = vadd.f32 0.0, %v1459
    %v1461 = vpop.f32.mrb[0].mxu0
    %1462 = vmatprep.mubr.f32.mxu0 0.0
    %1463 = vmatmul.mubr.f32.gmra.mrb[0].mxu0 %v1383
    %v1464 = vpop.f32.mrb[0].mxu0
    %v1465 = vadd.f32 0.0, %v1464
    %v1466 = vpop.f32.mrb[0].mxu0
    %1467 = vmatprep.mubr.f32.mxu0 0.0
    %1468 = vmatmul.mubr.f32.gmra.mrb[0].mxu0 %v1386
    %v1469 = vpop.f32.mrb[0].mxu0
    %v1470 = vadd.f32 0.0, %v1469
    %v1471 = vpop.f32.mrb[0].mxu0
    %1472 = vdwg.mxu0
    %v1474 = vsel %vm1375, %v1250, 0
    %v1477 = vsel %vm1375, %v1255, 0
    %v1480 = vsel %vm1375, %v1260, 0
    %v1483 = vsel %vm1375, %v1265, 0
    %1485 = vmatprep.subr.mxu0 0.0
    %1486 = vmatpush1.msra.mxu0 %v1268
    %1487 = vmatprep.subr.mxu0 0.0
    %1488 = vmatpush1.msra.mxu0 %v1269
    %1489 = vmatprep.subr.mxu0 0.0
    %1490 = vmatpush1.msra.mxu0 0.0
    %1491 = vmatprep.subr.mxu0 0.0
    %1492 = vmatpush1.msra.mxu0 0.0
    %1493 = vmatprep.subr.mxu0 0.0
    %1494 = vmatpush1.msra.mxu0 0.0
    %1495 = vmatprep.subr.mxu0 0.0
    %1496 = vmatpush1.msra.mxu0 0.0
    %1497 = vmatprep.subr.mxu0 0.0
    %1498 = vmatpush1.msra.mxu0 0.0
    %1499 = vmatprep.subr.mxu0 0.0
    %1500 = vmatpush1.msra.mxu0 0.0
    %1501 = vmatprep.subr.mxu0 0.0
    %1502 = vmatpush1.msra.mxu0 0.0
    %1503 = vmatprep.subr.mxu0 0.0
    %1504 = vmatpush1.msra.mxu0 0.0
    %1505 = vmatprep.subr.mxu0 0.0
    %1506 = vmatpush1.msra.mxu0 0.0
    %1507 = vmatprep.subr.mxu0 0.0
    %1508 = vmatpush1.msra.mxu0 0.0
    %1509 = vmatprep.subr.mxu0 0.0
    %1510 = vmatpush1.msra.mxu0 0.0
    %1511 = vmatprep.subr.mxu0 0.0
    %1512 = vmatpush1.msra.mxu0 0.0
    %1513 = vmatprep.subr.mxu0 0.0
    %1514 = vmatpush1.msra.mxu0 0.0
    %1515 = vmatprep.subr.mxu0 0.0
    %1516 = vmatpush1.msra.mxu0 0.0
    %1517 = vmatprep.subr.mxu0 0.0
    %1518 = vmatpush1.msra.mxu0 0.0
    %1519 = vmatprep.subr.mxu0 0.0
    %1520 = vmatpush1.msra.mxu0 0.0
    %1521 = vmatprep.subr.mxu0 0.0
    %1522 = vmatpush1.msra.mxu0 0.0
    %1523 = vmatprep.subr.mxu0 0.0
    %1524 = vmatpush1.msra.mxu0 0.0
    %1525 = vmatprep.subr.mxu0 0.0
    %1526 = vmatpush1.msra.mxu0 0.0
    %1527 = vmatprep.subr.mxu0 0.0
    %1528 = vmatpush1.msra.mxu0 0.0
    %1529 = vmatprep.subr.mxu0 0.0
    %1530 = vmatpush1.msra.mxu0 0.0
    %1531 = vmatprep.subr.mxu0 0.0
    %1532 = vmatpush1.msra.mxu0 0.0
    %1533 = vmatprep.subr.mxu0 0.0
    %1534 = vmatpush1.msra.mxu0 0.0
    %1535 = vmatprep.subr.mxu0 0.0
    %1536 = vmatpush1.msra.mxu0 0.0
    %1537 = vmatprep.subr.mxu0 0.0
    %1538 = vmatpush1.msra.mxu0 0.0
    %1539 = vmatprep.subr.mxu0 0.0
    %1540 = vmatpush1.msra.mxu0 0.0
    %1541 = vmatprep.subr.mxu0 0.0
    %1542 = vmatpush1.msra.mxu0 0.0
    %1543 = vmatprep.subr.mxu0 0.0
    %1544 = vmatpush1.msra.mxu0 0.0
    %1545 = vmatprep.subr.mxu0 0.0
    %1546 = vmatpush1.msra.mxu0 0.0
    %1547 = vmatprep.subr.mxu0 0.0
    %1548 = vmatpush1.msra.mxu0 0.0
    %1549 = vmatprep.mubr.f32.mxu0 0.0
    %1550 = vmatmul.mubr.f32.gmra.mrb[0].mxu0 %v1474
    %v1551 = vpop.f32.mrb[0].mxu0
    %v1552 = vadd.f32 %v1455, %v1551
    %v1553 = vpop.f32.mrb[0].mxu0
    %1554 = vmatprep.mubr.f32.mxu0 0.0
    %1555 = vmatmul.mubr.f32.gmra.mrb[0].mxu0 %v1477
    %v1556 = vpop.f32.mrb[0].mxu0
    %v1557 = vadd.f32 %v1460, %v1556
    %v1558 = vpop.f32.mrb[0].mxu0
    %1559 = vmatprep.mubr.f32.mxu0 0.0
    %1560 = vmatmul.mubr.f32.gmra.mrb[0].mxu0 %v1480
    %v1561 = vpop.f32.mrb[0].mxu0
    %v1562 = vadd.f32 %v1465, %v1561
    %v1563 = vpop.f32.mrb[0].mxu0
    %1564 = vmatprep.mubr.f32.mxu0 0.0
    %1565 = vmatmul.mubr.f32.gmra.mrb[0].mxu0 %v1483
    %v1566 = vpop.f32.mrb[0].mxu0
    %v1567 = vadd.f32 %v1470, %v1566
    %v1568 = vpop.f32.mrb[0].mxu0
    %1569 = vdwg.mxu0
    %s1570 = scalar_lea.vmem %s3, 64
    %v1571 = vld [vmem:[%s1570] sm:$0xff]
    %v1572 = vld [vmem:[%s1570 + $0x8] sm:$0xff]
    %v1573 = vld [vmem:[%s1570 + $0x10] sm:$0xff]
    %v1574 = vld [vmem:[%s1570 + $0x18] sm:$0xff]
    %v1576 = vsel %vm1170, %v1571, 0
    %v1579 = vsel %vm1170, %v1572, 0
    %v1582 = vsel %vm1170, %v1573, 0
    %v1585 = vsel %vm1170, %v1574, 0
    %1587 = vmatprep.subr.mxu0 0.0
    %1588 = vmatpush1.msra.mxu0 %v1158
    %1589 = vmatprep.subr.mxu0 0.0
    %1590 = vmatpush1.msra.mxu0 %v1159
    %1591 = vmatprep.subr.mxu0 0.0
    %1592 = vmatpush1.msra.mxu0 %v1160
    %1593 = vmatprep.subr.mxu0 0.0
    %1594 = vmatpush1.msra.mxu0 %v1161
    %1595 = vmatprep.subr.mxu0 0.0
    %1596 = vmatpush1.msra.mxu0 %v1162
    %1597 = vmatprep.subr.mxu0 0.0
    %1598 = vmatpush1.msra.mxu0 %v1163
    %1599 = vmatprep.subr.mxu0 0.0
    %1600 = vmatpush1.msra.mxu0 %v1164
    %1601 = vmatprep.subr.mxu0 0.0
    %1602 = vmatpush1.msra.mxu0 %v1165
    %1603 = vmatprep.subr.mxu0 0.0
    %1604 = vmatpush1.msra.mxu0 0.0
    %1605 = vmatprep.subr.mxu0 0.0
    %1606 = vmatpush1.msra.mxu0 0.0
    %1607 = vmatprep.subr.mxu0 0.0
    %1608 = vmatpush1.msra.mxu0 0.0
    %1609 = vmatprep.subr.mxu0 0.0
    %1610 = vmatpush1.msra.mxu0 0.0
    %1611 = vmatprep.subr.mxu0 0.0
    %1612 = vmatpush1.msra.mxu0 0.0
    %1613 = vmatprep.subr.mxu0 0.0
    %1614 = vmatpush1.msra.mxu0 0.0
    %1615 = vmatprep.subr.mxu0 0.0
    %1616 = vmatpush1.msra.mxu0 0.0
    %1617 = vmatprep.subr.mxu0 0.0
    %1618 = vmatpush1.msra.mxu0 0.0
    %1619 = vmatprep.subr.mxu0 0.0
    %1620 = vmatpush1.msra.mxu0 0.0
    %1621 = vmatprep.subr.mxu0 0.0
    %1622 = vmatpush1.msra.mxu0 0.0
    %1623 = vmatprep.subr.mxu0 0.0
    %1624 = vmatpush1.msra.mxu0 0.0
    %1625 = vmatprep.subr.mxu0 0.0
    %1626 = vmatpush1.msra.mxu0 0.0
    %1627 = vmatprep.subr.mxu0 0.0
    %1628 = vmatpush1.msra.mxu0 0.0
    %1629 = vmatprep.subr.mxu0 0.0
    %1630 = vmatpush1.msra.mxu0 0.0
    %1631 = vmatprep.subr.mxu0 0.0
    %1632 = vmatpush1.msra.mxu0 0.0
    %1633 = vmatprep.subr.mxu0 0.0
    %1634 = vmatpush1.msra.mxu0 0.0
    %1635 = vmatprep.subr.mxu0 0.0
    %1636 = vmatpush1.msra.mxu0 0.0
    %1637 = vmatprep.subr.mxu0 0.0
    %1638 = vmatpush1.msra.mxu0 0.0
    %1639 = vmatprep.subr.mxu0 0.0
    %1640 = vmatpush1.msra.mxu0 0.0
    %1641 = vmatprep.subr.mxu0 0.0
    %1642 = vmatpush1.msra.mxu0 0.0
    %1643 = vmatprep.subr.mxu0 0.0
    %1644 = vmatpush1.msra.mxu0 0.0
    %1645 = vmatprep.subr.mxu0 0.0
    %1646 = vmatpush1.msra.mxu0 0.0
    %1647 = vmatprep.subr.mxu0 0.0
    %1648 = vmatpush1.msra.mxu0 0.0
    %1649 = vmatprep.subr.mxu0 0.0
    %1650 = vmatpush1.msra.mxu0 0.0
    %1651 = vmatprep.mubr.f32.mxu0 0.0
    %1652 = vmatmul.mubr.f32.gmra.mrb[0].mxu0 %v1576
    %v1653 = vpop.f32.mrb[0].mxu0
    %v1654 = vadd.f32 0.0, %v1653
    %v1655 = vpop.f32.mrb[0].mxu0
    %1656 = vmatprep.mubr.f32.mxu0 0.0
    %1657 = vmatmul.mubr.f32.gmra.mrb[0].mxu0 %v1579
    %v1658 = vpop.f32.mrb[0].mxu0
    %v1659 = vadd.f32 0.0, %v1658
    %v1660 = vpop.f32.mrb[0].mxu0
    %1661 = vmatprep.mubr.f32.mxu0 0.0
    %1662 = vmatmul.mubr.f32.gmra.mrb[0].mxu0 %v1582
    %v1663 = vpop.f32.mrb[0].mxu0
    %v1664 = vadd.f32 0.0, %v1663
    %v1665 = vpop.f32.mrb[0].mxu0
    %1666 = vmatprep.mubr.f32.mxu0 0.0
    %1667 = vmatmul.mubr.f32.gmra.mrb[0].mxu0 %v1585
    %v1668 = vpop.f32.mrb[0].mxu0
    %v1669 = vadd.f32 0.0, %v1668
    %v1670 = vpop.f32.mrb[0].mxu0
    %1671 = vdwg.mxu0
    %s1672 = scalar_lea.vmem %s4, 32
    %v1673 = vld [vmem:[%s1672] sm:$0xff]
    %v1674 = vld [vmem:[%s1672 + $0x8] sm:$0xff]
    %v1676 = vsel %vm1375, %v1654, 0
    %v1679 = vsel %vm1375, %v1659, 0
    %v1682 = vsel %vm1375, %v1664, 0
    %v1685 = vsel %vm1375, %v1669, 0
    %1687 = vmatprep.subr.mxu0 0.0
    %1688 = vmatpush1.msra.mxu0 %v1673
    %1689 = vmatprep.subr.mxu0 0.0
    %1690 = vmatpush1.msra.mxu0 %v1674
    %1691 = vmatprep.subr.mxu0 0.0
    %1692 = vmatpush1.msra.mxu0 0.0
    %1693 = vmatprep.subr.mxu0 0.0
    %1694 = vmatpush1.msra.mxu0 0.0
    %1695 = vmatprep.subr.mxu0 0.0
    %1696 = vmatpush1.msra.mxu0 0.0
    %1697 = vmatprep.subr.mxu0 0.0
    %1698 = vmatpush1.msra.mxu0 0.0
    %1699 = vmatprep.subr.mxu0 0.0
    %1700 = vmatpush1.msra.mxu0 0.0
    %1701 = vmatprep.subr.mxu0 0.0
    %1702 = vmatpush1.msra.mxu0 0.0
    %1703 = vmatprep.subr.mxu0 0.0
    %1704 = vmatpush1.msra.mxu0 0.0
    %1705 = vmatprep.subr.mxu0 0.0
    %1706 = vmatpush1.msra.mxu0 0.0
    %1707 = vmatprep.subr.mxu0 0.0
    %1708 = vmatpush1.msra.mxu0 0.0
    %1709 = vmatprep.subr.mxu0 0.0
    %1710 = vmatpush1.msra.mxu0 0.0
    %1711 = vmatprep.subr.mxu0 0.0
    %1712 = vmatpush1.msra.mxu0 0.0
    %1713 = vmatprep.subr.mxu0 0.0
    %1714 = vmatpush1.msra.mxu0 0.0
    %1715 = vmatprep.subr.mxu0 0.0
    %1716 = vmatpush1.msra.mxu0 0.0
    %1717 = vmatprep.subr.mxu0 0.0
    %1718 = vmatpush1.msra.mxu0 0.0
    %1719 = vmatprep.subr.mxu0 0.0
    %1720 = vmatpush1.msra.mxu0 0.0
    %1721 = vmatprep.subr.mxu0 0.0
    %1722 = vmatpush1.msra.mxu0 0.0
    %1723 = vmatprep.subr.mxu0 0.0
    %1724 = vmatpush1.msra.mxu0 0.0
    %1725 = vmatprep.subr.mxu0 0.0
    %1726 = vmatpush1.msra.mxu0 0.0
    %1727 = vmatprep.subr.mxu0 0.0
    %1728 = vmatpush1.msra.mxu0 0.0
    %1729 = vmatprep.subr.mxu0 0.0
    %1730 = vmatpush1.msra.mxu0 0.0
    %1731 = vmatprep.subr.mxu0 0.0
    %1732 = vmatpush1.msra.mxu0 0.0
    %1733 = vmatprep.subr.mxu0 0.0
    %1734 = vmatpush1.msra.mxu0 0.0
    %1735 = vmatprep.subr.mxu0 0.0
    %1736 = vmatpush1.msra.mxu0 0.0
    %1737 = vmatprep.subr.mxu0 0.0
    %1738 = vmatpush1.msra.mxu0 0.0
    %1739 = vmatprep.subr.mxu0 0.0
    %1740 = vmatpush1.msra.mxu0 0.0
    %1741 = vmatprep.subr.mxu0 0.0
    %1742 = vmatpush1.msra.mxu0 0.0
    %1743 = vmatprep.subr.mxu0 0.0
    %1744 = vmatpush1.msra.mxu0 0.0
    %1745 = vmatprep.subr.mxu0 0.0
    %1746 = vmatpush1.msra.mxu0 0.0
    %1747 = vmatprep.subr.mxu0 0.0
    %1748 = vmatpush1.msra.mxu0 0.0
    %1749 = vmatprep.subr.mxu0 0.0
    %1750 = vmatpush1.msra.mxu0 0.0
    %1751 = vmatprep.mubr.f32.mxu0 0.0
    %1752 = vmatmul.mubr.f32.gmra.mrb[0].mxu0 %v1676
    %v1753 = vpop.f32.mrb[0].mxu0
    %v1754 = vadd.f32 0.0, %v1753
    %v1755 = vpop.f32.mrb[0].mxu0
    %1756 = vmatprep.mubr.f32.mxu0 0.0
    %1757 = vmatmul.mubr.f32.gmra.mrb[0].mxu0 %v1679
    %v1758 = vpop.f32.mrb[0].mxu0
    %v1759 = vadd.f32 0.0, %v1758
    %v1760 = vpop.f32.mrb[0].mxu0
    %1761 = vmatprep.mubr.f32.mxu0 0.0
    %1762 = vmatmul.mubr.f32.gmra.mrb[0].mxu0 %v1682
    %v1763 = vpop.f32.mrb[0].mxu0
    %v1764 = vadd.f32 0.0, %v1763
    %v1765 = vpop.f32.mrb[0].mxu0
    %1766 = vmatprep.mubr.f32.mxu0 0.0
    %1767 = vmatmul.mubr.f32.gmra.mrb[0].mxu0 %v1685
    %v1768 = vpop.f32.mrb[0].mxu0
    %v1769 = vadd.f32 0.0, %v1768
    %v1770 = vpop.f32.mrb[0].mxu0
    %1771 = vdwg.mxu0
    %v1772 = vadd.f32 %v1552, %v1754
    %v1773 = vadd.f32 %v1557, %v1759
    %v1774 = vadd.f32 %v1562, %v1764
    %v1775 = vadd.f32 %v1567, %v1769
    %vm1776 = vcmp.ge.f32.partialorder %v1772, 0.0
    %vm1777 = vcmp.ge.f32.partialorder %v1773, 0.0
    %vm1778 = vcmp.ge.f32.partialorder %v1774, 0.0
    %vm1779 = vcmp.ge.f32.partialorder %v1775, 0.0
    %v1780 = vmul.f32 %v1772, 0.2
    %v1781 = vmul.f32 %v1773, 0.2
    %v1782 = vmul.f32 %v1774, 0.2
    %v1783 = vmul.f32 %v1775, 0.2
    %v1784 = vsel %vm1776, %v1772, %v1780
    %v1785 = vsel %vm1777, %v1773, %v1781
    %v1786 = vsel %vm1778, %v1774, %v1782
    %v1787 = vsel %vm1779, %v1775, %v1783
    %v1788 = vld [vmem:[#allocation2] sm:$0xff]
    %v1789 = vld [vmem:[#allocation2 + $0x8] sm:$0xff]
    %v1791 = vsel %vm106, %v1788, 0
    %v1794 = vsel %vm106, %v1789, 0
    %1796 = vmatprep.subr.mxu0 0.0
    %1797 = vmatpush1.msra.mxu0 %v1784
    %1798 = vmatprep.subr.mxu0 0.0
    %1799 = vmatpush1.msra.mxu0 %v1785
    %1800 = vmatprep.subr.mxu0 0.0
    %1801 = vmatpush1.msra.mxu0 %v1786
    %1802 = vmatprep.subr.mxu0 0.0
    %1803 = vmatpush1.msra.mxu0 %v1787
    %1804 = vmatprep.subr.mxu0 0.0
    %1805 = vmatpush1.msra.mxu0 0.0
    %1806 = vmatprep.subr.mxu0 0.0
    %1807 = vmatpush1.msra.mxu0 0.0
    %1808 = vmatprep.subr.mxu0 0.0
    %1809 = vmatpush1.msra.mxu0 0.0
    %1810 = vmatprep.subr.mxu0 0.0
    %1811 = vmatpush1.msra.mxu0 0.0
    %1812 = vmatprep.subr.mxu0 0.0
    %1813 = vmatpush1.msra.mxu0 0.0
    %1814 = vmatprep.subr.mxu0 0.0
    %1815 = vmatpush1.msra.mxu0 0.0
    %1816 = vmatprep.subr.mxu0 0.0
    %1817 = vmatpush1.msra.mxu0 0.0
    %1818 = vmatprep.subr.mxu0 0.0
    %1819 = vmatpush1.msra.mxu0 0.0
    %1820 = vmatprep.subr.mxu0 0.0
    %1821 = vmatpush1.msra.mxu0 0.0
    %1822 = vmatprep.subr.mxu0 0.0
    %1823 = vmatpush1.msra.mxu0 0.0
    %1824 = vmatprep.subr.mxu0 0.0
    %1825 = vmatpush1.msra.mxu0 0.0
    %1826 = vmatprep.subr.mxu0 0.0
    %1827 = vmatpush1.msra.mxu0 0.0
    %1828 = vmatprep.subr.mxu0 0.0
    %1829 = vmatpush1.msra.mxu0 0.0
    %1830 = vmatprep.subr.mxu0 0.0
    %1831 = vmatpush1.msra.mxu0 0.0
    %1832 = vmatprep.subr.mxu0 0.0
    %1833 = vmatpush1.msra.mxu0 0.0
    %1834 = vmatprep.subr.mxu0 0.0
    %1835 = vmatpush1.msra.mxu0 0.0
    %1836 = vmatprep.subr.mxu0 0.0
    %1837 = vmatpush1.msra.mxu0 0.0
    %1838 = vmatprep.subr.mxu0 0.0
    %1839 = vmatpush1.msra.mxu0 0.0
    %1840 = vmatprep.subr.mxu0 0.0
    %1841 = vmatpush1.msra.mxu0 0.0
    %1842 = vmatprep.subr.mxu0 0.0
    %1843 = vmatpush1.msra.mxu0 0.0
    %1844 = vmatprep.subr.mxu0 0.0
    %1845 = vmatpush1.msra.mxu0 0.0
    %1846 = vmatprep.subr.mxu0 0.0
    %1847 = vmatpush1.msra.mxu0 0.0
    %1848 = vmatprep.subr.mxu0 0.0
    %1849 = vmatpush1.msra.mxu0 0.0
    %1850 = vmatprep.subr.mxu0 0.0
    %1851 = vmatpush1.msra.mxu0 0.0
    %1852 = vmatprep.subr.mxu0 0.0
    %1853 = vmatpush1.msra.mxu0 0.0
    %1854 = vmatprep.subr.mxu0 0.0
    %1855 = vmatpush1.msra.mxu0 0.0
    %1856 = vmatprep.subr.mxu0 0.0
    %1857 = vmatpush1.msra.mxu0 0.0
    %1858 = vmatprep.subr.mxu0 0.0
    %1859 = vmatpush1.msra.mxu0 0.0
    %1860 = vmatprep.mubr.f32.mxu0 0.0
    %1861 = vmatmul.mubr.f32.gmra.mrb[0].mxu0 %v1791
    %v1862 = vpop.f32.mrb[0].mxu0
    %v1863 = vadd.f32 0.0, %v1862
    %v1864 = vpop.f32.mrb[0].mxu0
    %1865 = vmatprep.mubr.f32.mxu0 0.0
    %1866 = vmatmul.mubr.f32.gmra.mrb[0].mxu0 %v1794
    %v1867 = vpop.f32.mrb[0].mxu0
    %v1868 = vadd.f32 0.0, %v1867
    %v1869 = vpop.f32.mrb[0].mxu0
    %1870 = vdwg.mxu0
    %v1871 = vld [vmem:[#allocation5] sm:$0xff]
    %v1872 = vld [vmem:[#allocation5 + $0x8] sm:$0xff]
    %v1873 = vld [vmem:[#allocation5 + $0x10] sm:$0xff]
    %v1874 = vld [vmem:[#allocation5 + $0x18] sm:$0xff]
    %s1875 = scalar_lea.vmem [#allocation2], 16
    %v1876 = vld [vmem:[%s1875] sm:$0xff]
    %v1877 = vld [vmem:[%s1875 + $0x8] sm:$0xff]
    %v1879 = vsel %vm106, %v1876, 0
    %v1882 = vsel %vm106, %v1877, 0
    %1884 = vmatprep.subr.mxu0 0.0
    %1885 = vmatpush1.msra.mxu0 %v1784
    %1886 = vmatprep.subr.mxu0 0.0
    %1887 = vmatpush1.msra.mxu0 %v1785
    %1888 = vmatprep.subr.mxu0 0.0
    %1889 = vmatpush1.msra.mxu0 %v1786
    %1890 = vmatprep.subr.mxu0 0.0
    %1891 = vmatpush1.msra.mxu0 %v1787
    %1892 = vmatprep.subr.mxu0 0.0
    %1893 = vmatpush1.msra.mxu0 0.0
    %1894 = vmatprep.subr.mxu0 0.0
    %1895 = vmatpush1.msra.mxu0 0.0
    %1896 = vmatprep.subr.mxu0 0.0
    %1897 = vmatpush1.msra.mxu0 0.0
    %1898 = vmatprep.subr.mxu0 0.0
    %1899 = vmatpush1.msra.mxu0 0.0
    %1900 = vmatprep.subr.mxu0 0.0
    %1901 = vmatpush1.msra.mxu0 0.0
    %1902 = vmatprep.subr.mxu0 0.0
    %1903 = vmatpush1.msra.mxu0 0.0
    %1904 = vmatprep.subr.mxu0 0.0
    %1905 = vmatpush1.msra.mxu0 0.0
    %1906 = vmatprep.subr.mxu0 0.0
    %1907 = vmatpush1.msra.mxu0 0.0
    %1908 = vmatprep.subr.mxu0 0.0
    %1909 = vmatpush1.msra.mxu0 0.0
    %1910 = vmatprep.subr.mxu0 0.0
    %1911 = vmatpush1.msra.mxu0 0.0
    %1912 = vmatprep.subr.mxu0 0.0
    %1913 = vmatpush1.msra.mxu0 0.0
    %1914 = vmatprep.subr.mxu0 0.0
    %1915 = vmatpush1.msra.mxu0 0.0
    %1916 = vmatprep.subr.mxu0 0.0
    %1917 = vmatpush1.msra.mxu0 0.0
    %1918 = vmatprep.subr.mxu0 0.0
    %1919 = vmatpush1.msra.mxu0 0.0
    %1920 = vmatprep.subr.mxu0 0.0
    %1921 = vmatpush1.msra.mxu0 0.0
    %1922 = vmatprep.subr.mxu0 0.0
    %1923 = vmatpush1.msra.mxu0 0.0
    %1924 = vmatprep.subr.mxu0 0.0
    %1925 = vmatpush1.msra.mxu0 0.0
    %1926 = vmatprep.subr.mxu0 0.0
    %1927 = vmatpush1.msra.mxu0 0.0
    %1928 = vmatprep.subr.mxu0 0.0
    %1929 = vmatpush1.msra.mxu0 0.0
    %1930 = vmatprep.subr.mxu0 0.0
    %1931 = vmatpush1.msra.mxu0 0.0
    %1932 = vmatprep.subr.mxu0 0.0
    %1933 = vmatpush1.msra.mxu0 0.0
    %1934 = vmatprep.subr.mxu0 0.0
    %1935 = vmatpush1.msra.mxu0 0.0
    %1936 = vmatprep.subr.mxu0 0.0
    %1937 = vmatpush1.msra.mxu0 0.0
    %1938 = vmatprep.subr.mxu0 0.0
    %1939 = vmatpush1.msra.mxu0 0.0
    %1940 = vmatprep.subr.mxu0 0.0
    %1941 = vmatpush1.msra.mxu0 0.0
    %1942 = vmatprep.subr.mxu0 0.0
    %1943 = vmatpush1.msra.mxu0 0.0
    %1944 = vmatprep.subr.mxu0 0.0
    %1945 = vmatpush1.msra.mxu0 0.0
    %1946 = vmatprep.subr.mxu0 0.0
    %1947 = vmatpush1.msra.mxu0 0.0
    %1948 = vmatprep.mubr.f32.mxu0 0.0
    %1949 = vmatmul.mubr.f32.gmra.mrb[0].mxu0 %v1879
    %v1950 = vpop.f32.mrb[0].mxu0
    %v1951 = vadd.f32 0.0, %v1950
    %v1952 = vpop.f32.mrb[0].mxu0
    %1953 = vmatprep.mubr.f32.mxu0 0.0
    %1954 = vmatmul.mubr.f32.gmra.mrb[0].mxu0 %v1882
    %v1955 = vpop.f32.mrb[0].mxu0
    %v1956 = vadd.f32 0.0, %v1955
    %v1957 = vpop.f32.mrb[0].mxu0
    %1958 = vdwg.mxu0
    %s1959 = scalar_lea.vmem [#allocation5], 32
    %v1960 = vld [vmem:[%s1959] sm:$0xff]
    %v1961 = vld [vmem:[%s1959 + $0x8] sm:$0xff]
    %v1962 = vld [vmem:[%s1959 + $0x10] sm:$0xff]
    %v1963 = vld [vmem:[%s1959 + $0x18] sm:$0xff]
    %v1965 = vsel %vm106, %v1951, 0
    %v1968 = vsel %vm106, %v1956, 0
    %1970 = vmatprep.subr.mxu0 0.0
    %1971 = vmatpush1.msra.mxu0 %v1960
    %1972 = vmatprep.subr.mxu0 0.0
    %1973 = vmatpush1.msra.mxu0 %v1961
    %1974 = vmatprep.subr.mxu0 0.0
    %1975 = vmatpush1.msra.mxu0 %v1962
    %1976 = vmatprep.subr.mxu0 0.0
    %1977 = vmatpush1.msra.mxu0 %v1963
    %1978 = vmatprep.subr.mxu0 0.0
    %1979 = vmatpush1.msra.mxu0 0.0
    %1980 = vmatprep.subr.mxu0 0.0
    %1981 = vmatpush1.msra.mxu0 0.0
    %1982 = vmatprep.subr.mxu0 0.0
    %1983 = vmatpush1.msra.mxu0 0.0
    %1984 = vmatprep.subr.mxu0 0.0
    %1985 = vmatpush1.msra.mxu0 0.0
    %1986 = vmatprep.subr.mxu0 0.0
    %1987 = vmatpush1.msra.mxu0 0.0
    %1988 = vmatprep.subr.mxu0 0.0
    %1989 = vmatpush1.msra.mxu0 0.0
    %1990 = vmatprep.subr.mxu0 0.0
    %1991 = vmatpush1.msra.mxu0 0.0
    %1992 = vmatprep.subr.mxu0 0.0
    %1993 = vmatpush1.msra.mxu0 0.0
    %1994 = vmatprep.subr.mxu0 0.0
    %1995 = vmatpush1.msra.mxu0 0.0
    %1996 = vmatprep.subr.mxu0 0.0
    %1997 = vmatpush1.msra.mxu0 0.0
    %1998 = vmatprep.subr.mxu0 0.0
    %1999 = vmatpush1.msra.mxu0 0.0
    %2000 = vmatprep.subr.mxu0 0.0
    %2001 = vmatpush1.msra.mxu0 0.0
    %2002 = vmatprep.subr.mxu0 0.0
    %2003 = vmatpush1.msra.mxu0 0.0
    %2004 = vmatprep.subr.mxu0 0.0
    %2005 = vmatpush1.msra.mxu0 0.0
    %2006 = vmatprep.subr.mxu0 0.0
    %2007 = vmatpush1.msra.mxu0 0.0
    %2008 = vmatprep.subr.mxu0 0.0
    %2009 = vmatpush1.msra.mxu0 0.0
    %2010 = vmatprep.subr.mxu0 0.0
    %2011 = vmatpush1.msra.mxu0 0.0
    %2012 = vmatprep.subr.mxu0 0.0
    %2013 = vmatpush1.msra.mxu0 0.0
    %2014 = vmatprep.subr.mxu0 0.0
    %2015 = vmatpush1.msra.mxu0 0.0
    %2016 = vmatprep.subr.mxu0 0.0
    %2017 = vmatpush1.msra.mxu0 0.0
    %2018 = vmatprep.subr.mxu0 0.0
    %2019 = vmatpush1.msra.mxu0 0.0
    %2020 = vmatprep.subr.mxu0 0.0
    %2021 = vmatpush1.msra.mxu0 0.0
    %2022 = vmatprep.subr.mxu0 0.0
    %2023 = vmatpush1.msra.mxu0 0.0
    %2024 = vmatprep.subr.mxu0 0.0
    %2025 = vmatpush1.msra.mxu0 0.0
    %2026 = vmatprep.subr.mxu0 0.0
    %2027 = vmatpush1.msra.mxu0 0.0
    %2028 = vmatprep.subr.mxu0 0.0
    %2029 = vmatpush1.msra.mxu0 0.0
    %2030 = vmatprep.subr.mxu0 0.0
    %2031 = vmatpush1.msra.mxu0 0.0
    %2032 = vmatprep.subr.mxu0 0.0
    %2033 = vmatpush1.msra.mxu0 0.0
    %2034 = vmatprep.mubr.f32.mxu0 0.0
    %2035 = vmatmul.mubr.f32.gmra.mrb[0].mxu0 %v1965
    %v2036 = vpop.f32.mrb[0].mxu0
    %v2037 = vadd.f32 0.0, %v2036
    %v2038 = vpop.f32.mrb[0].mxu0
    %2039 = vmatprep.mubr.f32.mxu0 0.0
    %2040 = vmatmul.mubr.f32.gmra.mrb[0].mxu0 %v1968
    %v2041 = vpop.f32.mrb[0].mxu0
    %v2042 = vadd.f32 0.0, %v2041
    %v2043 = vpop.f32.mrb[0].mxu0
    %2044 = vdwg.mxu0
    %v2046 = vsel %vm106, %v1863, 0
    %v2049 = vsel %vm106, %v1868, 0
    %2051 = vmatprep.subr.mxu0 0.0
    %2052 = vmatpush1.msra.mxu0 %v1871
    %2053 = vmatprep.subr.mxu0 0.0
    %2054 = vmatpush1.msra.mxu0 %v1872
    %2055 = vmatprep.subr.mxu0 0.0
    %2056 = vmatpush1.msra.mxu0 %v1873
    %2057 = vmatprep.subr.mxu0 0.0
    %2058 = vmatpush1.msra.mxu0 %v1874
    %2059 = vmatprep.subr.mxu0 0.0
    %2060 = vmatpush1.msra.mxu0 0.0
    %2061 = vmatprep.subr.mxu0 0.0
    %2062 = vmatpush1.msra.mxu0 0.0
    %2063 = vmatprep.subr.mxu0 0.0
    %2064 = vmatpush1.msra.mxu0 0.0
    %2065 = vmatprep.subr.mxu0 0.0
    %2066 = vmatpush1.msra.mxu0 0.0
    %2067 = vmatprep.subr.mxu0 0.0
    %2068 = vmatpush1.msra.mxu0 0.0
    %2069 = vmatprep.subr.mxu0 0.0
    %2070 = vmatpush1.msra.mxu0 0.0
    %2071 = vmatprep.subr.mxu0 0.0
    %2072 = vmatpush1.msra.mxu0 0.0
    %2073 = vmatprep.subr.mxu0 0.0
    %2074 = vmatpush1.msra.mxu0 0.0
    %2075 = vmatprep.subr.mxu0 0.0
    %2076 = vmatpush1.msra.mxu0 0.0
    %2077 = vmatprep.subr.mxu0 0.0
    %2078 = vmatpush1.msra.mxu0 0.0
    %2079 = vmatprep.subr.mxu0 0.0
    %2080 = vmatpush1.msra.mxu0 0.0
    %2081 = vmatprep.subr.mxu0 0.0
    %2082 = vmatpush1.msra.mxu0 0.0
    %2083 = vmatprep.subr.mxu0 0.0
    %2084 = vmatpush1.msra.mxu0 0.0
    %2085 = vmatprep.subr.mxu0 0.0
    %2086 = vmatpush1.msra.mxu0 0.0
    %2087 = vmatprep.subr.mxu0 0.0
    %2088 = vmatpush1.msra.mxu0 0.0
    %2089 = vmatprep.subr.mxu0 0.0
    %2090 = vmatpush1.msra.mxu0 0.0
    %2091 = vmatprep.subr.mxu0 0.0
    %2092 = vmatpush1.msra.mxu0 0.0
    %2093 = vmatprep.subr.mxu0 0.0
    %2094 = vmatpush1.msra.mxu0 0.0
    %2095 = vmatprep.subr.mxu0 0.0
    %2096 = vmatpush1.msra.mxu0 0.0
    %2097 = vmatprep.subr.mxu0 0.0
    %2098 = vmatpush1.msra.mxu0 0.0
    %2099 = vmatprep.subr.mxu0 0.0
    %2100 = vmatpush1.msra.mxu0 0.0
    %2101 = vmatprep.subr.mxu0 0.0
    %2102 = vmatpush1.msra.mxu0 0.0
    %2103 = vmatprep.subr.mxu0 0.0
    %2104 = vmatpush1.msra.mxu0 0.0
    %2105 = vmatprep.subr.mxu0 0.0
    %2106 = vmatpush1.msra.mxu0 0.0
    %2107 = vmatprep.subr.mxu0 0.0
    %2108 = vmatpush1.msra.mxu0 0.0
    %2109 = vmatprep.subr.mxu0 0.0
    %2110 = vmatpush1.msra.mxu0 0.0
    %2111 = vmatprep.subr.mxu0 0.0
    %2112 = vmatpush1.msra.mxu0 0.0
    %2113 = vmatprep.subr.mxu0 0.0
    %2114 = vmatpush1.msra.mxu0 0.0
    %2115 = vmatprep.mubr.f32.mxu0 0.0
    %2116 = vmatmul.mubr.f32.gmra.mrb[0].mxu0 %v2046
    %v2117 = vpop.f32.mrb[0].mxu0
    %v2118 = vadd.f32 %v2037, %v2117
    %v2119 = vpop.f32.mrb[0].mxu0
    %2120 = vmatprep.mubr.f32.mxu0 0.0
    %2121 = vmatmul.mubr.f32.gmra.mrb[0].mxu0 %v2049
    %v2122 = vpop.f32.mrb[0].mxu0
    %v2123 = vadd.f32 %v2042, %v2122
    %v2124 = vpop.f32.mrb[0].mxu0
    %2125 = vdwg.mxu0
    %s2126 = scalar_lea.vmem [#allocation2], 32
    %v2127 = vld [vmem:[%s2126] sm:$0xff]
    %v2128 = vld [vmem:[%s2126 + $0x8] sm:$0xff]
    %v2130 = vsel %vm106, %v2127, 0
    %v2133 = vsel %vm106, %v2128, 0
    %2135 = vmatprep.subr.mxu0 0.0
    %2136 = vmatpush1.msra.mxu0 %v1784
    %2137 = vmatprep.subr.mxu0 0.0
    %2138 = vmatpush1.msra.mxu0 %v1785
    %2139 = vmatprep.subr.mxu0 0.0
    %2140 = vmatpush1.msra.mxu0 %v1786
    %2141 = vmatprep.subr.mxu0 0.0
    %2142 = vmatpush1.msra.mxu0 %v1787
    %2143 = vmatprep.subr.mxu0 0.0
    %2144 = vmatpush1.msra.mxu0 0.0
    %2145 = vmatprep.subr.mxu0 0.0
    %2146 = vmatpush1.msra.mxu0 0.0
    %2147 = vmatprep.subr.mxu0 0.0
    %2148 = vmatpush1.msra.mxu0 0.0
    %2149 = vmatprep.subr.mxu0 0.0
    %2150 = vmatpush1.msra.mxu0 0.0
    %2151 = vmatprep.subr.mxu0 0.0
    %2152 = vmatpush1.msra.mxu0 0.0
    %2153 = vmatprep.subr.mxu0 0.0
    %2154 = vmatpush1.msra.mxu0 0.0
    %2155 = vmatprep.subr.mxu0 0.0
    %2156 = vmatpush1.msra.mxu0 0.0
    %2157 = vmatprep.subr.mxu0 0.0
    %2158 = vmatpush1.msra.mxu0 0.0
    %2159 = vmatprep.subr.mxu0 0.0
    %2160 = vmatpush1.msra.mxu0 0.0
    %2161 = vmatprep.subr.mxu0 0.0
    %2162 = vmatpush1.msra.mxu0 0.0
    %2163 = vmatprep.subr.mxu0 0.0
    %2164 = vmatpush1.msra.mxu0 0.0
    %2165 = vmatprep.subr.mxu0 0.0
    %2166 = vmatpush1.msra.mxu0 0.0
    %2167 = vmatprep.subr.mxu0 0.0
    %2168 = vmatpush1.msra.mxu0 0.0
    %2169 = vmatprep.subr.mxu0 0.0
    %2170 = vmatpush1.msra.mxu0 0.0
    %2171 = vmatprep.subr.mxu0 0.0
    %2172 = vmatpush1.msra.mxu0 0.0
    %2173 = vmatprep.subr.mxu0 0.0
    %2174 = vmatpush1.msra.mxu0 0.0
    %2175 = vmatprep.subr.mxu0 0.0
    %2176 = vmatpush1.msra.mxu0 0.0
    %2177 = vmatprep.subr.mxu0 0.0
    %2178 = vmatpush1.msra.mxu0 0.0
    %2179 = vmatprep.subr.mxu0 0.0
    %2180 = vmatpush1.msra.mxu0 0.0
    %2181 = vmatprep.subr.mxu0 0.0
    %2182 = vmatpush1.msra.mxu0 0.0
    %2183 = vmatprep.subr.mxu0 0.0
    %2184 = vmatpush1.msra.mxu0 0.0
    %2185 = vmatprep.subr.mxu0 0.0
    %2186 = vmatpush1.msra.mxu0 0.0
    %2187 = vmatprep.subr.mxu0 0.0
    %2188 = vmatpush1.msra.mxu0 0.0
    %2189 = vmatprep.subr.mxu0 0.0
    %2190 = vmatpush1.msra.mxu0 0.0
    %2191 = vmatprep.subr.mxu0 0.0
    %2192 = vmatpush1.msra.mxu0 0.0
    %2193 = vmatprep.subr.mxu0 0.0
    %2194 = vmatpush1.msra.mxu0 0.0
    %2195 = vmatprep.subr.mxu0 0.0
    %2196 = vmatpush1.msra.mxu0 0.0
    %2197 = vmatprep.subr.mxu0 0.0
    %2198 = vmatpush1.msra.mxu0 0.0
    %2199 = vmatprep.mubr.f32.mxu0 0.0
    %2200 = vmatmul.mubr.f32.gmra.mrb[0].mxu0 %v2130
    %v2201 = vpop.f32.mrb[0].mxu0
    %v2202 = vadd.f32 0.0, %v2201
    %v2203 = vpop.f32.mrb[0].mxu0
    %2204 = vmatprep.mubr.f32.mxu0 0.0
    %2205 = vmatmul.mubr.f32.gmra.mrb[0].mxu0 %v2133
    %v2206 = vpop.f32.mrb[0].mxu0
    %v2207 = vadd.f32 0.0, %v2206
    %v2208 = vpop.f32.mrb[0].mxu0
    %2209 = vdwg.mxu0
    %s2210 = scalar_lea.vmem [#allocation5], 64
    %v2211 = vld [vmem:[%s2210] sm:$0xff]
    %v2212 = vld [vmem:[%s2210 + $0x8] sm:$0xff]
    %v2213 = vld [vmem:[%s2210 + $0x10] sm:$0xff]
    %v2214 = vld [vmem:[%s2210 + $0x18] sm:$0xff]
    %v2216 = vsel %vm106, %v2202, 0
    %v2219 = vsel %vm106, %v2207, 0
    %2221 = vmatprep.subr.mxu0 0.0
    %2222 = vmatpush1.msra.mxu0 %v2211
    %2223 = vmatprep.subr.mxu0 0.0
    %2224 = vmatpush1.msra.mxu0 %v2212
    %2225 = vmatprep.subr.mxu0 0.0
    %2226 = vmatpush1.msra.mxu0 %v2213
    %2227 = vmatprep.subr.mxu0 0.0
    %2228 = vmatpush1.msra.mxu0 %v2214
    %2229 = vmatprep.subr.mxu0 0.0
    %2230 = vmatpush1.msra.mxu0 0.0
    %2231 = vmatprep.subr.mxu0 0.0
    %2232 = vmatpush1.msra.mxu0 0.0
    %2233 = vmatprep.subr.mxu0 0.0
    %2234 = vmatpush1.msra.mxu0 0.0
    %2235 = vmatprep.subr.mxu0 0.0
    %2236 = vmatpush1.msra.mxu0 0.0
    %2237 = vmatprep.subr.mxu0 0.0
    %2238 = vmatpush1.msra.mxu0 0.0
    %2239 = vmatprep.subr.mxu0 0.0
    %2240 = vmatpush1.msra.mxu0 0.0
    %2241 = vmatprep.subr.mxu0 0.0
    %2242 = vmatpush1.msra.mxu0 0.0
    %2243 = vmatprep.subr.mxu0 0.0
    %2244 = vmatpush1.msra.mxu0 0.0
    %2245 = vmatprep.subr.mxu0 0.0
    %2246 = vmatpush1.msra.mxu0 0.0
    %2247 = vmatprep.subr.mxu0 0.0
    %2248 = vmatpush1.msra.mxu0 0.0
    %2249 = vmatprep.subr.mxu0 0.0
    %2250 = vmatpush1.msra.mxu0 0.0
    %2251 = vmatprep.subr.mxu0 0.0
    %2252 = vmatpush1.msra.mxu0 0.0
    %2253 = vmatprep.subr.mxu0 0.0
    %2254 = vmatpush1.msra.mxu0 0.0
    %2255 = vmatprep.subr.mxu0 0.0
    %2256 = vmatpush1.msra.mxu0 0.0
    %2257 = vmatprep.subr.mxu0 0.0
    %2258 = vmatpush1.msra.mxu0 0.0
    %2259 = vmatprep.subr.mxu0 0.0
    %2260 = vmatpush1.msra.mxu0 0.0
    %2261 = vmatprep.subr.mxu0 0.0
    %2262 = vmatpush1.msra.mxu0 0.0
    %2263 = vmatprep.subr.mxu0 0.0
    %2264 = vmatpush1.msra.mxu0 0.0
    %2265 = vmatprep.subr.mxu0 0.0
    %2266 = vmatpush1.msra.mxu0 0.0
    %2267 = vmatprep.subr.mxu0 0.0
    %2268 = vmatpush1.msra.mxu0 0.0
    %2269 = vmatprep.subr.mxu0 0.0
    %2270 = vmatpush1.msra.mxu0 0.0
    %2271 = vmatprep.subr.mxu0 0.0
    %2272 = vmatpush1.msra.mxu0 0.0
    %2273 = vmatprep.subr.mxu0 0.0
    %2274 = vmatpush1.msra.mxu0 0.0
    %2275 = vmatprep.subr.mxu0 0.0
    %2276 = vmatpush1.msra.mxu0 0.0
    %2277 = vmatprep.subr.mxu0 0.0
    %2278 = vmatpush1.msra.mxu0 0.0
    %2279 = vmatprep.subr.mxu0 0.0
    %2280 = vmatpush1.msra.mxu0 0.0
    %2281 = vmatprep.subr.mxu0 0.0
    %2282 = vmatpush1.msra.mxu0 0.0
    %2283 = vmatprep.subr.mxu0 0.0
    %2284 = vmatpush1.msra.mxu0 0.0
    %2285 = vmatprep.mubr.f32.mxu0 0.0
    %2286 = vmatmul.mubr.f32.gmra.mrb[0].mxu0 %v2216
    %v2287 = vpop.f32.mrb[0].mxu0
    %v2288 = vadd.f32 0.0, %v2287
    %v2289 = vpop.f32.mrb[0].mxu0
    %2290 = vmatprep.mubr.f32.mxu0 0.0
    %2291 = vmatmul.mubr.f32.gmra.mrb[0].mxu0 %v2219
    %v2292 = vpop.f32.mrb[0].mxu0
    %v2293 = vadd.f32 0.0, %v2292
    %v2294 = vpop.f32.mrb[0].mxu0
    %2295 = vdwg.mxu0
    %v2296 = vadd.f32 %v2118, %v2288
    %v2297 = vadd.f32 %v2123, %v2293
    %vm2298 = vcmp.ge.f32.partialorder %v2296, 0.0
    %vm2299 = vcmp.ge.f32.partialorder %v2297, 0.0
    %v2300 = vmul.f32 %v2296, 0.2
    %v2301 = vmul.f32 %v2297, 0.2
    %v2302 = vsel %vm2298, %v2296, %v2300
    %v2303 = vsel %vm2299, %v2297, %v2301
    %v2304 = vld [vmem:[%s7] sm:$0xff]
    %v2306 = vsel %vm1375, %v2304, 0
    %2308 = vmatprep.subr.mxu0 0.0
    %2309 = vmatpush1.msra.mxu0 %v2302
    %2310 = vmatprep.subr.mxu0 0.0
    %2311 = vmatpush1.msra.mxu0 %v2303
    %2312 = vmatprep.subr.mxu0 0.0
    %2313 = vmatpush1.msra.mxu0 0.0
    %2314 = vmatprep.subr.mxu0 0.0
    %2315 = vmatpush1.msra.mxu0 0.0
    %2316 = vmatprep.subr.mxu0 0.0
    %2317 = vmatpush1.msra.mxu0 0.0
    %2318 = vmatprep.subr.mxu0 0.0
    %2319 = vmatpush1.msra.mxu0 0.0
    %2320 = vmatprep.subr.mxu0 0.0
    %2321 = vmatpush1.msra.mxu0 0.0
    %2322 = vmatprep.subr.mxu0 0.0
    %2323 = vmatpush1.msra.mxu0 0.0
    %2324 = vmatprep.subr.mxu0 0.0
    %2325 = vmatpush1.msra.mxu0 0.0
    %2326 = vmatprep.subr.mxu0 0.0
    %2327 = vmatpush1.msra.mxu0 0.0
    %2328 = vmatprep.subr.mxu0 0.0
    %2329 = vmatpush1.msra.mxu0 0.0
    %2330 = vmatprep.subr.mxu0 0.0
    %2331 = vmatpush1.msra.mxu0 0.0
    %2332 = vmatprep.subr.mxu0 0.0
    %2333 = vmatpush1.msra.mxu0 0.0
    %2334 = vmatprep.subr.mxu0 0.0
    %2335 = vmatpush1.msra.mxu0 0.0
    %2336 = vmatprep.subr.mxu0 0.0
    %2337 = vmatpush1.msra.mxu0 0.0
    %2338 = vmatprep.subr.mxu0 0.0
    %2339 = vmatpush1.msra.mxu0 0.0
    %2340 = vmatprep.subr.mxu0 0.0
    %2341 = vmatpush1.msra.mxu0 0.0
    %2342 = vmatprep.subr.mxu0 0.0
    %2343 = vmatpush1.msra.mxu0 0.0
    %2344 = vmatprep.subr.mxu0 0.0
    %2345 = vmatpush1.msra.mxu0 0.0
    %2346 = vmatprep.subr.mxu0 0.0
    %2347 = vmatpush1.msra.mxu0 0.0
    %2348 = vmatprep.subr.mxu0 0.0
    %2349 = vmatpush1.msra.mxu0 0.0
    %2350 = vmatprep.subr.mxu0 0.0
    %2351 = vmatpush1.msra.mxu0 0.0
    %2352 = vmatprep.subr.mxu0 0.0
    %2353 = vmatpush1.msra.mxu0 0.0
    %2354 = vmatprep.subr.mxu0 0.0
    %2355 = vmatpush1.msra.mxu0 0.0
    %2356 = vmatprep.subr.mxu0 0.0
    %2357 = vmatpush1.msra.mxu0 0.0
    %2358 = vmatprep.subr.mxu0 0.0
    %2359 = vmatpush1.msra.mxu0 0.0
    %2360 = vmatprep.subr.mxu0 0.0
    %2361 = vmatpush1.msra.mxu0 0.0
    %2362 = vmatprep.subr.mxu0 0.0
    %2363 = vmatpush1.msra.mxu0 0.0
    %2364 = vmatprep.subr.mxu0 0.0
    %2365 = vmatpush1.msra.mxu0 0.0
    %2366 = vmatprep.subr.mxu0 0.0
    %2367 = vmatpush1.msra.mxu0 0.0
    %2368 = vmatprep.subr.mxu0 0.0
    %2369 = vmatpush1.msra.mxu0 0.0
    %2370 = vmatprep.subr.mxu0 0.0
    %2371 = vmatpush1.msra.mxu0 0.0
    %2372 = vmatprep.mubr.f32.mxu0 0.0
    %2373 = vmatmul.mubr.f32.gmra.mrb[0].mxu0 %v2306
    %v2374 = vpop.f32.mrb[0].mxu0
    %v2375 = vadd.f32 0.0, %v2374
    %v2376 = vpop.f32.mrb[0].mxu0
    %2377 = vdwg.mxu0
    %v2378 = vld [vmem:[%s8] sm:$0xff]
    %v2379 = vld [vmem:[%s8 + $0x8] sm:$0xff]
    %v2380 = vld [vmem:[%s8 + $0x10] sm:$0xff]
    %v2381 = vld [vmem:[%s8 + $0x18] sm:$0xff]
    %v2382 = vld [vmem:[%s8 + $0x20] sm:$0xff]
    %v2383 = vld [vmem:[%s8 + $0x28] sm:$0xff]
    %v2384 = vld [vmem:[%s8 + $0x30] sm:$0xff]
    %v2385 = vld [vmem:[%s8 + $0x38] sm:$0xff]
    %s2386 = scalar_lea.vmem %s7, 8
    %v2387 = vld [vmem:[%s2386] sm:$0xff]
    %v2389 = vsel %vm1375, %v2387, 0
    %2391 = vmatprep.subr.mxu0 0.0
    %2392 = vmatpush1.msra.mxu0 %v2302
    %2393 = vmatprep.subr.mxu0 0.0
    %2394 = vmatpush1.msra.mxu0 %v2303
    %2395 = vmatprep.subr.mxu0 0.0
    %2396 = vmatpush1.msra.mxu0 0.0
    %2397 = vmatprep.subr.mxu0 0.0
    %2398 = vmatpush1.msra.mxu0 0.0
    %2399 = vmatprep.subr.mxu0 0.0
    %2400 = vmatpush1.msra.mxu0 0.0
    %2401 = vmatprep.subr.mxu0 0.0
    %2402 = vmatpush1.msra.mxu0 0.0
    %2403 = vmatprep.subr.mxu0 0.0
    %2404 = vmatpush1.msra.mxu0 0.0
    %2405 = vmatprep.subr.mxu0 0.0
    %2406 = vmatpush1.msra.mxu0 0.0
    %2407 = vmatprep.subr.mxu0 0.0
    %2408 = vmatpush1.msra.mxu0 0.0
    %2409 = vmatprep.subr.mxu0 0.0
    %2410 = vmatpush1.msra.mxu0 0.0
    %2411 = vmatprep.subr.mxu0 0.0
    %2412 = vmatpush1.msra.mxu0 0.0
    %2413 = vmatprep.subr.mxu0 0.0
    %2414 = vmatpush1.msra.mxu0 0.0
    %2415 = vmatprep.subr.mxu0 0.0
    %2416 = vmatpush1.msra.mxu0 0.0
    %2417 = vmatprep.subr.mxu0 0.0
    %2418 = vmatpush1.msra.mxu0 0.0
    %2419 = vmatprep.subr.mxu0 0.0
    %2420 = vmatpush1.msra.mxu0 0.0
    %2421 = vmatprep.subr.mxu0 0.0
    %2422 = vmatpush1.msra.mxu0 0.0
    %2423 = vmatprep.subr.mxu0 0.0
    %2424 = vmatpush1.msra.mxu0 0.0
    %2425 = vmatprep.subr.mxu0 0.0
    %2426 = vmatpush1.msra.mxu0 0.0
    %2427 = vmatprep.subr.mxu0 0.0
    %2428 = vmatpush1.msra.mxu0 0.0
    %2429 = vmatprep.subr.mxu0 0.0
    %2430 = vmatpush1.msra.mxu0 0.0
    %2431 = vmatprep.subr.mxu0 0.0
    %2432 = vmatpush1.msra.mxu0 0.0
    %2433 = vmatprep.subr.mxu0 0.0
    %2434 = vmatpush1.msra.mxu0 0.0
    %2435 = vmatprep.subr.mxu0 0.0
    %2436 = vmatpush1.msra.mxu0 0.0
    %2437 = vmatprep.subr.mxu0 0.0
    %2438 = vmatpush1.msra.mxu0 0.0
    %2439 = vmatprep.subr.mxu0 0.0
    %2440 = vmatpush1.msra.mxu0 0.0
    %2441 = vmatprep.subr.mxu0 0.0
    %2442 = vmatpush1.msra.mxu0 0.0
    %2443 = vmatprep.subr.mxu0 0.0
    %2444 = vmatpush1.msra.mxu0 0.0
    %2445 = vmatprep.subr.mxu0 0.0
    %2446 = vmatpush1.msra.mxu0 0.0
    %2447 = vmatprep.subr.mxu0 0.0
    %2448 = vmatpush1.msra.mxu0 0.0
    %2449 = vmatprep.subr.mxu0 0.0
    %2450 = vmatpush1.msra.mxu0 0.0
    %2451 = vmatprep.subr.mxu0 0.0
    %2452 = vmatpush1.msra.mxu0 0.0
    %2453 = vmatprep.subr.mxu0 0.0
    %2454 = vmatpush1.msra.mxu0 0.0
    %2455 = vmatprep.mubr.f32.mxu0 0.0
    %2456 = vmatmul.mubr.f32.gmra.mrb[0].mxu0 %v2389
    %v2457 = vpop.f32.mrb[0].mxu0
    %v2458 = vadd.f32 0.0, %v2457
    %v2459 = vpop.f32.mrb[0].mxu0
    %2460 = vdwg.mxu0
    %s2461 = scalar_lea.vmem %s8, 64
    %v2462 = vld [vmem:[%s2461] sm:$0xff]
    %v2463 = vld [vmem:[%s2461 + $0x8] sm:$0xff]
    %v2464 = vld [vmem:[%s2461 + $0x10] sm:$0xff]
    %v2465 = vld [vmem:[%s2461 + $0x18] sm:$0xff]
    %v2466 = vld [vmem:[%s2461 + $0x20] sm:$0xff]
    %v2467 = vld [vmem:[%s2461 + $0x28] sm:$0xff]
    %v2468 = vld [vmem:[%s2461 + $0x30] sm:$0xff]
    %v2469 = vld [vmem:[%s2461 + $0x38] sm:$0xff]
    %v2471 = vsel %vm1170, %v2458, 0
    %2473 = vmatprep.subr.mxu0 0.0
    %2474 = vmatpush1.msra.mxu0 %v2462
    %2475 = vmatprep.subr.mxu0 0.0
    %2476 = vmatpush1.msra.mxu0 %v2463
    %2477 = vmatprep.subr.mxu0 0.0
    %2478 = vmatpush1.msra.mxu0 %v2464
    %2479 = vmatprep.subr.mxu0 0.0
    %2480 = vmatpush1.msra.mxu0 %v2465
    %2481 = vmatprep.subr.mxu0 0.0
    %2482 = vmatpush1.msra.mxu0 %v2466
    %2483 = vmatprep.subr.mxu0 0.0
    %2484 = vmatpush1.msra.mxu0 %v2467
    %2485 = vmatprep.subr.mxu0 0.0
    %2486 = vmatpush1.msra.mxu0 %v2468
    %2487 = vmatprep.subr.mxu0 0.0
    %2488 = vmatpush1.msra.mxu0 %v2469
    %2489 = vmatprep.subr.mxu0 0.0
    %2490 = vmatpush1.msra.mxu0 0.0
    %2491 = vmatprep.subr.mxu0 0.0
    %2492 = vmatpush1.msra.mxu0 0.0
    %2493 = vmatprep.subr.mxu0 0.0
    %2494 = vmatpush1.msra.mxu0 0.0
    %2495 = vmatprep.subr.mxu0 0.0
    %2496 = vmatpush1.msra.mxu0 0.0
    %2497 = vmatprep.subr.mxu0 0.0
    %2498 = vmatpush1.msra.mxu0 0.0
    %2499 = vmatprep.subr.mxu0 0.0
    %2500 = vmatpush1.msra.mxu0 0.0
    %2501 = vmatprep.subr.mxu0 0.0
    %2502 = vmatpush1.msra.mxu0 0.0
    %2503 = vmatprep.subr.mxu0 0.0
    %2504 = vmatpush1.msra.mxu0 0.0
    %2505 = vmatprep.subr.mxu0 0.0
    %2506 = vmatpush1.msra.mxu0 0.0
    %2507 = vmatprep.subr.mxu0 0.0
    %2508 = vmatpush1.msra.mxu0 0.0
    %2509 = vmatprep.subr.mxu0 0.0
    %2510 = vmatpush1.msra.mxu0 0.0
    %2511 = vmatprep.subr.mxu0 0.0
    %2512 = vmatpush1.msra.mxu0 0.0
    %2513 = vmatprep.subr.mxu0 0.0
    %2514 = vmatpush1.msra.mxu0 0.0
    %2515 = vmatprep.subr.mxu0 0.0
    %2516 = vmatpush1.msra.mxu0 0.0
    %2517 = vmatprep.subr.mxu0 0.0
    %2518 = vmatpush1.msra.mxu0 0.0
    %2519 = vmatprep.subr.mxu0 0.0
    %2520 = vmatpush1.msra.mxu0 0.0
    %2521 = vmatprep.subr.mxu0 0.0
    %2522 = vmatpush1.msra.mxu0 0.0
    %2523 = vmatprep.subr.mxu0 0.0
    %2524 = vmatpush1.msra.mxu0 0.0
    %2525 = vmatprep.subr.mxu0 0.0
    %2526 = vmatpush1.msra.mxu0 0.0
    %2527 = vmatprep.subr.mxu0 0.0
    %2528 = vmatpush1.msra.mxu0 0.0
    %2529 = vmatprep.subr.mxu0 0.0
    %2530 = vmatpush1.msra.mxu0 0.0
    %2531 = vmatprep.subr.mxu0 0.0
    %2532 = vmatpush1.msra.mxu0 0.0
    %2533 = vmatprep.subr.mxu0 0.0
    %2534 = vmatpush1.msra.mxu0 0.0
    %2535 = vmatprep.subr.mxu0 0.0
    %2536 = vmatpush1.msra.mxu0 0.0
    %2537 = vmatprep.mubr.f32.mxu0 0.0
    %2538 = vmatmul.mubr.f32.gmra.mrb[0].mxu0 %v2471
    %v2539 = vpop.f32.mrb[0].mxu0
    %v2540 = vadd.f32 0.0, %v2539
    %v2541 = vpop.f32.mrb[0].mxu0
    %2542 = vdwg.mxu0
    %v2544 = vsel %vm1170, %v2375, 0
    %2546 = vmatprep.subr.mxu0 0.0
    %2547 = vmatpush1.msra.mxu0 %v2378
    %2548 = vmatprep.subr.mxu0 0.0
    %2549 = vmatpush1.msra.mxu0 %v2379
    %2550 = vmatprep.subr.mxu0 0.0
    %2551 = vmatpush1.msra.mxu0 %v2380
    %2552 = vmatprep.subr.mxu0 0.0
    %2553 = vmatpush1.msra.mxu0 %v2381
    %2554 = vmatprep.subr.mxu0 0.0
    %2555 = vmatpush1.msra.mxu0 %v2382
    %2556 = vmatprep.subr.mxu0 0.0
    %2557 = vmatpush1.msra.mxu0 %v2383
    %2558 = vmatprep.subr.mxu0 0.0
    %2559 = vmatpush1.msra.mxu0 %v2384
    %2560 = vmatprep.subr.mxu0 0.0
    %2561 = vmatpush1.msra.mxu0 %v2385
    %2562 = vmatprep.subr.mxu0 0.0
    %2563 = vmatpush1.msra.mxu0 0.0
    %2564 = vmatprep.subr.mxu0 0.0
    %2565 = vmatpush1.msra.mxu0 0.0
    %2566 = vmatprep.subr.mxu0 0.0
    %2567 = vmatpush1.msra.mxu0 0.0
    %2568 = vmatprep.subr.mxu0 0.0
    %2569 = vmatpush1.msra.mxu0 0.0
    %2570 = vmatprep.subr.mxu0 0.0
    %2571 = vmatpush1.msra.mxu0 0.0
    %2572 = vmatprep.subr.mxu0 0.0
    %2573 = vmatpush1.msra.mxu0 0.0
    %2574 = vmatprep.subr.mxu0 0.0
    %2575 = vmatpush1.msra.mxu0 0.0
    %2576 = vmatprep.subr.mxu0 0.0
    %2577 = vmatpush1.msra.mxu0 0.0
    %2578 = vmatprep.subr.mxu0 0.0
    %2579 = vmatpush1.msra.mxu0 0.0
    %2580 = vmatprep.subr.mxu0 0.0
    %2581 = vmatpush1.msra.mxu0 0.0
    %2582 = vmatprep.subr.mxu0 0.0
    %2583 = vmatpush1.msra.mxu0 0.0
    %2584 = vmatprep.subr.mxu0 0.0
    %2585 = vmatpush1.msra.mxu0 0.0
    %2586 = vmatprep.subr.mxu0 0.0
    %2587 = vmatpush1.msra.mxu0 0.0
    %2588 = vmatprep.subr.mxu0 0.0
    %2589 = vmatpush1.msra.mxu0 0.0
    %2590 = vmatprep.subr.mxu0 0.0
    %2591 = vmatpush1.msra.mxu0 0.0
    %2592 = vmatprep.subr.mxu0 0.0
    %2593 = vmatpush1.msra.mxu0 0.0
    %2594 = vmatprep.subr.mxu0 0.0
    %2595 = vmatpush1.msra.mxu0 0.0
    %2596 = vmatprep.subr.mxu0 0.0
    %2597 = vmatpush1.msra.mxu0 0.0
    %2598 = vmatprep.subr.mxu0 0.0
    %2599 = vmatpush1.msra.mxu0 0.0
    %2600 = vmatprep.subr.mxu0 0.0
    %2601 = vmatpush1.msra.mxu0 0.0
    %2602 = vmatprep.subr.mxu0 0.0
    %2603 = vmatpush1.msra.mxu0 0.0
    %2604 = vmatprep.subr.mxu0 0.0
    %2605 = vmatpush1.msra.mxu0 0.0
    %2606 = vmatprep.subr.mxu0 0.0
    %2607 = vmatpush1.msra.mxu0 0.0
    %2608 = vmatprep.subr.mxu0 0.0
    %2609 = vmatpush1.msra.mxu0 0.0
    %2610 = vmatprep.mubr.f32.mxu0 0.0
    %2611 = vmatmul.mubr.f32.gmra.mrb[0].mxu0 %v2544
    %v2612 = vpop.f32.mrb[0].mxu0
    %v2613 = vadd.f32 %v2540, %v2612
    %v2614 = vpop.f32.mrb[0].mxu0
    %2615 = vdwg.mxu0
    %s2616 = scalar_lea.vmem %s7, 16
    %v2617 = vld [vmem:[%s2616] sm:$0xff]
    %v2619 = vsel %vm1375, %v2617, 0
    %2621 = vmatprep.subr.mxu0 0.0
    %2622 = vmatpush1.msra.mxu0 %v2302
    %2623 = vmatprep.subr.mxu0 0.0
    %2624 = vmatpush1.msra.mxu0 %v2303
    %2625 = vmatprep.subr.mxu0 0.0
    %2626 = vmatpush1.msra.mxu0 0.0
    %2627 = vmatprep.subr.mxu0 0.0
    %2628 = vmatpush1.msra.mxu0 0.0
    %2629 = vmatprep.subr.mxu0 0.0
    %2630 = vmatpush1.msra.mxu0 0.0
    %2631 = vmatprep.subr.mxu0 0.0
    %2632 = vmatpush1.msra.mxu0 0.0
    %2633 = vmatprep.subr.mxu0 0.0
    %2634 = vmatpush1.msra.mxu0 0.0
    %2635 = vmatprep.subr.mxu0 0.0
    %2636 = vmatpush1.msra.mxu0 0.0
    %2637 = vmatprep.subr.mxu0 0.0
    %2638 = vmatpush1.msra.mxu0 0.0
    %2639 = vmatprep.subr.mxu0 0.0
    %2640 = vmatpush1.msra.mxu0 0.0
    %2641 = vmatprep.subr.mxu0 0.0
    %2642 = vmatpush1.msra.mxu0 0.0
    %2643 = vmatprep.subr.mxu0 0.0
    %2644 = vmatpush1.msra.mxu0 0.0
    %2645 = vmatprep.subr.mxu0 0.0
    %2646 = vmatpush1.msra.mxu0 0.0
    %2647 = vmatprep.subr.mxu0 0.0
    %2648 = vmatpush1.msra.mxu0 0.0
    %2649 = vmatprep.subr.mxu0 0.0
    %2650 = vmatpush1.msra.mxu0 0.0
    %2651 = vmatprep.subr.mxu0 0.0
    %2652 = vmatpush1.msra.mxu0 0.0
    %2653 = vmatprep.subr.mxu0 0.0
    %2654 = vmatpush1.msra.mxu0 0.0
    %2655 = vmatprep.subr.mxu0 0.0
    %2656 = vmatpush1.msra.mxu0 0.0
    %2657 = vmatprep.subr.mxu0 0.0
    %2658 = vmatpush1.msra.mxu0 0.0
    %2659 = vmatprep.subr.mxu0 0.0
    %2660 = vmatpush1.msra.mxu0 0.0
    %2661 = vmatprep.subr.mxu0 0.0
    %2662 = vmatpush1.msra.mxu0 0.0
    %2663 = vmatprep.subr.mxu0 0.0
    %2664 = vmatpush1.msra.mxu0 0.0
    %2665 = vmatprep.subr.mxu0 0.0
    %2666 = vmatpush1.msra.mxu0 0.0
    %2667 = vmatprep.subr.mxu0 0.0
    %2668 = vmatpush1.msra.mxu0 0.0
    %2669 = vmatprep.subr.mxu0 0.0
    %2670 = vmatpush1.msra.mxu0 0.0
    %2671 = vmatprep.subr.mxu0 0.0
    %2672 = vmatpush1.msra.mxu0 0.0
    %2673 = vmatprep.subr.mxu0 0.0
    %2674 = vmatpush1.msra.mxu0 0.0
    %2675 = vmatprep.subr.mxu0 0.0
    %2676 = vmatpush1.msra.mxu0 0.0
    %2677 = vmatprep.subr.mxu0 0.0
    %2678 = vmatpush1.msra.mxu0 0.0
    %2679 = vmatprep.subr.mxu0 0.0
    %2680 = vmatpush1.msra.mxu0 0.0
    %2681 = vmatprep.subr.mxu0 0.0
    %2682 = vmatpush1.msra.mxu0 0.0
    %2683 = vmatprep.subr.mxu0 0.0
    %2684 = vmatpush1.msra.mxu0 0.0
    %2685 = vmatprep.mubr.f32.mxu0 0.0
    %2686 = vmatmul.mubr.f32.gmra.mrb[0].mxu0 %v2619
    %v2687 = vpop.f32.mrb[0].mxu0
    %v2688 = vadd.f32 0.0, %v2687
    %v2689 = vpop.f32.mrb[0].mxu0
    %2690 = vdwg.mxu0
    %s2691 = scalar_lea.vmem %s8, 128
    %v2692 = vld [vmem:[%s2691] sm:$0xff]
    %v2693 = vld [vmem:[%s2691 + $0x8] sm:$0xff]
    %v2694 = vld [vmem:[%s2691 + $0x10] sm:$0xff]
    %v2695 = vld [vmem:[%s2691 + $0x18] sm:$0xff]
    %v2696 = vld [vmem:[%s2691 + $0x20] sm:$0xff]
    %v2697 = vld [vmem:[%s2691 + $0x28] sm:$0xff]
    %v2698 = vld [vmem:[%s2691 + $0x30] sm:$0xff]
    %v2699 = vld [vmem:[%s2691 + $0x38] sm:$0xff]
    %v2701 = vsel %vm1170, %v2688, 0
    %2703 = vmatprep.subr.mxu0 0.0
    %2704 = vmatpush1.msra.mxu0 %v2692
    %2705 = vmatprep.subr.mxu0 0.0
    %2706 = vmatpush1.msra.mxu0 %v2693
    %2707 = vmatprep.subr.mxu0 0.0
    %2708 = vmatpush1.msra.mxu0 %v2694
    %2709 = vmatprep.subr.mxu0 0.0
    %2710 = vmatpush1.msra.mxu0 %v2695
    %2711 = vmatprep.subr.mxu0 0.0
    %2712 = vmatpush1.msra.mxu0 %v2696
    %2713 = vmatprep.subr.mxu0 0.0
    %2714 = vmatpush1.msra.mxu0 %v2697
    %2715 = vmatprep.subr.mxu0 0.0
    %2716 = vmatpush1.msra.mxu0 %v2698
    %2717 = vmatprep.subr.mxu0 0.0
    %2718 = vmatpush1.msra.mxu0 %v2699
    %2719 = vmatprep.subr.mxu0 0.0
    %2720 = vmatpush1.msra.mxu0 0.0
    %2721 = vmatprep.subr.mxu0 0.0
    %2722 = vmatpush1.msra.mxu0 0.0
    %2723 = vmatprep.subr.mxu0 0.0
    %2724 = vmatpush1.msra.mxu0 0.0
    %2725 = vmatprep.subr.mxu0 0.0
    %2726 = vmatpush1.msra.mxu0 0.0
    %2727 = vmatprep.subr.mxu0 0.0
    %2728 = vmatpush1.msra.mxu0 0.0
    %2729 = vmatprep.subr.mxu0 0.0
    %2730 = vmatpush1.msra.mxu0 0.0
    %2731 = vmatprep.subr.mxu0 0.0
    %2732 = vmatpush1.msra.mxu0 0.0
    %2733 = vmatprep.subr.mxu0 0.0
    %2734 = vmatpush1.msra.mxu0 0.0
    %2735 = vmatprep.subr.mxu0 0.0
    %2736 = vmatpush1.msra.mxu0 0.0
    %2737 = vmatprep.subr.mxu0 0.0
    %2738 = vmatpush1.msra.mxu0 0.0
    %2739 = vmatprep.subr.mxu0 0.0
    %2740 = vmatpush1.msra.mxu0 0.0
    %2741 = vmatprep.subr.mxu0 0.0
    %2742 = vmatpush1.msra.mxu0 0.0
    %2743 = vmatprep.subr.mxu0 0.0
    %2744 = vmatpush1.msra.mxu0 0.0
    %2745 = vmatprep.subr.mxu0 0.0
    %2746 = vmatpush1.msra.mxu0 0.0
    %2747 = vmatprep.subr.mxu0 0.0
    %2748 = vmatpush1.msra.mxu0 0.0
    %2749 = vmatprep.subr.mxu0 0.0
    %2750 = vmatpush1.msra.mxu0 0.0
    %2751 = vmatprep.subr.mxu0 0.0
    %2752 = vmatpush1.msra.mxu0 0.0
    %2753 = vmatprep.subr.mxu0 0.0
    %2754 = vmatpush1.msra.mxu0 0.0
    %2755 = vmatprep.subr.mxu0 0.0
    %2756 = vmatpush1.msra.mxu0 0.0
    %2757 = vmatprep.subr.mxu0 0.0
    %2758 = vmatpush1.msra.mxu0 0.0
    %2759 = vmatprep.subr.mxu0 0.0
    %2760 = vmatpush1.msra.mxu0 0.0
    %2761 = vmatprep.subr.mxu0 0.0
    %2762 = vmatpush1.msra.mxu0 0.0
    %2763 = vmatprep.subr.mxu0 0.0
    %2764 = vmatpush1.msra.mxu0 0.0
    %2765 = vmatprep.subr.mxu0 0.0
    %2766 = vmatpush1.msra.mxu0 0.0
    %2767 = vmatprep.mubr.f32.mxu0 0.0
    %2768 = vmatmul.mubr.f32.gmra.mrb[0].mxu0 %v2701
    %v2769 = vpop.f32.mrb[0].mxu0
    %v2770 = vadd.f32 0.0, %v2769
    %v2771 = vpop.f32.mrb[0].mxu0
    %2772 = vdwg.mxu0
    %v2773 = vadd.f32 %v2613, %v2770
    %vm2774 = vcmp.ge.f32.partialorder %v2773, 0.0
    %v2775 = vmul.f32 %v2773, 0.2
    %v2776 = vsel %vm2774, %v2773, %v2775
    %v2777 = vld [vmem:[#allocation7] sm:$0x3]
    %vm2778 = vcmask 64512
    %v2780 = vsel %vm2778, %v2777, 0
    %2782 = vmatprep.subr.mxu0 0.0
    %2783 = vmatpush1.msra.mxu0 %v2776
    %2784 = vmatprep.subr.mxu0 0.0
    %2785 = vmatpush1.msra.mxu0 0.0
    %2786 = vmatprep.subr.mxu0 0.0
    %2787 = vmatpush1.msra.mxu0 0.0
    %2788 = vmatprep.subr.mxu0 0.0
    %2789 = vmatpush1.msra.mxu0 0.0
    %2790 = vmatprep.subr.mxu0 0.0
    %2791 = vmatpush1.msra.mxu0 0.0
    %2792 = vmatprep.subr.mxu0 0.0
    %2793 = vmatpush1.msra.mxu0 0.0
    %2794 = vmatprep.subr.mxu0 0.0
    %2795 = vmatpush1.msra.mxu0 0.0
    %2796 = vmatprep.subr.mxu0 0.0
    %2797 = vmatpush1.msra.mxu0 0.0
    %2798 = vmatprep.subr.mxu0 0.0
    %2799 = vmatpush1.msra.mxu0 0.0
    %2800 = vmatprep.subr.mxu0 0.0
    %2801 = vmatpush1.msra.mxu0 0.0
    %2802 = vmatprep.subr.mxu0 0.0
    %2803 = vmatpush1.msra.mxu0 0.0
    %2804 = vmatprep.subr.mxu0 0.0
    %2805 = vmatpush1.msra.mxu0 0.0
    %2806 = vmatprep.subr.mxu0 0.0
    %2807 = vmatpush1.msra.mxu0 0.0
    %2808 = vmatprep.subr.mxu0 0.0
    %2809 = vmatpush1.msra.mxu0 0.0
    %2810 = vmatprep.subr.mxu0 0.0
    %2811 = vmatpush1.msra.mxu0 0.0
    %2812 = vmatprep.subr.mxu0 0.0
    %2813 = vmatpush1.msra.mxu0 0.0
    %2814 = vmatprep.subr.mxu0 0.0
    %2815 = vmatpush1.msra.mxu0 0.0
    %2816 = vmatprep.subr.mxu0 0.0
    %2817 = vmatpush1.msra.mxu0 0.0
    %2818 = vmatprep.subr.mxu0 0.0
    %2819 = vmatpush1.msra.mxu0 0.0
    %2820 = vmatprep.subr.mxu0 0.0
    %2821 = vmatpush1.msra.mxu0 0.0
    %2822 = vmatprep.subr.mxu0 0.0
    %2823 = vmatpush1.msra.mxu0 0.0
    %2824 = vmatprep.subr.mxu0 0.0
    %2825 = vmatpush1.msra.mxu0 0.0
    %2826 = vmatprep.subr.mxu0 0.0
    %2827 = vmatpush1.msra.mxu0 0.0
    %2828 = vmatprep.subr.mxu0 0.0
    %2829 = vmatpush1.msra.mxu0 0.0
    %2830 = vmatprep.subr.mxu0 0.0
    %2831 = vmatpush1.msra.mxu0 0.0
    %2832 = vmatprep.subr.mxu0 0.0
    %2833 = vmatpush1.msra.mxu0 0.0
    %2834 = vmatprep.subr.mxu0 0.0
    %2835 = vmatpush1.msra.mxu0 0.0
    %2836 = vmatprep.subr.mxu0 0.0
    %2837 = vmatpush1.msra.mxu0 0.0
    %2838 = vmatprep.subr.mxu0 0.0
    %2839 = vmatpush1.msra.mxu0 0.0
    %2840 = vmatprep.subr.mxu0 0.0
    %2841 = vmatpush1.msra.mxu0 0.0
    %2842 = vmatprep.subr.mxu0 0.0
    %2843 = vmatpush1.msra.mxu0 0.0
    %2844 = vmatprep.subr.mxu0 0.0
    %2845 = vmatpush1.msra.mxu0 0.0
    %2846 = vmatprep.mubr.f32.mxu0 0.0
    %2847 = vmatmul.mubr.f32.gmra.mrb[0].mxu0 %v2780
    %v2848 = vpop.f32.mrb[0].mxu0
    %v2849 = vadd.f32 0.0, %v2848
    %v2850 = vpop.f32.mrb[0].mxu0
    %2851 = vdwg.mxu0
    %v2852 = vld [vmem:[#allocation8] sm:$0xff]
    %v2853 = vld [vmem:[#allocation8 + $0x8] sm:$0xff]
    %v2854 = vld [vmem:[#allocation8 + $0x10] sm:$0xff]
    %v2855 = vld [vmem:[#allocation8 + $0x18] sm:$0xff]
    %v2856 = vld [vmem:[#allocation8 + $0x20] sm:$0xff]
    %v2857 = vld [vmem:[#allocation8 + $0x28] sm:$0xff]
    %v2858 = vld [vmem:[#allocation8 + $0x30] sm:$0xff]
    %v2859 = vld [vmem:[#allocation8 + $0x38] sm:$0xff]
    %v2860 = vld [vmem:[#allocation8 + $0x40] sm:$0xff]
    %v2861 = vld [vmem:[#allocation8 + $0x48] sm:$0xff]
    %v2862 = vld [vmem:[#allocation8 + $0x50] sm:$0xff]
    %v2863 = vld [vmem:[#allocation8 + $0x58] sm:$0xff]
    %v2864 = vld [vmem:[#allocation8 + $0x60] sm:$0xff]
    %v2865 = vld [vmem:[#allocation8 + $0x68] sm:$0xff]
    %v2866 = vld [vmem:[#allocation8 + $0x70] sm:$0xff]
    %v2867 = vld [vmem:[#allocation8 + $0x78] sm:$0xff]
    %v2868 = vld [vmem:[#allocation8 + $0x80] sm:$0xff]
    %v2869 = vld [vmem:[#allocation8 + $0x88] sm:$0xff]
    %v2870 = vld [vmem:[#allocation8 + $0x90] sm:$0xff]
    %v2871 = vld [vmem:[#allocation8 + $0x98] sm:$0xff]
    %v2872 = vld [vmem:[#allocation8 + $0xa0] sm:$0xff]
    %v2873 = vld [vmem:[#allocation8 + $0xa8] sm:$0xff]
    %v2874 = vld [vmem:[#allocation8 + $0xb0] sm:$0xff]
    %v2875 = vld [vmem:[#allocation8 + $0xb8] sm:$0xff]
    %v2876 = vld [vmem:[#allocation8 + $0xc0] sm:$0xff]
    %v2877 = vld [vmem:[#allocation8 + $0xc8] sm:$0xff]
    %v2878 = vld [vmem:[#allocation8 + $0xd0] sm:$0xff]
    %v2879 = vld [vmem:[#allocation8 + $0xd8] sm:$0xff]
    %v2880 = vld [vmem:[#allocation8 + $0xe0] sm:$0xff]
    %v2881 = vld [vmem:[#allocation8 + $0xe8] sm:$0xff]
    %v2882 = vld [vmem:[#allocation8 + $0xf0] sm:$0xff]
    %v2883 = vld [vmem:[#allocation8 + $0xf8] sm:$0xff]
    %s2884 = scalar_lea.vmem [#allocation7], 2
    %v2885 = vld [vmem:[%s2884] sm:$0x3]
    %v2887 = vsel %vm2778, %v2885, 0
    %2889 = vmatprep.subr.mxu0 0.0
    %2890 = vmatpush1.msra.mxu0 %v2776
    %2891 = vmatprep.subr.mxu0 0.0
    %2892 = vmatpush1.msra.mxu0 0.0
    %2893 = vmatprep.subr.mxu0 0.0
    %2894 = vmatpush1.msra.mxu0 0.0
    %2895 = vmatprep.subr.mxu0 0.0
    %2896 = vmatpush1.msra.mxu0 0.0
    %2897 = vmatprep.subr.mxu0 0.0
    %2898 = vmatpush1.msra.mxu0 0.0
    %2899 = vmatprep.subr.mxu0 0.0
    %2900 = vmatpush1.msra.mxu0 0.0
    %2901 = vmatprep.subr.mxu0 0.0
    %2902 = vmatpush1.msra.mxu0 0.0
    %2903 = vmatprep.subr.mxu0 0.0
    %2904 = vmatpush1.msra.mxu0 0.0
    %2905 = vmatprep.subr.mxu0 0.0
    %2906 = vmatpush1.msra.mxu0 0.0
    %2907 = vmatprep.subr.mxu0 0.0
    %2908 = vmatpush1.msra.mxu0 0.0
    %2909 = vmatprep.subr.mxu0 0.0
    %2910 = vmatpush1.msra.mxu0 0.0
    %2911 = vmatprep.subr.mxu0 0.0
    %2912 = vmatpush1.msra.mxu0 0.0
    %2913 = vmatprep.subr.mxu0 0.0
    %2914 = vmatpush1.msra.mxu0 0.0
    %2915 = vmatprep.subr.mxu0 0.0
    %2916 = vmatpush1.msra.mxu0 0.0
    %2917 = vmatprep.subr.mxu0 0.0
    %2918 = vmatpush1.msra.mxu0 0.0
    %2919 = vmatprep.subr.mxu0 0.0
    %2920 = vmatpush1.msra.mxu0 0.0
    %2921 = vmatprep.subr.mxu0 0.0
    %2922 = vmatpush1.msra.mxu0 0.0
    %2923 = vmatprep.subr.mxu0 0.0
    %2924 = vmatpush1.msra.mxu0 0.0
    %2925 = vmatprep.subr.mxu0 0.0
    %2926 = vmatpush1.msra.mxu0 0.0
    %2927 = vmatprep.subr.mxu0 0.0
    %2928 = vmatpush1.msra.mxu0 0.0
    %2929 = vmatprep.subr.mxu0 0.0
    %2930 = vmatpush1.msra.mxu0 0.0
    %2931 = vmatprep.subr.mxu0 0.0
    %2932 = vmatpush1.msra.mxu0 0.0
    %2933 = vmatprep.subr.mxu0 0.0
    %2934 = vmatpush1.msra.mxu0 0.0
    %2935 = vmatprep.subr.mxu0 0.0
    %2936 = vmatpush1.msra.mxu0 0.0
    %2937 = vmatprep.subr.mxu0 0.0
    %2938 = vmatpush1.msra.mxu0 0.0
    %2939 = vmatprep.subr.mxu0 0.0
    %2940 = vmatpush1.msra.mxu0 0.0
    %2941 = vmatprep.subr.mxu0 0.0
    %2942 = vmatpush1.msra.mxu0 0.0
    %2943 = vmatprep.subr.mxu0 0.0
    %2944 = vmatpush1.msra.mxu0 0.0
    %2945 = vmatprep.subr.mxu0 0.0
    %2946 = vmatpush1.msra.mxu0 0.0
    %2947 = vmatprep.subr.mxu0 0.0
    %2948 = vmatpush1.msra.mxu0 0.0
    %2949 = vmatprep.subr.mxu0 0.0
    %2950 = vmatpush1.msra.mxu0 0.0
    %2951 = vmatprep.subr.mxu0 0.0
    %2952 = vmatpush1.msra.mxu0 0.0
    %2953 = vmatprep.mubr.f32.mxu0 0.0
    %2954 = vmatmul.mubr.f32.gmra.mrb[0].mxu0 %v2887
    %v2955 = vpop.f32.mrb[0].mxu0
    %v2956 = vadd.f32 0.0, %v2955
    %v2957 = vpop.f32.mrb[0].mxu0
    %2958 = vdwg.mxu0
    %s2959 = scalar_lea.vmem [#allocation8], 256
    %v2960 = vld [vmem:[%s2959] sm:$0xff]
    %v2961 = vld [vmem:[%s2959 + $0x8] sm:$0xff]
    %v2962 = vld [vmem:[%s2959 + $0x10] sm:$0xff]
    %v2963 = vld [vmem:[%s2959 + $0x18] sm:$0xff]
    %v2964 = vld [vmem:[%s2959 + $0x20] sm:$0xff]
    %v2965 = vld [vmem:[%s2959 + $0x28] sm:$0xff]
    %v2966 = vld [vmem:[%s2959 + $0x30] sm:$0xff]
    %v2967 = vld [vmem:[%s2959 + $0x38] sm:$0xff]
    %v2968 = vld [vmem:[%s2959 + $0x40] sm:$0xff]
    %v2969 = vld [vmem:[%s2959 + $0x48] sm:$0xff]
    %v2970 = vld [vmem:[%s2959 + $0x50] sm:$0xff]
    %v2971 = vld [vmem:[%s2959 + $0x58] sm:$0xff]
    %v2972 = vld [vmem:[%s2959 + $0x60] sm:$0xff]
    %v2973 = vld [vmem:[%s2959 + $0x68] sm:$0xff]
    %v2974 = vld [vmem:[%s2959 + $0x70] sm:$0xff]
    %v2975 = vld [vmem:[%s2959 + $0x78] sm:$0xff]
    %v2976 = vld [vmem:[%s2959 + $0x80] sm:$0xff]
    %v2977 = vld [vmem:[%s2959 + $0x88] sm:$0xff]
    %v2978 = vld [vmem:[%s2959 + $0x90] sm:$0xff]
    %v2979 = vld [vmem:[%s2959 + $0x98] sm:$0xff]
    %v2980 = vld [vmem:[%s2959 + $0xa0] sm:$0xff]
    %v2981 = vld [vmem:[%s2959 + $0xa8] sm:$0xff]
    %v2982 = vld [vmem:[%s2959 + $0xb0] sm:$0xff]
    %v2983 = vld [vmem:[%s2959 + $0xb8] sm:$0xff]
    %v2984 = vld [vmem:[%s2959 + $0xc0] sm:$0xff]
    %v2985 = vld [vmem:[%s2959 + $0xc8] sm:$0xff]
    %v2986 = vld [vmem:[%s2959 + $0xd0] sm:$0xff]
    %v2987 = vld [vmem:[%s2959 + $0xd8] sm:$0xff]
    %v2988 = vld [vmem:[%s2959 + $0xe0] sm:$0xff]
    %v2989 = vld [vmem:[%s2959 + $0xe8] sm:$0xff]
    %v2990 = vld [vmem:[%s2959 + $0xf0] sm:$0xff]
    %v2991 = vld [vmem:[%s2959 + $0xf8] sm:$0xff]
    %2992 = vmatprep.subr.mxu0 %v2961
    %2993 = vmatpush1.msra.mxu0 %v2960
    %2994 = vmatprep.subr.mxu0 %v2963
    %2995 = vmatpush1.msra.mxu0 %v2962
    %2996 = vmatprep.subr.mxu0 %v2965
    %2997 = vmatpush1.msra.mxu0 %v2964
    %2998 = vmatprep.subr.mxu0 %v2967
    %2999 = vmatpush1.msra.mxu0 %v2966
    %3000 = vmatprep.subr.mxu0 %v2969
    %3001 = vmatpush1.msra.mxu0 %v2968
    %3002 = vmatprep.subr.mxu0 %v2971
    %3003 = vmatpush1.msra.mxu0 %v2970
    %3004 = vmatprep.subr.mxu0 %v2973
    %3005 = vmatpush1.msra.mxu0 %v2972
    %3006 = vmatprep.subr.mxu0 %v2975
    %3007 = vmatpush1.msra.mxu0 %v2974
    %3008 = vmatprep.subr.mxu0 %v2977
    %3009 = vmatpush1.msra.mxu0 %v2976
    %3010 = vmatprep.subr.mxu0 %v2979
    %3011 = vmatpush1.msra.mxu0 %v2978
    %3012 = vmatprep.subr.mxu0 %v2981
    %3013 = vmatpush1.msra.mxu0 %v2980
    %3014 = vmatprep.subr.mxu0 %v2983
    %3015 = vmatpush1.msra.mxu0 %v2982
    %3016 = vmatprep.subr.mxu0 %v2985
    %3017 = vmatpush1.msra.mxu0 %v2984
    %3018 = vmatprep.subr.mxu0 %v2987
    %3019 = vmatpush1.msra.mxu0 %v2986
    %3020 = vmatprep.subr.mxu0 %v2989
    %3021 = vmatpush1.msra.mxu0 %v2988
    %3022 = vmatprep.subr.mxu0 %v2991
    %3023 = vmatpush1.msra.mxu0 %v2990
    %3024 = vmatprep.subr.mxu0 0.0
    %3025 = vmatpush1.msra.mxu0 0.0
    %3026 = vmatprep.subr.mxu0 0.0
    %3027 = vmatpush1.msra.mxu0 0.0
    %3028 = vmatprep.subr.mxu0 0.0
    %3029 = vmatpush1.msra.mxu0 0.0
    %3030 = vmatprep.subr.mxu0 0.0
    %3031 = vmatpush1.msra.mxu0 0.0
    %3032 = vmatprep.subr.mxu0 0.0
    %3033 = vmatpush1.msra.mxu0 0.0
    %3034 = vmatprep.subr.mxu0 0.0
    %3035 = vmatpush1.msra.mxu0 0.0
    %3036 = vmatprep.subr.mxu0 0.0
    %3037 = vmatpush1.msra.mxu0 0.0
    %3038 = vmatprep.subr.mxu0 0.0
    %3039 = vmatpush1.msra.mxu0 0.0
    %3040 = vmatprep.subr.mxu0 0.0
    %3041 = vmatpush1.msra.mxu0 0.0
    %3042 = vmatprep.subr.mxu0 0.0
    %3043 = vmatpush1.msra.mxu0 0.0
    %3044 = vmatprep.subr.mxu0 0.0
    %3045 = vmatpush1.msra.mxu0 0.0
    %3046 = vmatprep.subr.mxu0 0.0
    %3047 = vmatpush1.msra.mxu0 0.0
    %3048 = vmatprep.subr.mxu0 0.0
    %3049 = vmatpush1.msra.mxu0 0.0
    %3050 = vmatprep.subr.mxu0 0.0
    %3051 = vmatpush1.msra.mxu0 0.0
    %3052 = vmatprep.subr.mxu0 0.0
    %3053 = vmatpush1.msra.mxu0 0.0
    %3054 = vmatprep.subr.mxu0 0.0
    %3055 = vmatpush1.msra.mxu0 0.0
    %3056 = vmatprep.mubr.f32.mxu0 0.0
    %3057 = vmatmul.mubr.f32.gmra.mrb[0].mxu0 %v2956
    %v3058 = vpop.f32.mrb[0].mxu0
    %v3059 = vadd.f32 0.0, %v3058
    %v3060 = vpop.f32.mrb[0].mxu0
    %v3061 = vadd.f32 0.0, %v3060
    %3062 = vdwg.mxu0
    %3063 = vmatprep.subr.mxu0 %v2853
    %3064 = vmatpush1.msra.mxu0 %v2852
    %3065 = vmatprep.subr.mxu0 %v2855
    %3066 = vmatpush1.msra.mxu0 %v2854
    %3067 = vmatprep.subr.mxu0 %v2857
    %3068 = vmatpush1.msra.mxu0 %v2856
    %3069 = vmatprep.subr.mxu0 %v2859
    %3070 = vmatpush1.msra.mxu0 %v2858
    %3071 = vmatprep.subr.mxu0 %v2861
    %3072 = vmatpush1.msra.mxu0 %v2860
    %3073 = vmatprep.subr.mxu0 %v2863
    %3074 = vmatpush1.msra.mxu0 %v2862
    %3075 = vmatprep.subr.mxu0 %v2865
    %3076 = vmatpush1.msra.mxu0 %v2864
    %3077 = vmatprep.subr.mxu0 %v2867
    %3078 = vmatpush1.msra.mxu0 %v2866
    %3079 = vmatprep.subr.mxu0 %v2869
    %3080 = vmatpush1.msra.mxu0 %v2868
    %3081 = vmatprep.subr.mxu0 %v2871
    %3082 = vmatpush1.msra.mxu0 %v2870
    %3083 = vmatprep.subr.mxu0 %v2873
    %3084 = vmatpush1.msra.mxu0 %v2872
    %3085 = vmatprep.subr.mxu0 %v2875
    %3086 = vmatpush1.msra.mxu0 %v2874
    %3087 = vmatprep.subr.mxu0 %v2877
    %3088 = vmatpush1.msra.mxu0 %v2876
    %3089 = vmatprep.subr.mxu0 %v2879
    %3090 = vmatpush1.msra.mxu0 %v2878
    %3091 = vmatprep.subr.mxu0 %v2881
    %3092 = vmatpush1.msra.mxu0 %v2880
    %3093 = vmatprep.subr.mxu0 %v2883
    %3094 = vmatpush1.msra.mxu0 %v2882
    %3095 = vmatprep.subr.mxu0 0.0
    %3096 = vmatpush1.msra.mxu0 0.0
    %3097 = vmatprep.subr.mxu0 0.0
    %3098 = vmatpush1.msra.mxu0 0.0
    %3099 = vmatprep.subr.mxu0 0.0
    %3100 = vmatpush1.msra.mxu0 0.0
    %3101 = vmatprep.subr.mxu0 0.0
    %3102 = vmatpush1.msra.mxu0 0.0
    %3103 = vmatprep.subr.mxu0 0.0
    %3104 = vmatpush1.msra.mxu0 0.0
    %3105 = vmatprep.subr.mxu0 0.0
    %3106 = vmatpush1.msra.mxu0 0.0
    %3107 = vmatprep.subr.mxu0 0.0
    %3108 = vmatpush1.msra.mxu0 0.0
    %3109 = vmatprep.subr.mxu0 0.0
    %3110 = vmatpush1.msra.mxu0 0.0
    %3111 = vmatprep.subr.mxu0 0.0
    %3112 = vmatpush1.msra.mxu0 0.0
    %3113 = vmatprep.subr.mxu0 0.0
    %3114 = vmatpush1.msra.mxu0 0.0
    %3115 = vmatprep.subr.mxu0 0.0
    %3116 = vmatpush1.msra.mxu0 0.0
    %3117 = vmatprep.subr.mxu0 0.0
    %3118 = vmatpush1.msra.mxu0 0.0
    %3119 = vmatprep.subr.mxu0 0.0
    %3120 = vmatpush1.msra.mxu0 0.0
    %3121 = vmatprep.subr.mxu0 0.0
    %3122 = vmatpush1.msra.mxu0 0.0
    %3123 = vmatprep.subr.mxu0 0.0
    %3124 = vmatpush1.msra.mxu0 0.0
    %3125 = vmatprep.subr.mxu0 0.0
    %3126 = vmatpush1.msra.mxu0 0.0
    %3127 = vmatprep.mubr.f32.mxu0 0.0
    %3128 = vmatmul.mubr.f32.gmra.mrb[0].mxu0 %v2849
    %v3129 = vpop.f32.mrb[0].mxu0
    %v3130 = vadd.f32 %v3059, %v3129
    %v3131 = vpop.f32.mrb[0].mxu0
    %v3132 = vadd.f32 %v3061, %v3131
    %3133 = vdwg.mxu0
    %s3134 = scalar_lea.vmem [#allocation7], 4
    %v3135 = vld [vmem:[%s3134] sm:$0x3]
    %v3137 = vsel %vm2778, %v3135, 0
    %3139 = vmatprep.subr.mxu0 0.0
    %3140 = vmatpush1.msra.mxu0 %v2776
    %3141 = vmatprep.subr.mxu0 0.0
    %3142 = vmatpush1.msra.mxu0 0.0
    %3143 = vmatprep.subr.mxu0 0.0
    %3144 = vmatpush1.msra.mxu0 0.0
    %3145 = vmatprep.subr.mxu0 0.0
    %3146 = vmatpush1.msra.mxu0 0.0
    %3147 = vmatprep.subr.mxu0 0.0
    %3148 = vmatpush1.msra.mxu0 0.0
    %3149 = vmatprep.subr.mxu0 0.0
    %3150 = vmatpush1.msra.mxu0 0.0
    %3151 = vmatprep.subr.mxu0 0.0
    %3152 = vmatpush1.msra.mxu0 0.0
    %3153 = vmatprep.subr.mxu0 0.0
    %3154 = vmatpush1.msra.mxu0 0.0
    %3155 = vmatprep.subr.mxu0 0.0
    %3156 = vmatpush1.msra.mxu0 0.0
    %3157 = vmatprep.subr.mxu0 0.0
    %3158 = vmatpush1.msra.mxu0 0.0
    %3159 = vmatprep.subr.mxu0 0.0
    %3160 = vmatpush1.msra.mxu0 0.0
    %3161 = vmatprep.subr.mxu0 0.0
    %3162 = vmatpush1.msra.mxu0 0.0
    %3163 = vmatprep.subr.mxu0 0.0
    %3164 = vmatpush1.msra.mxu0 0.0
    %3165 = vmatprep.subr.mxu0 0.0
    %3166 = vmatpush1.msra.mxu0 0.0
    %3167 = vmatprep.subr.mxu0 0.0
    %3168 = vmatpush1.msra.mxu0 0.0
    %3169 = vmatprep.subr.mxu0 0.0
    %3170 = vmatpush1.msra.mxu0 0.0
    %3171 = vmatprep.subr.mxu0 0.0
    %3172 = vmatpush1.msra.mxu0 0.0
    %3173 = vmatprep.subr.mxu0 0.0
    %3174 = vmatpush1.msra.mxu0 0.0
    %3175 = vmatprep.subr.mxu0 0.0
    %3176 = vmatpush1.msra.mxu0 0.0
    %3177 = vmatprep.subr.mxu0 0.0
    %3178 = vmatpush1.msra.mxu0 0.0
    %3179 = vmatprep.subr.mxu0 0.0
    %3180 = vmatpush1.msra.mxu0 0.0
    %3181 = vmatprep.subr.mxu0 0.0
    %3182 = vmatpush1.msra.mxu0 0.0
    %3183 = vmatprep.subr.mxu0 0.0
    %3184 = vmatpush1.msra.mxu0 0.0
    %3185 = vmatprep.subr.mxu0 0.0
    %3186 = vmatpush1.msra.mxu0 0.0
    %3187 = vmatprep.subr.mxu0 0.0
    %3188 = vmatpush1.msra.mxu0 0.0
    %3189 = vmatprep.subr.mxu0 0.0
    %3190 = vmatpush1.msra.mxu0 0.0
    %3191 = vmatprep.subr.mxu0 0.0
    %3192 = vmatpush1.msra.mxu0 0.0
    %3193 = vmatprep.subr.mxu0 0.0
    %3194 = vmatpush1.msra.mxu0 0.0
    %3195 = vmatprep.subr.mxu0 0.0
    %3196 = vmatpush1.msra.mxu0 0.0
    %3197 = vmatprep.subr.mxu0 0.0
    %3198 = vmatpush1.msra.mxu0 0.0
    %3199 = vmatprep.subr.mxu0 0.0
    %3200 = vmatpush1.msra.mxu0 0.0
    %3201 = vmatprep.subr.mxu0 0.0
    %3202 = vmatpush1.msra.mxu0 0.0
    %3203 = vmatprep.mubr.f32.mxu0 0.0
    %3204 = vmatmul.mubr.f32.gmra.mrb[0].mxu0 %v3137
    %v3205 = vpop.f32.mrb[0].mxu0
    %v3206 = vadd.f32 0.0, %v3205
    %v3207 = vpop.f32.mrb[0].mxu0
    %3208 = vdwg.mxu0
    %s3209 = scalar_lea.vmem [#allocation8], 512
    %v3210 = vld [vmem:[%s3209] sm:$0xff]
    %v3211 = vld [vmem:[%s3209 + $0x8] sm:$0xff]
    %v3212 = vld [vmem:[%s3209 + $0x10] sm:$0xff]
    %v3213 = vld [vmem:[%s3209 + $0x18] sm:$0xff]
    %v3214 = vld [vmem:[%s3209 + $0x20] sm:$0xff]
    %v3215 = vld [vmem:[%s3209 + $0x28] sm:$0xff]
    %v3216 = vld [vmem:[%s3209 + $0x30] sm:$0xff]
    %v3217 = vld [vmem:[%s3209 + $0x38] sm:$0xff]
    %v3218 = vld [vmem:[%s3209 + $0x40] sm:$0xff]
    %v3219 = vld [vmem:[%s3209 + $0x48] sm:$0xff]
    %v3220 = vld [vmem:[%s3209 + $0x50] sm:$0xff]
    %v3221 = vld [vmem:[%s3209 + $0x58] sm:$0xff]
    %v3222 = vld [vmem:[%s3209 + $0x60] sm:$0xff]
    %v3223 = vld [vmem:[%s3209 + $0x68] sm:$0xff]
    %v3224 = vld [vmem:[%s3209 + $0x70] sm:$0xff]
    %v3225 = vld [vmem:[%s3209 + $0x78] sm:$0xff]
    %v3226 = vld [vmem:[%s3209 + $0x80] sm:$0xff]
    %v3227 = vld [vmem:[%s3209 + $0x88] sm:$0xff]
    %v3228 = vld [vmem:[%s3209 + $0x90] sm:$0xff]
    %v3229 = vld [vmem:[%s3209 + $0x98] sm:$0xff]
    %v3230 = vld [vmem:[%s3209 + $0xa0] sm:$0xff]
    %v3231 = vld [vmem:[%s3209 + $0xa8] sm:$0xff]
    %v3232 = vld [vmem:[%s3209 + $0xb0] sm:$0xff]
    %v3233 = vld [vmem:[%s3209 + $0xb8] sm:$0xff]
    %v3234 = vld [vmem:[%s3209 + $0xc0] sm:$0xff]
    %v3235 = vld [vmem:[%s3209 + $0xc8] sm:$0xff]
    %v3236 = vld [vmem:[%s3209 + $0xd0] sm:$0xff]
    %v3237 = vld [vmem:[%s3209 + $0xd8] sm:$0xff]
    %v3238 = vld [vmem:[%s3209 + $0xe0] sm:$0xff]
    %v3239 = vld [vmem:[%s3209 + $0xe8] sm:$0xff]
    %v3240 = vld [vmem:[%s3209 + $0xf0] sm:$0xff]
    %v3241 = vld [vmem:[%s3209 + $0xf8] sm:$0xff]
    %3242 = vmatprep.subr.mxu0 %v3211
    %3243 = vmatpush1.msra.mxu0 %v3210
    %3244 = vmatprep.subr.mxu0 %v3213
    %3245 = vmatpush1.msra.mxu0 %v3212
    %3246 = vmatprep.subr.mxu0 %v3215
    %3247 = vmatpush1.msra.mxu0 %v3214
    %3248 = vmatprep.subr.mxu0 %v3217
    %3249 = vmatpush1.msra.mxu0 %v3216
    %3250 = vmatprep.subr.mxu0 %v3219
    %3251 = vmatpush1.msra.mxu0 %v3218
    %3252 = vmatprep.subr.mxu0 %v3221
    %3253 = vmatpush1.msra.mxu0 %v3220
    %3254 = vmatprep.subr.mxu0 %v3223
    %3255 = vmatpush1.msra.mxu0 %v3222
    %3256 = vmatprep.subr.mxu0 %v3225
    %3257 = vmatpush1.msra.mxu0 %v3224
    %3258 = vmatprep.subr.mxu0 %v3227
    %3259 = vmatpush1.msra.mxu0 %v3226
    %3260 = vmatprep.subr.mxu0 %v3229
    %3261 = vmatpush1.msra.mxu0 %v3228
    %3262 = vmatprep.subr.mxu0 %v3231
    %3263 = vmatpush1.msra.mxu0 %v3230
    %3264 = vmatprep.subr.mxu0 %v3233
    %3265 = vmatpush1.msra.mxu0 %v3232
    %3266 = vmatprep.subr.mxu0 %v3235
    %3267 = vmatpush1.msra.mxu0 %v3234
    %3268 = vmatprep.subr.mxu0 %v3237
    %3269 = vmatpush1.msra.mxu0 %v3236
    %3270 = vmatprep.subr.mxu0 %v3239
    %3271 = vmatpush1.msra.mxu0 %v3238
    %3272 = vmatprep.subr.mxu0 %v3241
    %3273 = vmatpush1.msra.mxu0 %v3240
    %3274 = vmatprep.subr.mxu0 0.0
    %3275 = vmatpush1.msra.mxu0 0.0
    %3276 = vmatprep.subr.mxu0 0.0
    %3277 = vmatpush1.msra.mxu0 0.0
    %3278 = vmatprep.subr.mxu0 0.0
    %3279 = vmatpush1.msra.mxu0 0.0
    %3280 = vmatprep.subr.mxu0 0.0
    %3281 = vmatpush1.msra.mxu0 0.0
    %3282 = vmatprep.subr.mxu0 0.0
    %3283 = vmatpush1.msra.mxu0 0.0
    %3284 = vmatprep.subr.mxu0 0.0
    %3285 = vmatpush1.msra.mxu0 0.0
    %3286 = vmatprep.subr.mxu0 0.0
    %3287 = vmatpush1.msra.mxu0 0.0
    %3288 = vmatprep.subr.mxu0 0.0
    %3289 = vmatpush1.msra.mxu0 0.0
    %3290 = vmatprep.subr.mxu0 0.0
    %3291 = vmatpush1.msra.mxu0 0.0
    %3292 = vmatprep.subr.mxu0 0.0
    %3293 = vmatpush1.msra.mxu0 0.0
    %3294 = vmatprep.subr.mxu0 0.0
    %3295 = vmatpush1.msra.mxu0 0.0
    %3296 = vmatprep.subr.mxu0 0.0
    %3297 = vmatpush1.msra.mxu0 0.0
    %3298 = vmatprep.subr.mxu0 0.0
    %3299 = vmatpush1.msra.mxu0 0.0
    %3300 = vmatprep.subr.mxu0 0.0
    %3301 = vmatpush1.msra.mxu0 0.0
    %3302 = vmatprep.subr.mxu0 0.0
    %3303 = vmatpush1.msra.mxu0 0.0
    %3304 = vmatprep.subr.mxu0 0.0
    %3305 = vmatpush1.msra.mxu0 0.0
    %3306 = vmatprep.mubr.f32.mxu0 0.0
    %3307 = vmatmul.mubr.f32.gmra.mrb[0].mxu0 %v3206
    %v3308 = vpop.f32.mrb[0].mxu0
    %v3309 = vadd.f32 0.0, %v3308
    %v3310 = vpop.f32.mrb[0].mxu0
    %v3311 = vadd.f32 0.0, %v3310
    %3312 = vdwg.mxu0
    %v3313 = vadd.f32 %v3130, %v3309
    %v3314 = vadd.f32 %v3132, %v3311
    %v3315 = vtanh.pop %v3313
    %v3316 = vtanh.pop %v3314
    %3317 = vst [vmem:[#allocation10] sm:$0x3] %v3315
    %s3318 = scalar_lea.vmem [#allocation10], 2
    %3319 = vst [vmem:[%s3318] sm:$0x3] %v3316
    // Predicated region
    $region62: #{decoder_forward.1} parent=1 // pred_check
      _
    $region63: #{decoder_forward.1} parent=1 // pred_check_branch
      %3321 = sbr.rel (0) target = $region65
    $region64: #{decoder_forward.1} parent=1 // pred_region
      %s3323 = ssub.s32 64, 64
      %3324 = vsyncadd [#allocation4], %s3323
      %s3325 = sshll.u32 [#allocation10], 4
      %s3326 = int_to_ptr.vmem [resolvable:$true] %s3325
      %3331 = dma.vmem_to_hbm [thread:$0]  %s3326, 64, %s11, [#allocation4], 32, 32, 2
    $region65: #{decoder_forward.1} parent=1 // pred_fallthru
      _
    // Predicated region
    $region66: #{decoder_forward.1} parent=1 // pred_check
      _
    $region67: #{decoder_forward.1} parent=1 // pred_check_branch
      %3333 = sbr.rel (0) target = $region69
    $region68: #{decoder_forward.1} parent=1 // pred_region
      %3334 = dma.done [#allocation4], 64
    $region69: #{decoder_forward.1} parent=1 // pred_fallthru
      _
    %3335 = vsyncpa [#allocation3], 1
    %3336 = vsyncpa [#allocation6], 1
    %3337 = vsyncpa [#allocation9], 1
    %3338 = vsyncpa [#allocation4], 1

</llo_original>
